<compile_context>
chip_gen: v7x
topology: tpu7x:2x2x1
jax: 0.10.0
libtpu: 0.0.40
codegen_flags: <defaults>
</compile_context>

<pallas_src>
import functools

import jax
import jax.numpy as jnp
from jax.experimental import pallas as pl
from jax.experimental.pallas import tpu as pltpu


# ----------------------------- Pallas kernel -------------------------------

def _wavenet_kernel(x_ref,                       # (M, C)            f32
                    cw_ref,                      # (2C, res)         bf16  [cw0;cw1]
                    dw_ref,                      # (N, 2*res, res)   bf16  [dw0;dw1]
                    gw_ref, gb_ref,              # (N, res, 2*dil) bf16, (N,1,2*dil) f32
                    rkw_ref, rkb_ref,            # (N, dil, res+skip) bf16, (N,1,res+skip) f32
                    p1w_ref, p1b_ref,            # (skip, end) bf16, (1, end) f32
                    p2w_ref, p2b_ref,            # (end, out_pad) bf16, (1, out_pad) f32
                    out_ref,                     # (M, out_pad)      f32
                    *, dilations, time_len):
    f32 = jnp.float32
    bf16 = jnp.bfloat16

    x = x_ref[...]                                               # (M, C) f32
    m = x.shape[0]

    # CausalConv1d (kernel=2, pad=1, drop last):
    #   h[t] = x[t-1] @ cw0 + x[t] @ cw1, with x[-1] := 0 per batch element.
    # roll() is per-axis circular; rows with (t % T) == 0 are the per-batch
    # "t-1 = -1" positions and are zeroed.
    row = jax.lax.broadcasted_iota(jnp.int32, (m, 1), 0)
    first_row = (row % time_len) == 0
    x_prev = jnp.where(first_row, jnp.zeros_like(x), pltpu.roll(x, shift=1, axis=0))
    xc = jnp.concatenate([x_prev, x], axis=-1).astype(bf16)      # (M, 2C)
    h = jnp.dot(xc, cw_ref[...], preferred_element_type=f32)     # (M, res) f32

    res_ch = cw_ref.shape[-1]
    dil_ch = gw_ref.shape[-1] // 2
    skip_ch = rkw_ref.shape[-1] - res_ch
    skip_sum = jnp.zeros((m, skip_ch), f32)

    # Residual stack. Dilations are static -> unrolled at trace time. All
    # per-layer tensors keep the fixed shape (M, .); the dilated tap h[t-d]
    # is a sublane roll (wrap rows only pollute already-invalid positions).
    for i, d in enumerate(dilations):
        h_cat = jnp.concatenate([pltpu.roll(h, shift=d, axis=0), h],
                                axis=-1).astype(bf16)            # (M, 2*res)
        z = jnp.dot(h_cat, dw_ref[i], preferred_element_type=f32)        # (M, res)

        gp = (jnp.dot(z.astype(bf16), gw_ref[i], preferred_element_type=f32)
              + gb_ref[i])                                                # (M, 2*dil)
        g = jnp.tanh(gp[:, :dil_ch]) * jax.nn.sigmoid(gp[:, dil_ch:])     # (M, dil) f32

        rs = (jnp.dot(g.astype(bf16), rkw_ref[i], preferred_element_type=f32)
              + rkb_ref[i])                                               # (M, res+skip)
        h = rs[:, :res_ch] + h                                            # residual add
        skip_sum = skip_sum + rs[:, res_ch:]                              # skip accumulate

    # PostProcess: relu -> 1x1 conv -> relu -> 1x1 conv -> sigmoid.
    # Runs on all M rows (extra rows are invalid and sliced off in the wrapper);
    # output lanes are padded to 128 for unmasked stores.
    p = jnp.maximum(skip_sum, 0.0)
    p = jnp.maximum(jnp.dot(p.astype(bf16), p1w_ref[...], preferred_element_type=f32)
                    + p1b_ref[...], 0.0)
    p = jax.nn.sigmoid(jnp.dot(p.astype(bf16), p2w_ref[...], preferred_element_type=f32)
                       + p2b_ref[...])
    out_ref[...] = p.astype(out_ref.dtype)


# ------------------------------- Wrapper ------------------------------------

def wavenet_forward(x_bct, params, *, layer_size, stack_size):
    """x_bct: (B, channels, T) float32, PyTorch NCW convention."""
    dilations = tuple([2 ** i for i in range(layer_size)] * stack_size)
    receptive_field = int(sum(dilations))
    B, C, T = x_bct.shape
    skip_size = T - receptive_field
    assert skip_size > 0, "sequence shorter than receptive field"

    bf16 = jnp.bfloat16
    f32 = jnp.float32

    # Flatten batch into the row (sublane) axis: (B, T, C) -> (B*T, C).
    x_flat = jnp.transpose(x_bct, (0, 2, 1)).reshape(B * T, C).astype(f32)

    out_ch = params["p2w"].shape[-1]
    out_pad = max(128, -(-out_ch // 128) * 128)        # lane-dense output slab

    # Fuse / stack weights once in the wrapper (zero runtime cost inside kernel).
    cw = jnp.concatenate([params["cw0"], params["cw1"]], axis=0).astype(bf16)
    dw = jnp.concatenate([params["dw0"], params["dw1"]], axis=1).astype(bf16)
    gw = jnp.concatenate([params["tw"], params["sw"]], axis=-1).astype(bf16)
    gb = jnp.concatenate([params["tb"], params["sb"]], axis=-1).astype(f32)
    rkw = jnp.concatenate([params["rw"], params["kw"]], axis=-1).astype(bf16)
    rkb = jnp.concatenate([params["rb"], params["kb"]], axis=-1).astype(f32)
    p1w = params["p1w"].astype(bf16)
    p1b = params["p1b"].astype(f32)
    p2w = jnp.pad(params["p2w"], ((0, 0), (0, out_pad - out_ch))).astype(bf16)
    p2b = jnp.pad(params["p2b"], ((0, 0), (0, out_pad - out_ch))).astype(f32)

    weight_args = (cw, dw, gw, gb, rkw, rkb, p1w, p1b, p2w, p2b)

    kernel = functools.partial(_wavenet_kernel, dilations=dilations, time_len=T)

    def full_spec(arr):
        nd = arr.ndim
        return pl.BlockSpec(arr.shape, lambda i, _nd=nd: (0,) * _nd)

    M = B * T
    out_flat = pl.pallas_call(
        kernel,
        out_shape=jax.ShapeDtypeStruct((M, out_pad), f32),
        grid=(1,),
        in_specs=[full_spec(x_flat)] + [full_spec(w) for w in weight_args],
        out_specs=pl.BlockSpec((M, out_pad), lambda i: (0, 0)),
        compiler_params=pltpu.CompilerParams(dimension_semantics=("arbitrary",)),
    )(x_flat, *weight_args)

    # Slice the valid tail + real output channels, back to NCW.
    out = out_flat.reshape(B, T, out_pad)[:, receptive_field:, :out_ch]
    return jnp.transpose(out, (0, 2, 1))                       # (B, out_ch, skip_size)


# --------------------------- Pure-JAX reference ------------------------------

def _mm(a, w):
    # bf16 operands, f32 accumulation — mirrors the kernel's MXU path.
    return jax.lax.dot_general(
        a.astype(jnp.bfloat16), w.astype(jnp.bfloat16),
        dimension_numbers=(((a.ndim - 1,), (0,)), ((), ())),
        preferred_element_type=jnp.float32)


def reference_forward(x_bct, params, *, layer_size, stack_size):
    dilations = [2 ** i for i in range(layer_size)] * stack_size
    skip_size = x_bct.shape[2] - int(sum(dilations))
    x = jnp.transpose(x_bct, (0, 2, 1))                        # (B, T, C)
    x_prev = jnp.pad(x, ((0, 0), (1, 0), (0, 0)))[:, :-1]
    h = _mm(x_prev, params["cw0"]) + _mm(x, params["cw1"])
    skip_sum = 0.0
    for i, d in enumerate(dilations):
        Lo = h.shape[1] - d
        z = _mm(h[:, :Lo], params["dw0"][i]) + _mm(h[:, d:d + Lo], params["dw1"][i])
        gt = jnp.tanh(_mm(z, params["tw"][i]) + params["tb"][i])
        gs = jax.nn.sigmoid(_mm(z, params["sw"][i]) + params["sb"][i])
        g = gt * gs
        h = (_mm(g, params["rw"][i]) + params["rb"][i]) + h[:, d:]
        skip = _mm(g, params["kw"][i]) + params["kb"][i]
        skip_sum = skip_sum + skip[:, Lo - skip_size:]
    p = jax.nn.relu(skip_sum)
    p = jax.nn.relu(_mm(p, params["p1w"]) + params["p1b"])
    p = jax.nn.sigmoid(_mm(p, params["p2w"]) + params["p2b"])
    return jnp.transpose(p, (0, 2, 1))


# ----------------------------- Param init ------------------------------------

def init_params(key, *, layer_size, stack_size, channels, residual_channels,
                dilation_channels, skip_channels, end_channels, out_channels):
    n_blocks = layer_size * stack_size
    ks = jax.random.split(key, 16)
    s = 0.1

    def nrm(k, shape):
        return (s * jax.random.normal(k, shape)).astype(jnp.float32)

    return {
        # CausalConv1d (kernel=2, no bias): two taps stored as (Cin, Cout) matrices
        "cw0": nrm(ks[0], (channels, residual_channels)),
        "cw1": nrm(ks[1], (channels, residual_channels)),
        # DilatedCausalConv1d per block (kernel=2, no bias)
        "dw0": nrm(ks[2], (n_blocks, residual_channels, residual_channels)),
        "dw1": nrm(ks[3], (n_blocks, residual_channels, residual_channels)),
        # gate / residual / skip 1x1 convs (with bias)
        "tw": nrm(ks[4], (n_blocks, residual_channels, dilation_channels)),
        "tb": nrm(ks[5], (n_blocks, 1, dilation_channels)),
        "sw": nrm(ks[6], (n_blocks, residual_channels, dilation_channels)),
        "sb": nrm(ks[7], (n_blocks, 1, dilation_channels)),
        "rw": nrm(ks[8], (n_blocks, dilation_channels, residual_channels)),
        "rb": nrm(ks[9], (n_blocks, 1, residual_channels)),
        "kw": nrm(ks[10], (n_blocks, dilation_channels, skip_channels)),
        "kb": nrm(ks[11], (n_blocks, 1, skip_channels)),
        # PostProcess 1x1 convs (with bias)
        "p1w": nrm(ks[12], (skip_channels, end_channels)),
        "p1b": nrm(ks[13], (1, end_channels)),
        "p2w": nrm(ks[14], (end_channels, out_channels)),
        "p2b": nrm(ks[15], (1, out_channels)),
    }


# --------------------------------- Main ---------------------------------------

if __name__ == "__main__":
    # Wavenet(layer_size=3, stack_size=2, channels=4, residual_channels=32,
    #         dilation_channels=32, skip_channels=32, end_channels=32, out_channels=4)
    cfg = dict(layer_size=3, stack_size=2, channels=4, residual_channels=32,
               dilation_channels=32, skip_channels=32, end_channels=32,
               out_channels=4)
    B, T = 2, 32   # receptive field = (1+2+4)*2 = 14 -> output length = 18

    key = jax.random.PRNGKey(0)
    kx, kp = jax.random.split(key)
    x = jax.random.normal(kx, (B, cfg["channels"], T), dtype=jnp.float32)
    params = init_params(kp, **cfg)

    out = wavenet_forward(x, params,
                          layer_size=cfg["layer_size"], stack_size=cfg["stack_size"])
    out = jax.block_until_ready(out)

    ref = reference_forward(x, params,
                            layer_size=cfg["layer_size"], stack_size=cfg["stack_size"])
    assert out.shape == (B, cfg["out_channels"], T - 14), out.shape
    # bf16 MXU operands on both sides; tolerance covers bf16 re-rounding of the
    # residual state under slightly different (fused) f32 accumulation order.
    assert jnp.allclose(out, ref, rtol=5e-3, atol=5e-3), \
        float(jnp.max(jnp.abs(out - ref)))

    # TODO(synk): sample_forward / fill_queues (queue-based incremental sampling)
    # are stateful inference utilities, not part of forward(); not implemented.
    print("KERNEL_OK")
</pallas_src>

<mosaic_0001>
module attributes {stable_mosaic.version = 11 : i64} {
  func.func @_wavenet_kernel(%arg0: i32, %arg1: memref<64x4xf32, #tpu.memory_space<vmem>>, %arg2: memref<8x32xbf16, #tpu.memory_space<vmem>>, %arg3: memref<6x64x32xbf16, #tpu.memory_space<vmem>>, %arg4: memref<6x32x64xbf16, #tpu.memory_space<vmem>>, %arg5: memref<6x1x64xf32, #tpu.memory_space<vmem>>, %arg6: memref<6x32x64xbf16, #tpu.memory_space<vmem>>, %arg7: memref<6x1x64xf32, #tpu.memory_space<vmem>>, %arg8: memref<32x32xbf16, #tpu.memory_space<vmem>>, %arg9: memref<1x32xf32, #tpu.memory_space<vmem>>, %arg10: memref<32x128xbf16, #tpu.memory_space<vmem>>, %arg11: memref<1x128xf32, #tpu.memory_space<vmem>>, %arg12: memref<64x128xf32, #tpu.memory_space<vmem>>) attributes {dimension_semantics = [#tpu.dimension_semantics<arbitrary>], iteration_bounds = array<i64: 1>, scalar_prefetch = 0 : i64, scratch_operands = 0 : i64, tpu.core_type = #tpu.core_type<tc>, window_params = [{pipeline_mode = #tpu.pipeline_mode<synchronous>, transform_indices = @transform_0, window_bounds = array<i64: 64, 4>}, {pipeline_mode = #tpu.pipeline_mode<synchronous>, transform_indices = @transform_1, window_bounds = array<i64: 8, 32>}, {pipeline_mode = #tpu.pipeline_mode<synchronous>, transform_indices = @transform_2, window_bounds = array<i64: 6, 64, 32>}, {pipeline_mode = #tpu.pipeline_mode<synchronous>, transform_indices = @transform_3, window_bounds = array<i64: 6, 32, 64>}, {pipeline_mode = #tpu.pipeline_mode<synchronous>, transform_indices = @transform_4, window_bounds = array<i64: 6, 1, 64>}, {pipeline_mode = #tpu.pipeline_mode<synchronous>, transform_indices = @transform_5, window_bounds = array<i64: 6, 32, 64>}, {pipeline_mode = #tpu.pipeline_mode<synchronous>, transform_indices = @transform_6, window_bounds = array<i64: 6, 1, 64>}, {pipeline_mode = #tpu.pipeline_mode<synchronous>, transform_indices = @transform_7, window_bounds = array<i64: 32, 32>}, {pipeline_mode = #tpu.pipeline_mode<synchronous>, transform_indices = @transform_8, window_bounds = array<i64: 1, 32>}, {pipeline_mode = #tpu.pipeline_mode<synchronous>, transform_indices = @transform_9, window_bounds = array<i64: 32, 128>}, {pipeline_mode = #tpu.pipeline_mode<synchronous>, transform_indices = @transform_10, window_bounds = array<i64: 1, 128>}, {pipeline_mode = #tpu.pipeline_mode<synchronous>, transform_indices = @transform_11, window_bounds = array<i64: 64, 128>}]} {
    %c0 = arith.constant 0 : index
    %c0_0 = arith.constant 0 : index
    %0 = vector.load %arg1[%c0, %c0_0] : memref<64x4xf32, #tpu.memory_space<vmem>>, vector<64x4xf32>
    %1 = tpu.iota {dimensions = array<i32: 0>} : vector<64x1xi32>
    %c32_i32 = arith.constant 32 : i32
    %c0_i32 = arith.constant 0 : i32
    %2 = arith.cmpi eq, %c32_i32, %c0_i32 : i32
    %c1_i32 = arith.constant 1 : i32
    %3 = arith.select %2, %c1_i32, %c32_i32 : i32
    %4 = vector.broadcast %3 : i32 to vector<64x1xi32>
    %5 = arith.remsi %1, %4 : vector<64x1xi32>
    %c0_i32_1 = arith.constant 0 : i32
    %6 = vector.broadcast %c0_i32_1 : i32 to vector<64x1xi32>
    %7 = arith.cmpi ne, %5, %6 : vector<64x1xi32>
    %c0_i32_2 = arith.constant 0 : i32
    %8 = vector.broadcast %c0_i32_2 : i32 to vector<64x1xi32>
    %9 = arith.cmpi slt, %5, %8 : vector<64x1xi32>
    %c0_i32_3 = arith.constant 0 : i32
    %10 = arith.cmpi slt, %3, %c0_i32_3 : i32
    %11 = vector.broadcast %10 : i1 to vector<64x1xi1>
    %12 = vector.broadcast %11 : vector<64x1xi1> to vector<64x1xi1>
    %13 = arith.xori %9, %12 : vector<64x1xi1>
    %14 = arith.andi %13, %7 : vector<64x1xi1>
    %15 = vector.broadcast %3 : i32 to vector<64x1xi32>
    %16 = arith.addi %5, %15 : vector<64x1xi32>
    %17 = arith.select %14, %16, %5 : vector<64x1xi1>, vector<64x1xi32>
    %c0_i32_4 = arith.constant 0 : i32
    %18 = vector.broadcast %c0_i32_4 : i32 to vector<64x1xi32>
    %19 = arith.cmpi eq, %17, %18 : vector<64x1xi32>
    %cst = arith.constant 0.000000e+00 : f32
    %20 = vector.broadcast %cst : f32 to vector<64x4xf32>
    %c1_i32_5 = arith.constant 1 : i32
    %21 = tpu.dynamic_rotate %0 by %c1_i32_5 dim 0 : vector<64x4xf32>, i32 -> vector<64x4xf32>
    %22 = vector.shape_cast %19 : vector<64x1xi1> to vector<64x1xi1>
    %23 = vector.broadcast %22 : vector<64x1xi1> to vector<64x4xi1>
    %24 = arith.select %23, %20, %21 : vector<64x4xi1>, vector<64x4xf32>
    %25 = tpu.concatenate %24, %0 in 1 : vector<64x4xf32>, vector<64x4xf32> -> vector<64x8xf32>
    %26 = arith.truncf %25 : vector<64x8xf32> to vector<64x8xbf16>
    %c0_6 = arith.constant 0 : index
    %c0_7 = arith.constant 0 : index
    %27 = vector.load %arg2[%c0_6, %c0_7] : memref<8x32xbf16, #tpu.memory_space<vmem>>, vector<8x32xbf16>
    %cst_8 = arith.constant dense<0.000000e+00> : vector<64x32xf32>
    %28 = tpu.matmul %26, %27, %cst_8 {dimension_numbers = #tpu.dot_dimension_numbers<[1], [0], [0], [1], [0, 0, 1, 1], [], []>} : vector<64x8xbf16>, vector<8x32xbf16>, vector<64x32xf32> -> vector<64x32xf32>
    %cst_9 = arith.constant 0.000000e+00 : f32
    %29 = vector.broadcast %cst_9 : f32 to vector<64x32xf32>
    %c1_i32_10 = arith.constant 1 : i32
    %30 = tpu.dynamic_rotate %28 by %c1_i32_10 dim 0 : vector<64x32xf32>, i32 -> vector<64x32xf32>
    %31 = tpu.concatenate %30, %28 in 1 : vector<64x32xf32>, vector<64x32xf32> -> vector<64x64xf32>
    %32 = arith.truncf %31 : vector<64x64xf32> to vector<64x64xbf16>
    %c0_11 = arith.constant 0 : index
    %c0_12 = arith.constant 0 : index
    %c0_13 = arith.constant 0 : index
    %33 = vector.load %arg3[%c0_11, %c0_12, %c0_13] : memref<6x64x32xbf16, #tpu.memory_space<vmem>>, vector<1x64x32xbf16>
    %34 = vector.shape_cast %33 : vector<1x64x32xbf16> to vector<64x32xbf16>
    %cst_14 = arith.constant dense<0.000000e+00> : vector<64x32xf32>
    %35 = tpu.matmul %32, %34, %cst_14 {dimension_numbers = #tpu.dot_dimension_numbers<[1], [0], [0], [1], [0, 0, 1, 1], [], []>} : vector<64x64xbf16>, vector<64x32xbf16>, vector<64x32xf32> -> vector<64x32xf32>
    %36 = arith.truncf %35 : vector<64x32xf32> to vector<64x32xbf16>
    %c0_15 = arith.constant 0 : index
    %c0_16 = arith.constant 0 : index
    %c0_17 = arith.constant 0 : index
    %37 = vector.load %arg4[%c0_15, %c0_16, %c0_17] : memref<6x32x64xbf16, #tpu.memory_space<vmem>>, vector<1x32x64xbf16>
    %38 = vector.shape_cast %37 : vector<1x32x64xbf16> to vector<32x64xbf16>
    %cst_18 = arith.constant dense<0.000000e+00> : vector<64x64xf32>
    %39 = tpu.matmul %36, %38, %cst_18 {dimension_numbers = #tpu.dot_dimension_numbers<[1], [0], [0], [1], [0, 0, 1, 1], [], []>} : vector<64x32xbf16>, vector<32x64xbf16>, vector<64x64xf32> -> vector<64x64xf32>
    %c0_19 = arith.constant 0 : index
    %c0_20 = arith.constant 0 : index
    %c0_21 = arith.constant 0 : index
    %40 = vector.load %arg5[%c0_19, %c0_20, %c0_21] : memref<6x1x64xf32, #tpu.memory_space<vmem>>, vector<1x1x64xf32>
    %41 = vector.shape_cast %40 : vector<1x1x64xf32> to vector<1x64xf32>
    %42 = vector.broadcast %41 : vector<1x64xf32> to vector<64x64xf32>
    %43 = arith.addf %39, %42 : vector<64x64xf32>
    %44 = vector.extract_strided_slice %43 {offsets = [0, 0], sizes = [64, 32], strides = [1, 1]} : vector<64x64xf32> to vector<64x32xf32>
    %45 = math.tanh %44 : vector<64x32xf32>
    %46 = vector.extract_strided_slice %43 {offsets = [0, 32], sizes = [64, 32], strides = [1, 1]} : vector<64x64xf32> to vector<64x32xf32>
    %47 = arith.negf %46 : vector<64x32xf32>
    %48 = math.exp %47 : vector<64x32xf32>
    %cst_22 = arith.constant 1.000000e+00 : f32
    %49 = vector.broadcast %cst_22 : f32 to vector<64x32xf32>
    %50 = arith.addf %49, %48 : vector<64x32xf32>
    %51 = arith.divf %49, %50 : vector<64x32xf32>
    %52 = arith.mulf %45, %51 : vector<64x32xf32>
    %53 = arith.truncf %52 : vector<64x32xf32> to vector<64x32xbf16>
    %c0_23 = arith.constant 0 : index
    %c0_24 = arith.constant 0 : index
    %c0_25 = arith.constant 0 : index
    %54 = vector.load %arg6[%c0_23, %c0_24, %c0_25] : memref<6x32x64xbf16, #tpu.memory_space<vmem>>, vector<1x32x64xbf16>
    %55 = vector.shape_cast %54 : vector<1x32x64xbf16> to vector<32x64xbf16>
    %cst_26 = arith.constant dense<0.000000e+00> : vector<64x64xf32>
    %56 = tpu.matmul %53, %55, %cst_26 {dimension_numbers = #tpu.dot_dimension_numbers<[1], [0], [0], [1], [0, 0, 1, 1], [], []>} : vector<64x32xbf16>, vector<32x64xbf16>, vector<64x64xf32> -> vector<64x64xf32>
    %c0_27 = arith.constant 0 : index
    %c0_28 = arith.constant 0 : index
    %c0_29 = arith.constant 0 : index
    %57 = vector.load %arg7[%c0_27, %c0_28, %c0_29] : memref<6x1x64xf32, #tpu.memory_space<vmem>>, vector<1x1x64xf32>
    %58 = vector.shape_cast %57 : vector<1x1x64xf32> to vector<1x64xf32>
    %59 = vector.broadcast %58 : vector<1x64xf32> to vector<64x64xf32>
    %60 = arith.addf %56, %59 : vector<64x64xf32>
    %61 = vector.extract_strided_slice %60 {offsets = [0, 0], sizes = [64, 32], strides = [1, 1]} : vector<64x64xf32> to vector<64x32xf32>
    %62 = arith.addf %61, %28 : vector<64x32xf32>
    %63 = vector.extract_strided_slice %60 {offsets = [0, 32], sizes = [64, 32], strides = [1, 1]} : vector<64x64xf32> to vector<64x32xf32>
    %64 = arith.addf %29, %63 : vector<64x32xf32>
    %c2_i32 = arith.constant 2 : i32
    %65 = tpu.dynamic_rotate %62 by %c2_i32 dim 0 : vector<64x32xf32>, i32 -> vector<64x32xf32>
    %66 = tpu.concatenate %65, %62 in 1 : vector<64x32xf32>, vector<64x32xf32> -> vector<64x64xf32>
    %67 = arith.truncf %66 : vector<64x64xf32> to vector<64x64xbf16>
    %c1 = arith.constant 1 : index
    %c0_30 = arith.constant 0 : index
    %c0_31 = arith.constant 0 : index
    %68 = vector.load %arg3[%c1, %c0_30, %c0_31] : memref<6x64x32xbf16, #tpu.memory_space<vmem>>, vector<1x64x32xbf16>
    %69 = vector.shape_cast %68 : vector<1x64x32xbf16> to vector<64x32xbf16>
    %cst_32 = arith.constant dense<0.000000e+00> : vector<64x32xf32>
    %70 = tpu.matmul %67, %69, %cst_32 {dimension_numbers = #tpu.dot_dimension_numbers<[1], [0], [0], [1], [0, 0, 1, 1], [], []>} : vector<64x64xbf16>, vector<64x32xbf16>, vector<64x32xf32> -> vector<64x32xf32>
    %71 = arith.truncf %70 : vector<64x32xf32> to vector<64x32xbf16>
    %c1_33 = arith.constant 1 : index
    %c0_34 = arith.constant 0 : index
    %c0_35 = arith.constant 0 : index
    %72 = vector.load %arg4[%c1_33, %c0_34, %c0_35] : memref<6x32x64xbf16, #tpu.memory_space<vmem>>, vector<1x32x64xbf16>
    %73 = vector.shape_cast %72 : vector<1x32x64xbf16> to vector<32x64xbf16>
    %cst_36 = arith.constant dense<0.000000e+00> : vector<64x64xf32>
    %74 = tpu.matmul %71, %73, %cst_36 {dimension_numbers = #tpu.dot_dimension_numbers<[1], [0], [0], [1], [0, 0, 1, 1], [], []>} : vector<64x32xbf16>, vector<32x64xbf16>, vector<64x64xf32> -> vector<64x64xf32>
    %c1_37 = arith.constant 1 : index
    %c0_38 = arith.constant 0 : index
    %c0_39 = arith.constant 0 : index
    %75 = vector.load %arg5[%c1_37, %c0_38, %c0_39] : memref<6x1x64xf32, #tpu.memory_space<vmem>>, vector<1x1x64xf32>
    %76 = vector.shape_cast %75 : vector<1x1x64xf32> to vector<1x64xf32>
    %77 = vector.broadcast %76 : vector<1x64xf32> to vector<64x64xf32>
    %78 = arith.addf %74, %77 : vector<64x64xf32>
    %79 = vector.extract_strided_slice %78 {offsets = [0, 0], sizes = [64, 32], strides = [1, 1]} : vector<64x64xf32> to vector<64x32xf32>
    %80 = math.tanh %79 : vector<64x32xf32>
    %81 = vector.extract_strided_slice %78 {offsets = [0, 32], sizes = [64, 32], strides = [1, 1]} : vector<64x64xf32> to vector<64x32xf32>
    %82 = arith.negf %81 : vector<64x32xf32>
    %83 = math.exp %82 : vector<64x32xf32>
    %cst_40 = arith.constant 1.000000e+00 : f32
    %84 = vector.broadcast %cst_40 : f32 to vector<64x32xf32>
    %85 = arith.addf %84, %83 : vector<64x32xf32>
    %86 = arith.divf %84, %85 : vector<64x32xf32>
    %87 = arith.mulf %80, %86 : vector<64x32xf32>
    %88 = arith.truncf %87 : vector<64x32xf32> to vector<64x32xbf16>
    %c1_41 = arith.constant 1 : index
    %c0_42 = arith.constant 0 : index
    %c0_43 = arith.constant 0 : index
    %89 = vector.load %arg6[%c1_41, %c0_42, %c0_43] : memref<6x32x64xbf16, #tpu.memory_space<vmem>>, vector<1x32x64xbf16>
    %90 = vector.shape_cast %89 : vector<1x32x64xbf16> to vector<32x64xbf16>
    %cst_44 = arith.constant dense<0.000000e+00> : vector<64x64xf32>
    %91 = tpu.matmul %88, %90, %cst_44 {dimension_numbers = #tpu.dot_dimension_numbers<[1], [0], [0], [1], [0, 0, 1, 1], [], []>} : vector<64x32xbf16>, vector<32x64xbf16>, vector<64x64xf32> -> vector<64x64xf32>
    %c1_45 = arith.constant 1 : index
    %c0_46 = arith.constant 0 : index
    %c0_47 = arith.constant 0 : index
    %92 = vector.load %arg7[%c1_45, %c0_46, %c0_47] : memref<6x1x64xf32, #tpu.memory_space<vmem>>, vector<1x1x64xf32>
    %93 = vector.shape_cast %92 : vector<1x1x64xf32> to vector<1x64xf32>
    %94 = vector.broadcast %93 : vector<1x64xf32> to vector<64x64xf32>
    %95 = arith.addf %91, %94 : vector<64x64xf32>
    %96 = vector.extract_strided_slice %95 {offsets = [0, 0], sizes = [64, 32], strides = [1, 1]} : vector<64x64xf32> to vector<64x32xf32>
    %97 = arith.addf %96, %62 : vector<64x32xf32>
    %98 = vector.extract_strided_slice %95 {offsets = [0, 32], sizes = [64, 32], strides = [1, 1]} : vector<64x64xf32> to vector<64x32xf32>
    %99 = arith.addf %64, %98 : vector<64x32xf32>
    %c4_i32 = arith.constant 4 : i32
    %100 = tpu.dynamic_rotate %97 by %c4_i32 dim 0 : vector<64x32xf32>, i32 -> vector<64x32xf32>
    %101 = tpu.concatenate %100, %97 in 1 : vector<64x32xf32>, vector<64x32xf32> -> vector<64x64xf32>
    %102 = arith.truncf %101 : vector<64x64xf32> to vector<64x64xbf16>
    %c2 = arith.constant 2 : index
    %c0_48 = arith.constant 0 : index
    %c0_49 = arith.constant 0 : index
    %103 = vector.load %arg3[%c2, %c0_48, %c0_49] : memref<6x64x32xbf16, #tpu.memory_space<vmem>>, vector<1x64x32xbf16>
    %104 = vector.shape_cast %103 : vector<1x64x32xbf16> to vector<64x32xbf16>
    %cst_50 = arith.constant dense<0.000000e+00> : vector<64x32xf32>
    %105 = tpu.matmul %102, %104, %cst_50 {dimension_numbers = #tpu.dot_dimension_numbers<[1], [0], [0], [1], [0, 0, 1, 1], [], []>} : vector<64x64xbf16>, vector<64x32xbf16>, vector<64x32xf32> -> vector<64x32xf32>
    %106 = arith.truncf %105 : vector<64x32xf32> to vector<64x32xbf16>
    %c2_51 = arith.constant 2 : index
    %c0_52 = arith.constant 0 : index
    %c0_53 = arith.constant 0 : index
    %107 = vector.load %arg4[%c2_51, %c0_52, %c0_53] : memref<6x32x64xbf16, #tpu.memory_space<vmem>>, vector<1x32x64xbf16>
    %108 = vector.shape_cast %107 : vector<1x32x64xbf16> to vector<32x64xbf16>
    %cst_54 = arith.constant dense<0.000000e+00> : vector<64x64xf32>
    %109 = tpu.matmul %106, %108, %cst_54 {dimension_numbers = #tpu.dot_dimension_numbers<[1], [0], [0], [1], [0, 0, 1, 1], [], []>} : vector<64x32xbf16>, vector<32x64xbf16>, vector<64x64xf32> -> vector<64x64xf32>
    %c2_55 = arith.constant 2 : index
    %c0_56 = arith.constant 0 : index
    %c0_57 = arith.constant 0 : index
    %110 = vector.load %arg5[%c2_55, %c0_56, %c0_57] : memref<6x1x64xf32, #tpu.memory_space<vmem>>, vector<1x1x64xf32>
    %111 = vector.shape_cast %110 : vector<1x1x64xf32> to vector<1x64xf32>
    %112 = vector.broadcast %111 : vector<1x64xf32> to vector<64x64xf32>
    %113 = arith.addf %109, %112 : vector<64x64xf32>
    %114 = vector.extract_strided_slice %113 {offsets = [0, 0], sizes = [64, 32], strides = [1, 1]} : vector<64x64xf32> to vector<64x32xf32>
    %115 = math.tanh %114 : vector<64x32xf32>
    %116 = vector.extract_strided_slice %113 {offsets = [0, 32], sizes = [64, 32], strides = [1, 1]} : vector<64x64xf32> to vector<64x32xf32>
    %117 = arith.negf %116 : vector<64x32xf32>
    %118 = math.exp %117 : vector<64x32xf32>
    %cst_58 = arith.constant 1.000000e+00 : f32
    %119 = vector.broadcast %cst_58 : f32 to vector<64x32xf32>
    %120 = arith.addf %119, %118 : vector<64x32xf32>
    %121 = arith.divf %119, %120 : vector<64x32xf32>
    %122 = arith.mulf %115, %121 : vector<64x32xf32>
    %123 = arith.truncf %122 : vector<64x32xf32> to vector<64x32xbf16>
    %c2_59 = arith.constant 2 : index
    %c0_60 = arith.constant 0 : index
    %c0_61 = arith.constant 0 : index
    %124 = vector.load %arg6[%c2_59, %c0_60, %c0_61] : memref<6x32x64xbf16, #tpu.memory_space<vmem>>, vector<1x32x64xbf16>
    %125 = vector.shape_cast %124 : vector<1x32x64xbf16> to vector<32x64xbf16>
    %cst_62 = arith.constant dense<0.000000e+00> : vector<64x64xf32>
    %126 = tpu.matmul %123, %125, %cst_62 {dimension_numbers = #tpu.dot_dimension_numbers<[1], [0], [0], [1], [0, 0, 1, 1], [], []>} : vector<64x32xbf16>, vector<32x64xbf16>, vector<64x64xf32> -> vector<64x64xf32>
    %c2_63 = arith.constant 2 : index
    %c0_64 = arith.constant 0 : index
    %c0_65 = arith.constant 0 : index
    %127 = vector.load %arg7[%c2_63, %c0_64, %c0_65] : memref<6x1x64xf32, #tpu.memory_space<vmem>>, vector<1x1x64xf32>
    %128 = vector.shape_cast %127 : vector<1x1x64xf32> to vector<1x64xf32>
    %129 = vector.broadcast %128 : vector<1x64xf32> to vector<64x64xf32>
    %130 = arith.addf %126, %129 : vector<64x64xf32>
    %131 = vector.extract_strided_slice %130 {offsets = [0, 0], sizes = [64, 32], strides = [1, 1]} : vector<64x64xf32> to vector<64x32xf32>
    %132 = arith.addf %131, %97 : vector<64x32xf32>
    %133 = vector.extract_strided_slice %130 {offsets = [0, 32], sizes = [64, 32], strides = [1, 1]} : vector<64x64xf32> to vector<64x32xf32>
    %134 = arith.addf %99, %133 : vector<64x32xf32>
    %c1_i32_66 = arith.constant 1 : i32
    %135 = tpu.dynamic_rotate %132 by %c1_i32_66 dim 0 : vector<64x32xf32>, i32 -> vector<64x32xf32>
    %136 = tpu.concatenate %135, %132 in 1 : vector<64x32xf32>, vector<64x32xf32> -> vector<64x64xf32>
    %137 = arith.truncf %136 : vector<64x64xf32> to vector<64x64xbf16>
    %c3 = arith.constant 3 : index
    %c0_67 = arith.constant 0 : index
    %c0_68 = arith.constant 0 : index
    %138 = vector.load %arg3[%c3, %c0_67, %c0_68] : memref<6x64x32xbf16, #tpu.memory_space<vmem>>, vector<1x64x32xbf16>
    %139 = vector.shape_cast %138 : vector<1x64x32xbf16> to vector<64x32xbf16>
    %cst_69 = arith.constant dense<0.000000e+00> : vector<64x32xf32>
    %140 = tpu.matmul %137, %139, %cst_69 {dimension_numbers = #tpu.dot_dimension_numbers<[1], [0], [0], [1], [0, 0, 1, 1], [], []>} : vector<64x64xbf16>, vector<64x32xbf16>, vector<64x32xf32> -> vector<64x32xf32>
    %141 = arith.truncf %140 : vector<64x32xf32> to vector<64x32xbf16>
    %c3_70 = arith.constant 3 : index
    %c0_71 = arith.constant 0 : index
    %c0_72 = arith.constant 0 : index
    %142 = vector.load %arg4[%c3_70, %c0_71, %c0_72] : memref<6x32x64xbf16, #tpu.memory_space<vmem>>, vector<1x32x64xbf16>
    %143 = vector.shape_cast %142 : vector<1x32x64xbf16> to vector<32x64xbf16>
    %cst_73 = arith.constant dense<0.000000e+00> : vector<64x64xf32>
    %144 = tpu.matmul %141, %143, %cst_73 {dimension_numbers = #tpu.dot_dimension_numbers<[1], [0], [0], [1], [0, 0, 1, 1], [], []>} : vector<64x32xbf16>, vector<32x64xbf16>, vector<64x64xf32> -> vector<64x64xf32>
    %c3_74 = arith.constant 3 : index
    %c0_75 = arith.constant 0 : index
    %c0_76 = arith.constant 0 : index
    %145 = vector.load %arg5[%c3_74, %c0_75, %c0_76] : memref<6x1x64xf32, #tpu.memory_space<vmem>>, vector<1x1x64xf32>
    %146 = vector.shape_cast %145 : vector<1x1x64xf32> to vector<1x64xf32>
    %147 = vector.broadcast %146 : vector<1x64xf32> to vector<64x64xf32>
    %148 = arith.addf %144, %147 : vector<64x64xf32>
    %149 = vector.extract_strided_slice %148 {offsets = [0, 0], sizes = [64, 32], strides = [1, 1]} : vector<64x64xf32> to vector<64x32xf32>
    %150 = math.tanh %149 : vector<64x32xf32>
    %151 = vector.extract_strided_slice %148 {offsets = [0, 32], sizes = [64, 32], strides = [1, 1]} : vector<64x64xf32> to vector<64x32xf32>
    %152 = arith.negf %151 : vector<64x32xf32>
    %153 = math.exp %152 : vector<64x32xf32>
    %cst_77 = arith.constant 1.000000e+00 : f32
    %154 = vector.broadcast %cst_77 : f32 to vector<64x32xf32>
    %155 = arith.addf %154, %153 : vector<64x32xf32>
    %156 = arith.divf %154, %155 : vector<64x32xf32>
    %157 = arith.mulf %150, %156 : vector<64x32xf32>
    %158 = arith.truncf %157 : vector<64x32xf32> to vector<64x32xbf16>
    %c3_78 = arith.constant 3 : index
    %c0_79 = arith.constant 0 : index
    %c0_80 = arith.constant 0 : index
    %159 = vector.load %arg6[%c3_78, %c0_79, %c0_80] : memref<6x32x64xbf16, #tpu.memory_space<vmem>>, vector<1x32x64xbf16>
    %160 = vector.shape_cast %159 : vector<1x32x64xbf16> to vector<32x64xbf16>
    %cst_81 = arith.constant dense<0.000000e+00> : vector<64x64xf32>
    %161 = tpu.matmul %158, %160, %cst_81 {dimension_numbers = #tpu.dot_dimension_numbers<[1], [0], [0], [1], [0, 0, 1, 1], [], []>} : vector<64x32xbf16>, vector<32x64xbf16>, vector<64x64xf32> -> vector<64x64xf32>
    %c3_82 = arith.constant 3 : index
    %c0_83 = arith.constant 0 : index
    %c0_84 = arith.constant 0 : index
    %162 = vector.load %arg7[%c3_82, %c0_83, %c0_84] : memref<6x1x64xf32, #tpu.memory_space<vmem>>, vector<1x1x64xf32>
    %163 = vector.shape_cast %162 : vector<1x1x64xf32> to vector<1x64xf32>
    %164 = vector.broadcast %163 : vector<1x64xf32> to vector<64x64xf32>
    %165 = arith.addf %161, %164 : vector<64x64xf32>
    %166 = vector.extract_strided_slice %165 {offsets = [0, 0], sizes = [64, 32], strides = [1, 1]} : vector<64x64xf32> to vector<64x32xf32>
    %167 = arith.addf %166, %132 : vector<64x32xf32>
    %168 = vector.extract_strided_slice %165 {offsets = [0, 32], sizes = [64, 32], strides = [1, 1]} : vector<64x64xf32> to vector<64x32xf32>
    %169 = arith.addf %134, %168 : vector<64x32xf32>
    %c2_i32_85 = arith.constant 2 : i32
    %170 = tpu.dynamic_rotate %167 by %c2_i32_85 dim 0 : vector<64x32xf32>, i32 -> vector<64x32xf32>
    %171 = tpu.concatenate %170, %167 in 1 : vector<64x32xf32>, vector<64x32xf32> -> vector<64x64xf32>
    %172 = arith.truncf %171 : vector<64x64xf32> to vector<64x64xbf16>
    %c4 = arith.constant 4 : index
    %c0_86 = arith.constant 0 : index
    %c0_87 = arith.constant 0 : index
    %173 = vector.load %arg3[%c4, %c0_86, %c0_87] : memref<6x64x32xbf16, #tpu.memory_space<vmem>>, vector<1x64x32xbf16>
    %174 = vector.shape_cast %173 : vector<1x64x32xbf16> to vector<64x32xbf16>
    %cst_88 = arith.constant dense<0.000000e+00> : vector<64x32xf32>
    %175 = tpu.matmul %172, %174, %cst_88 {dimension_numbers = #tpu.dot_dimension_numbers<[1], [0], [0], [1], [0, 0, 1, 1], [], []>} : vector<64x64xbf16>, vector<64x32xbf16>, vector<64x32xf32> -> vector<64x32xf32>
    %176 = arith.truncf %175 : vector<64x32xf32> to vector<64x32xbf16>
    %c4_89 = arith.constant 4 : index
    %c0_90 = arith.constant 0 : index
    %c0_91 = arith.constant 0 : index
    %177 = vector.load %arg4[%c4_89, %c0_90, %c0_91] : memref<6x32x64xbf16, #tpu.memory_space<vmem>>, vector<1x32x64xbf16>
    %178 = vector.shape_cast %177 : vector<1x32x64xbf16> to vector<32x64xbf16>
    %cst_92 = arith.constant dense<0.000000e+00> : vector<64x64xf32>
    %179 = tpu.matmul %176, %178, %cst_92 {dimension_numbers = #tpu.dot_dimension_numbers<[1], [0], [0], [1], [0, 0, 1, 1], [], []>} : vector<64x32xbf16>, vector<32x64xbf16>, vector<64x64xf32> -> vector<64x64xf32>
    %c4_93 = arith.constant 4 : index
    %c0_94 = arith.constant 0 : index
    %c0_95 = arith.constant 0 : index
    %180 = vector.load %arg5[%c4_93, %c0_94, %c0_95] : memref<6x1x64xf32, #tpu.memory_space<vmem>>, vector<1x1x64xf32>
    %181 = vector.shape_cast %180 : vector<1x1x64xf32> to vector<1x64xf32>
    %182 = vector.broadcast %181 : vector<1x64xf32> to vector<64x64xf32>
    %183 = arith.addf %179, %182 : vector<64x64xf32>
    %184 = vector.extract_strided_slice %183 {offsets = [0, 0], sizes = [64, 32], strides = [1, 1]} : vector<64x64xf32> to vector<64x32xf32>
    %185 = math.tanh %184 : vector<64x32xf32>
    %186 = vector.extract_strided_slice %183 {offsets = [0, 32], sizes = [64, 32], strides = [1, 1]} : vector<64x64xf32> to vector<64x32xf32>
    %187 = arith.negf %186 : vector<64x32xf32>
    %188 = math.exp %187 : vector<64x32xf32>
    %cst_96 = arith.constant 1.000000e+00 : f32
    %189 = vector.broadcast %cst_96 : f32 to vector<64x32xf32>
    %190 = arith.addf %189, %188 : vector<64x32xf32>
    %191 = arith.divf %189, %190 : vector<64x32xf32>
    %192 = arith.mulf %185, %191 : vector<64x32xf32>
    %193 = arith.truncf %192 : vector<64x32xf32> to vector<64x32xbf16>
    %c4_97 = arith.constant 4 : index
    %c0_98 = arith.constant 0 : index
    %c0_99 = arith.constant 0 : index
    %194 = vector.load %arg6[%c4_97, %c0_98, %c0_99] : memref<6x32x64xbf16, #tpu.memory_space<vmem>>, vector<1x32x64xbf16>
    %195 = vector.shape_cast %194 : vector<1x32x64xbf16> to vector<32x64xbf16>
    %cst_100 = arith.constant dense<0.000000e+00> : vector<64x64xf32>
    %196 = tpu.matmul %193, %195, %cst_100 {dimension_numbers = #tpu.dot_dimension_numbers<[1], [0], [0], [1], [0, 0, 1, 1], [], []>} : vector<64x32xbf16>, vector<32x64xbf16>, vector<64x64xf32> -> vector<64x64xf32>
    %c4_101 = arith.constant 4 : index
    %c0_102 = arith.constant 0 : index
    %c0_103 = arith.constant 0 : index
    %197 = vector.load %arg7[%c4_101, %c0_102, %c0_103] : memref<6x1x64xf32, #tpu.memory_space<vmem>>, vector<1x1x64xf32>
    %198 = vector.shape_cast %197 : vector<1x1x64xf32> to vector<1x64xf32>
    %199 = vector.broadcast %198 : vector<1x64xf32> to vector<64x64xf32>
    %200 = arith.addf %196, %199 : vector<64x64xf32>
    %201 = vector.extract_strided_slice %200 {offsets = [0, 0], sizes = [64, 32], strides = [1, 1]} : vector<64x64xf32> to vector<64x32xf32>
    %202 = arith.addf %201, %167 : vector<64x32xf32>
    %203 = vector.extract_strided_slice %200 {offsets = [0, 32], sizes = [64, 32], strides = [1, 1]} : vector<64x64xf32> to vector<64x32xf32>
    %204 = arith.addf %169, %203 : vector<64x32xf32>
    %c4_i32_104 = arith.constant 4 : i32
    %205 = tpu.dynamic_rotate %202 by %c4_i32_104 dim 0 : vector<64x32xf32>, i32 -> vector<64x32xf32>
    %206 = tpu.concatenate %205, %202 in 1 : vector<64x32xf32>, vector<64x32xf32> -> vector<64x64xf32>
    %207 = arith.truncf %206 : vector<64x64xf32> to vector<64x64xbf16>
    %c5 = arith.constant 5 : index
    %c0_105 = arith.constant 0 : index
    %c0_106 = arith.constant 0 : index
    %208 = vector.load %arg3[%c5, %c0_105, %c0_106] : memref<6x64x32xbf16, #tpu.memory_space<vmem>>, vector<1x64x32xbf16>
    %209 = vector.shape_cast %208 : vector<1x64x32xbf16> to vector<64x32xbf16>
    %cst_107 = arith.constant dense<0.000000e+00> : vector<64x32xf32>
    %210 = tpu.matmul %207, %209, %cst_107 {dimension_numbers = #tpu.dot_dimension_numbers<[1], [0], [0], [1], [0, 0, 1, 1], [], []>} : vector<64x64xbf16>, vector<64x32xbf16>, vector<64x32xf32> -> vector<64x32xf32>
    %211 = arith.truncf %210 : vector<64x32xf32> to vector<64x32xbf16>
    %c5_108 = arith.constant 5 : index
    %c0_109 = arith.constant 0 : index
    %c0_110 = arith.constant 0 : index
    %212 = vector.load %arg4[%c5_108, %c0_109, %c0_110] : memref<6x32x64xbf16, #tpu.memory_space<vmem>>, vector<1x32x64xbf16>
    %213 = vector.shape_cast %212 : vector<1x32x64xbf16> to vector<32x64xbf16>
    %cst_111 = arith.constant dense<0.000000e+00> : vector<64x64xf32>
    %214 = tpu.matmul %211, %213, %cst_111 {dimension_numbers = #tpu.dot_dimension_numbers<[1], [0], [0], [1], [0, 0, 1, 1], [], []>} : vector<64x32xbf16>, vector<32x64xbf16>, vector<64x64xf32> -> vector<64x64xf32>
    %c5_112 = arith.constant 5 : index
    %c0_113 = arith.constant 0 : index
    %c0_114 = arith.constant 0 : index
    %215 = vector.load %arg5[%c5_112, %c0_113, %c0_114] : memref<6x1x64xf32, #tpu.memory_space<vmem>>, vector<1x1x64xf32>
    %216 = vector.shape_cast %215 : vector<1x1x64xf32> to vector<1x64xf32>
    %217 = vector.broadcast %216 : vector<1x64xf32> to vector<64x64xf32>
    %218 = arith.addf %214, %217 : vector<64x64xf32>
    %219 = vector.extract_strided_slice %218 {offsets = [0, 0], sizes = [64, 32], strides = [1, 1]} : vector<64x64xf32> to vector<64x32xf32>
    %220 = math.tanh %219 : vector<64x32xf32>
    %221 = vector.extract_strided_slice %218 {offsets = [0, 32], sizes = [64, 32], strides = [1, 1]} : vector<64x64xf32> to vector<64x32xf32>
    %222 = arith.negf %221 : vector<64x32xf32>
    %223 = math.exp %222 : vector<64x32xf32>
    %cst_115 = arith.constant 1.000000e+00 : f32
    %224 = vector.broadcast %cst_115 : f32 to vector<64x32xf32>
    %225 = arith.addf %224, %223 : vector<64x32xf32>
    %226 = arith.divf %224, %225 : vector<64x32xf32>
    %227 = arith.mulf %220, %226 : vector<64x32xf32>
    %228 = arith.truncf %227 : vector<64x32xf32> to vector<64x32xbf16>
    %c5_116 = arith.constant 5 : index
    %c0_117 = arith.constant 0 : index
    %c0_118 = arith.constant 0 : index
    %229 = vector.load %arg6[%c5_116, %c0_117, %c0_118] : memref<6x32x64xbf16, #tpu.memory_space<vmem>>, vector<1x32x64xbf16>
    %230 = vector.shape_cast %229 : vector<1x32x64xbf16> to vector<32x64xbf16>
    %cst_119 = arith.constant dense<0.000000e+00> : vector<64x64xf32>
    %231 = tpu.matmul %228, %230, %cst_119 {dimension_numbers = #tpu.dot_dimension_numbers<[1], [0], [0], [1], [0, 0, 1, 1], [], []>} : vector<64x32xbf16>, vector<32x64xbf16>, vector<64x64xf32> -> vector<64x64xf32>
    %c5_120 = arith.constant 5 : index
    %c0_121 = arith.constant 0 : index
    %c0_122 = arith.constant 0 : index
    %232 = vector.load %arg7[%c5_120, %c0_121, %c0_122] : memref<6x1x64xf32, #tpu.memory_space<vmem>>, vector<1x1x64xf32>
    %233 = vector.shape_cast %232 : vector<1x1x64xf32> to vector<1x64xf32>
    %234 = vector.broadcast %233 : vector<1x64xf32> to vector<64x64xf32>
    %235 = arith.addf %231, %234 : vector<64x64xf32>
    %236 = vector.extract_strided_slice %235 {offsets = [0, 32], sizes = [64, 32], strides = [1, 1]} : vector<64x64xf32> to vector<64x32xf32>
    %237 = arith.addf %204, %236 : vector<64x32xf32>
    %cst_123 = arith.constant 0.000000e+00 : f32
    %238 = vector.broadcast %cst_123 : f32 to vector<64x32xf32>
    %239 = arith.maximumf %237, %238 : vector<64x32xf32>
    %240 = arith.truncf %239 : vector<64x32xf32> to vector<64x32xbf16>
    %c0_124 = arith.constant 0 : index
    %c0_125 = arith.constant 0 : index
    %241 = vector.load %arg8[%c0_124, %c0_125] : memref<32x32xbf16, #tpu.memory_space<vmem>>, vector<32x32xbf16>
    %cst_126 = arith.constant dense<0.000000e+00> : vector<64x32xf32>
    %242 = tpu.matmul %240, %241, %cst_126 {dimension_numbers = #tpu.dot_dimension_numbers<[1], [0], [0], [1], [0, 0, 1, 1], [], []>} : vector<64x32xbf16>, vector<32x32xbf16>, vector<64x32xf32> -> vector<64x32xf32>
    %c0_127 = arith.constant 0 : index
    %c0_128 = arith.constant 0 : index
    %243 = vector.load %arg9[%c0_127, %c0_128] : memref<1x32xf32, #tpu.memory_space<vmem>>, vector<1x32xf32>
    %244 = vector.broadcast %243 : vector<1x32xf32> to vector<64x32xf32>
    %245 = arith.addf %242, %244 : vector<64x32xf32>
    %cst_129 = arith.constant 0.000000e+00 : f32
    %246 = vector.broadcast %cst_129 : f32 to vector<64x32xf32>
    %247 = arith.maximumf %245, %246 : vector<64x32xf32>
    %248 = arith.truncf %247 : vector<64x32xf32> to vector<64x32xbf16>
    %c0_130 = arith.constant 0 : index
    %c0_131 = arith.constant 0 : index
    %249 = vector.load %arg10[%c0_130, %c0_131] : memref<32x128xbf16, #tpu.memory_space<vmem>>, vector<32x128xbf16>
    %cst_132 = arith.constant dense<0.000000e+00> : vector<64x128xf32>
    %250 = tpu.matmul %248, %249, %cst_132 {dimension_numbers = #tpu.dot_dimension_numbers<[1], [0], [0], [1], [0, 0, 1, 1], [], []>} : vector<64x32xbf16>, vector<32x128xbf16>, vector<64x128xf32> -> vector<64x128xf32>
    %c0_133 = arith.constant 0 : index
    %c0_134 = arith.constant 0 : index
    %251 = vector.load %arg11[%c0_133, %c0_134] : memref<1x128xf32, #tpu.memory_space<vmem>>, vector<1x128xf32>
    %252 = vector.broadcast %251 : vector<1x128xf32> to vector<64x128xf32>
    %253 = arith.addf %250, %252 : vector<64x128xf32>
    %254 = arith.negf %253 : vector<64x128xf32>
    %255 = math.exp %254 : vector<64x128xf32>
    %cst_135 = arith.constant 1.000000e+00 : f32
    %256 = vector.broadcast %cst_135 : f32 to vector<64x128xf32>
    %257 = arith.addf %256, %255 : vector<64x128xf32>
    %258 = arith.divf %256, %257 : vector<64x128xf32>
    %c0_136 = arith.constant 0 : index
    %c0_137 = arith.constant 0 : index
    %259 = vector.load %arg12[%c0_136, %c0_137] : memref<64x128xf32, #tpu.memory_space<vmem>>, vector<64x128xf32>
    tpu.vector_store %arg12[%c0_136, %c0_137], %258 {strides = array<i32>} : memref<64x128xf32, #tpu.memory_space<vmem>>, vector<64x128xf32>,
    return
  }
  func.func @transform_0(%arg0: i32) -> (i32, i32) {
    %c0_i32 = arith.constant 0 : i32
    %c0_i32_0 = arith.constant 0 : i32
    %c0_i32_1 = arith.constant 0 : i32
    return %c0_i32, %c0_i32_0 : i32, i32
  }
  func.func @transform_1(%arg0: i32) -> (i32, i32) {
    %c0_i32 = arith.constant 0 : i32
    %c0_i32_0 = arith.constant 0 : i32
    %c0_i32_1 = arith.constant 0 : i32
    return %c0_i32, %c0_i32_0 : i32, i32
  }
  func.func @transform_2(%arg0: i32) -> (i32, i32, i32) {
    %c0_i32 = arith.constant 0 : i32
    %c0_i32_0 = arith.constant 0 : i32
    %c0_i32_1 = arith.constant 0 : i32
    %c0_i32_2 = arith.constant 0 : i32
    return %c0_i32, %c0_i32_0, %c0_i32_1 : i32, i32, i32
  }
  func.func @transform_3(%arg0: i32) -> (i32, i32, i32) {
    %c0_i32 = arith.constant 0 : i32
    %c0_i32_0 = arith.constant 0 : i32
    %c0_i32_1 = arith.constant 0 : i32
    %c0_i32_2 = arith.constant 0 : i32
    return %c0_i32, %c0_i32_0, %c0_i32_1 : i32, i32, i32
  }
  func.func @transform_4(%arg0: i32) -> (i32, i32, i32) {
    %c0_i32 = arith.constant 0 : i32
    %c0_i32_0 = arith.constant 0 : i32
    %c0_i32_1 = arith.constant 0 : i32
    %c0_i32_2 = arith.constant 0 : i32
    return %c0_i32, %c0_i32_0, %c0_i32_1 : i32, i32, i32
  }
  func.func @transform_5(%arg0: i32) -> (i32, i32, i32) {
    %c0_i32 = arith.constant 0 : i32
    %c0_i32_0 = arith.constant 0 : i32
    %c0_i32_1 = arith.constant 0 : i32
    %c0_i32_2 = arith.constant 0 : i32
    return %c0_i32, %c0_i32_0, %c0_i32_1 : i32, i32, i32
  }
  func.func @transform_6(%arg0: i32) -> (i32, i32, i32) {
    %c0_i32 = arith.constant 0 : i32
    %c0_i32_0 = arith.constant 0 : i32
    %c0_i32_1 = arith.constant 0 : i32
    %c0_i32_2 = arith.constant 0 : i32
    return %c0_i32, %c0_i32_0, %c0_i32_1 : i32, i32, i32
  }
  func.func @transform_7(%arg0: i32) -> (i32, i32) {
    %c0_i32 = arith.constant 0 : i32
    %c0_i32_0 = arith.constant 0 : i32
    %c0_i32_1 = arith.constant 0 : i32
    return %c0_i32, %c0_i32_0 : i32, i32
  }
  func.func @transform_8(%arg0: i32) -> (i32, i32) {
    %c0_i32 = arith.constant 0 : i32
    %c0_i32_0 = arith.constant 0 : i32
    %c0_i32_1 = arith.constant 0 : i32
    return %c0_i32, %c0_i32_0 : i32, i32
  }
  func.func @transform_9(%arg0: i32) -> (i32, i32) {
    %c0_i32 = arith.constant 0 : i32
    %c0_i32_0 = arith.constant 0 : i32
    %c0_i32_1 = arith.constant 0 : i32
    return %c0_i32, %c0_i32_0 : i32, i32
  }
  func.func @transform_10(%arg0: i32) -> (i32, i32) {
    %c0_i32 = arith.constant 0 : i32
    %c0_i32_0 = arith.constant 0 : i32
    %c0_i32_1 = arith.constant 0 : i32
    return %c0_i32, %c0_i32_0 : i32, i32
  }
  func.func @transform_11(%arg0: i32) -> (i32, i32) {
    %c0_i32 = arith.constant 0 : i32
    %c0_i32_0 = arith.constant 0 : i32
    %c0_i32_1 = arith.constant 0 : i32
    return %c0_i32, %c0_i32_0 : i32, i32
  }
}

</mosaic_0001>

<llo_original>
// kernel: tpu_custom_call.1
$region0: #{tpu_custom_call.1}
  #allocation0 [shape = 'u32[]', space=smem, size = 0x4, offset = 0x4, fixed_abs, tag = 'smem constant byte address 0x4 - core index']
  #allocation1 [shape = 'u32[144,128]{1,0:T(1,128)}', space=vmem, size = 0x12000, scoped, tag = 'internal scratch']
  %s0 = inlined_call_operand.vmem [shape: f32[64,4], index: 0, kind: input, shape index: {}]
  %s1 = inlined_call_operand.vmem [shape: bf16[8,32], index: 1, kind: input, shape index: {}]
  %s2 = inlined_call_operand.vmem [shape: bf16[6,64,32], index: 2, kind: input, shape index: {}]
  %s3 = inlined_call_operand.vmem [shape: bf16[6,32,64], index: 3, kind: input, shape index: {}]
  %s4 = inlined_call_operand.vmem [shape: f32[6,1,64], index: 4, kind: input, shape index: {}]
  %s5 = inlined_call_operand.vmem [shape: bf16[6,32,64], index: 5, kind: input, shape index: {}]
  %s6 = inlined_call_operand.vmem [shape: f32[6,1,64], index: 6, kind: input, shape index: {}]
  %s7 = inlined_call_operand.vmem [shape: bf16[32,32], index: 7, kind: input, shape index: {}]
  %s8 = inlined_call_operand.vmem [shape: f32[1,32], index: 8, kind: input, shape index: {}]
  %s9 = inlined_call_operand.vmem [shape: bf16[32,128], index: 9, kind: input, shape index: {}]
  %s10 = inlined_call_operand.vmem [shape: f32[1,128], index: 10, kind: input, shape index: {}]
  %s11 = inlined_call_operand.hbm [shape: f32[64,128], index: 11, kind: output, shape index: {}]
  %s12 = sld [smem:[#allocation0]]
  $region54: #{tpu_custom_call.1} parent=0
    _
  %s14 = ssub.s32 1, %s12
  %s15 = scalar_select 0, %s14, %s12
  $region1: #{tpu_custom_call.1} parent=0
    #allocation2 [shape = 'u8[32768]{0}', space=vmem, size = 0x8000, scoped, tag = 'output window, operand 0, single buffered']
    #allocation3 [shape = 's32[1]{0}', space=sflag, size = 0x4, scoped, tag = 'scoped memory for tpu_custom_call.1']
    %16 = vsyncpa [#allocation3], 0
    // Predicated region
    $region2: #{tpu_custom_call.1} parent=1 // pred_check
      _
    $region3: #{tpu_custom_call.1} parent=1 // pred_check_branch
      %18 = sbr.rel (0) target = $region5
    $region4: #{tpu_custom_call.1} parent=1 // pred_region
      _
    $region5: #{tpu_custom_call.1} parent=1 // pred_fallthru
      _
    // Predicated region
    $region6: #{tpu_custom_call.1} parent=1 // pred_check
      _
    $region7: #{tpu_custom_call.1} parent=1 // pred_check_branch
      %20 = sbr.rel (0) target = $region9
    $region8: #{tpu_custom_call.1} parent=1 // pred_region
      _
    $region9: #{tpu_custom_call.1} parent=1 // pred_fallthru
      _
    // Predicated region
    $region10: #{tpu_custom_call.1} parent=1 // pred_check
      _
    $region11: #{tpu_custom_call.1} parent=1 // pred_check_branch
      %22 = sbr.rel (0) target = $region13
    $region12: #{tpu_custom_call.1} parent=1 // pred_region
      _
    $region13: #{tpu_custom_call.1} parent=1 // pred_fallthru
      _
    // Predicated region
    $region14: #{tpu_custom_call.1} parent=1 // pred_check
      _
    $region15: #{tpu_custom_call.1} parent=1 // pred_check_branch
      %24 = sbr.rel (0) target = $region17
    $region16: #{tpu_custom_call.1} parent=1 // pred_region
      _
    $region17: #{tpu_custom_call.1} parent=1 // pred_fallthru
      _
    // Predicated region
    $region18: #{tpu_custom_call.1} parent=1 // pred_check
      _
    $region19: #{tpu_custom_call.1} parent=1 // pred_check_branch
      %26 = sbr.rel (0) target = $region21
    $region20: #{tpu_custom_call.1} parent=1 // pred_region
      _
    $region21: #{tpu_custom_call.1} parent=1 // pred_fallthru
      _
    // Predicated region
    $region22: #{tpu_custom_call.1} parent=1 // pred_check
      _
    $region23: #{tpu_custom_call.1} parent=1 // pred_check_branch
      %28 = sbr.rel (0) target = $region25
    $region24: #{tpu_custom_call.1} parent=1 // pred_region
      _
    $region25: #{tpu_custom_call.1} parent=1 // pred_fallthru
      _
    // Predicated region
    $region26: #{tpu_custom_call.1} parent=1 // pred_check
      _
    $region27: #{tpu_custom_call.1} parent=1 // pred_check_branch
      %30 = sbr.rel (0) target = $region29
    $region28: #{tpu_custom_call.1} parent=1 // pred_region
      _
    $region29: #{tpu_custom_call.1} parent=1 // pred_fallthru
      _
    // Predicated region
    $region30: #{tpu_custom_call.1} parent=1 // pred_check
      _
    $region31: #{tpu_custom_call.1} parent=1 // pred_check_branch
      %32 = sbr.rel (0) target = $region33
    $region32: #{tpu_custom_call.1} parent=1 // pred_region
      _
    $region33: #{tpu_custom_call.1} parent=1 // pred_fallthru
      _
    // Predicated region
    $region34: #{tpu_custom_call.1} parent=1 // pred_check
      _
    $region35: #{tpu_custom_call.1} parent=1 // pred_check_branch
      %34 = sbr.rel (0) target = $region37
    $region36: #{tpu_custom_call.1} parent=1 // pred_region
      _
    $region37: #{tpu_custom_call.1} parent=1 // pred_fallthru
      _
    // Predicated region
    $region38: #{tpu_custom_call.1} parent=1 // pred_check
      _
    $region39: #{tpu_custom_call.1} parent=1 // pred_check_branch
      %36 = sbr.rel (0) target = $region41
    $region40: #{tpu_custom_call.1} parent=1 // pred_region
      _
    $region41: #{tpu_custom_call.1} parent=1 // pred_fallthru
      _
    // Predicated region
    $region42: #{tpu_custom_call.1} parent=1 // pred_check
      _
    $region43: #{tpu_custom_call.1} parent=1 // pred_check_branch
      %38 = sbr.rel (0) target = $region45
    $region44: #{tpu_custom_call.1} parent=1 // pred_region
      _
    $region45: #{tpu_custom_call.1} parent=1 // pred_fallthru
      _
    %v40 = vld [vmem:[%s0] sm:$0xff]
    %v41 = vld [vmem:[%s0 + $0x8] sm:$0xff]
    %v42 = vld [vmem:[%s0 + $0x10] sm:$0xff]
    %v43 = vld [vmem:[%s0 + $0x18] sm:$0xff]
    %v44 = vld [vmem:[%s0 + $0x20] sm:$0xff]
    %v45 = vld [vmem:[%s0 + $0x28] sm:$0xff]
    %v46 = vld [vmem:[%s0 + $0x30] sm:$0xff]
    %v47 = vld [vmem:[%s0 + $0x38] sm:$0xff]
    %v48 = vlaneseq
    %v49 = vshrl.u32 %v48, 7
    %v50 = vadd.s32 %v49, 8
    %v51 = vadd.s32 %v49, 16
    %v52 = vadd.s32 %v49, 24
    %v53 = vadd.s32 %v49, 32
    %v54 = vadd.s32 %v49, 40
    %v55 = vadd.s32 %v49, 48
    %v56 = vadd.s32 %v49, 56
    %vm57 = vcmp.lt.s32.totalorder %v49, 0
    %v58 = vsub.s32 0, %v49
    %v59 = vsel %vm57, %v58, %v49
    %v60 = vshrl.u32 %v59, 5
    %v61 = vand.u32 %v59, 31
    %v62 = vsub.s32 0, %v61
    %v63 = vsel %vm57, %v62, %v61
    %vm64 = vcmp.lt.s32.totalorder %v50, 0
    %v65 = vsub.s32 0, %v50
    %v66 = vsel %vm64, %v65, %v50
    %v67 = vshrl.u32 %v66, 5
    %v68 = vand.u32 %v66, 31
    %v69 = vsub.s32 0, %v68
    %v70 = vsel %vm64, %v69, %v68
    %vm71 = vcmp.lt.s32.totalorder %v51, 0
    %v72 = vsub.s32 0, %v51
    %v73 = vsel %vm71, %v72, %v51
    %v74 = vshrl.u32 %v73, 5
    %v75 = vand.u32 %v73, 31
    %v76 = vsub.s32 0, %v75
    %v77 = vsel %vm71, %v76, %v75
    %vm78 = vcmp.lt.s32.totalorder %v52, 0
    %v79 = vsub.s32 0, %v52
    %v80 = vsel %vm78, %v79, %v52
    %v81 = vshrl.u32 %v80, 5
    %v82 = vand.u32 %v80, 31
    %v83 = vsub.s32 0, %v82
    %v84 = vsel %vm78, %v83, %v82
    %vm85 = vcmp.lt.s32.totalorder %v53, 0
    %v86 = vsub.s32 0, %v53
    %v87 = vsel %vm85, %v86, %v53
    %v88 = vshrl.u32 %v87, 5
    %v89 = vand.u32 %v87, 31
    %v90 = vsub.s32 0, %v89
    %v91 = vsel %vm85, %v90, %v89
    %vm92 = vcmp.lt.s32.totalorder %v54, 0
    %v93 = vsub.s32 0, %v54
    %v94 = vsel %vm92, %v93, %v54
    %v95 = vshrl.u32 %v94, 5
    %v96 = vand.u32 %v94, 31
    %v97 = vsub.s32 0, %v96
    %v98 = vsel %vm92, %v97, %v96
    %vm99 = vcmp.lt.s32.totalorder %v55, 0
    %v100 = vsub.s32 0, %v55
    %v101 = vsel %vm99, %v100, %v55
    %v102 = vshrl.u32 %v101, 5
    %v103 = vand.u32 %v101, 31
    %v104 = vsub.s32 0, %v103
    %v105 = vsel %vm99, %v104, %v103
    %vm106 = vcmp.lt.s32.totalorder %v56, 0
    %v107 = vsub.s32 0, %v56
    %v108 = vsel %vm106, %v107, %v56
    %v109 = vshrl.u32 %v108, 5
    %v110 = vand.u32 %v108, 31
    %v111 = vsub.s32 0, %v110
    %v112 = vsel %vm106, %v111, %v110
    %vm113 = vcmp.ne.s32.totalorder %v63, 0
    %vm114 = vcmp.ne.s32.totalorder %v70, 0
    %vm115 = vcmp.ne.s32.totalorder %v77, 0
    %vm116 = vcmp.ne.s32.totalorder %v84, 0
    %vm117 = vcmp.ne.s32.totalorder %v91, 0
    %vm118 = vcmp.ne.s32.totalorder %v98, 0
    %vm119 = vcmp.ne.s32.totalorder %v105, 0
    %vm120 = vcmp.ne.s32.totalorder %v112, 0
    %vm121 = vcmp.lt.s32.totalorder %v63, 0
    %vm122 = vcmp.lt.s32.totalorder %v70, 0
    %vm123 = vcmp.lt.s32.totalorder %v77, 0
    %vm124 = vcmp.lt.s32.totalorder %v84, 0
    %vm125 = vcmp.lt.s32.totalorder %v91, 0
    %vm126 = vcmp.lt.s32.totalorder %v98, 0
    %vm127 = vcmp.lt.s32.totalorder %v105, 0
    %vm128 = vcmp.lt.s32.totalorder %v112, 0
    %vm129 = vmand %vm121, %vm113
    %vm130 = vmand %vm122, %vm114
    %vm131 = vmand %vm123, %vm115
    %vm132 = vmand %vm124, %vm116
    %vm133 = vmand %vm125, %vm117
    %vm134 = vmand %vm126, %vm118
    %vm135 = vmand %vm127, %vm119
    %vm136 = vmand %vm128, %vm120
    %v137 = vadd.s32 %v63, 32
    %v138 = vadd.s32 %v70, 32
    %v139 = vadd.s32 %v77, 32
    %v140 = vadd.s32 %v84, 32
    %v141 = vadd.s32 %v91, 32
    %v142 = vadd.s32 %v98, 32
    %v143 = vadd.s32 %v105, 32
    %v144 = vadd.s32 %v112, 32
    %v145 = vsel %vm129, %v137, %v63
    %v146 = vsel %vm130, %v138, %v70
    %v147 = vsel %vm131, %v139, %v77
    %v148 = vsel %vm132, %v140, %v84
    %v149 = vsel %vm133, %v141, %v91
    %v150 = vsel %vm134, %v142, %v98
    %v151 = vsel %vm135, %v143, %v105
    %v152 = vsel %vm136, %v144, %v112
    %vm153 = vcmp.eq.s32.totalorder %v145, 0
    %vm154 = vcmp.eq.s32.totalorder %v146, 0
    %vm155 = vcmp.eq.s32.totalorder %v147, 0
    %vm156 = vcmp.eq.s32.totalorder %v148, 0
    %vm157 = vcmp.eq.s32.totalorder %v149, 0
    %vm158 = vcmp.eq.s32.totalorder %v150, 0
    %vm159 = vcmp.eq.s32.totalorder %v151, 0
    %vm160 = vcmp.eq.s32.totalorder %v152, 0
    %v161 = vrot.slane %v40, 7
    %v162 = vrot.slane %v41, 7
    %v163 = vrot.slane %v42, 7
    %v164 = vrot.slane %v43, 7
    %v165 = vrot.slane %v44, 7
    %v166 = vrot.slane %v45, 7
    %v167 = vrot.slane %v46, 7
    %v168 = vrot.slane %v47, 7
    %vm169 = vcmp.lt.s32.totalorder %v49, 1
    %v170 = vsel %vm169, %v167, %v168
    %v171 = vsel %vm169, %v166, %v167
    %v172 = vsel %vm169, %v165, %v166
    %v173 = vsel %vm169, %v164, %v165
    %v174 = vsel %vm169, %v163, %v164
    %v175 = vsel %vm169, %v162, %v163
    %v176 = vsel %vm169, %v161, %v162
    %v177 = vsel %vm169, %v168, %v161
    %v178 = vsel %vm153, 1, 0
    %v179 = vsel %vm154, 1, 0
    %v180 = vsel %vm155, 1, 0
    %v181 = vsel %vm156, 1, 0
    %v182 = vsel %vm157, 1, 0
    %v183 = vsel %vm158, 1, 0
    %v184 = vsel %vm159, 1, 0
    %v185 = vsel %vm160, 1, 0
    %vm186 = vcmp.eq.s32.totalorder %v178, 1
    %vm187 = vcmp.eq.s32.totalorder %v179, 1
    %vm188 = vcmp.eq.s32.totalorder %v180, 1
    %vm189 = vcmp.eq.s32.totalorder %v181, 1
    %vm190 = vcmp.eq.s32.totalorder %v182, 1
    %vm191 = vcmp.eq.s32.totalorder %v183, 1
    %vm192 = vcmp.eq.s32.totalorder %v184, 1
    %vm193 = vcmp.eq.s32.totalorder %v185, 1
    %v194 = vsel %vm186, 0.0, %v177
    %v195 = vsel %vm187, 0.0, %v176
    %v196 = vsel %vm188, 0.0, %v175
    %v197 = vsel %vm189, 0.0, %v174
    %v198 = vsel %vm190, 0.0, %v173
    %v199 = vsel %vm191, 0.0, %v172
    %v200 = vsel %vm192, 0.0, %v171
    %v201 = vsel %vm193, 0.0, %v170
    %210 = vrot.lane.b32.xlu0 %v40, 4
    %v211 = vpop.permute.xlu0 %210
    %212 = vrot.lane.b32.xlu0 %v41, 4
    %v213 = vpop.permute.xlu0 %212
    %214 = vrot.lane.b32.xlu0 %v42, 4
    %v215 = vpop.permute.xlu0 %214
    %216 = vrot.lane.b32.xlu0 %v43, 4
    %v217 = vpop.permute.xlu0 %216
    %218 = vrot.lane.b32.xlu0 %v44, 4
    %v219 = vpop.permute.xlu0 %218
    %220 = vrot.lane.b32.xlu0 %v45, 4
    %v221 = vpop.permute.xlu0 %220
    %222 = vrot.lane.b32.xlu0 %v46, 4
    %v223 = vpop.permute.xlu0 %222
    %224 = vrot.lane.b32.xlu0 %v47, 4
    %v225 = vpop.permute.xlu0 %224
    %vm234 = vcmask 31744
    %v235 = vsel %vm234, %v194, %v211
    %v236 = vsel %vm234, %v195, %v213
    %v237 = vsel %vm234, %v196, %v215
    %v238 = vsel %vm234, %v197, %v217
    %v239 = vsel %vm234, %v198, %v219
    %v240 = vsel %vm234, %v199, %v221
    %v241 = vsel %vm234, %v200, %v223
    %v242 = vsel %vm234, %v201, %v225
    %v243 = vpack.c.bf16 %v236, %v235
    %v244 = vpack.c.bf16 %v238, %v237
    %v245 = vpack.c.bf16 %v240, %v239
    %v246 = vpack.c.bf16 %v242, %v241
    %v247 = vld [vmem:[%s1] sm:$0xf]
    %vm248 = vcmask 64512
    %v250 = vsel %vm248, %v243, 0
    %v253 = vsel %vm248, %v244, 0
    %v256 = vsel %vm248, %v245, 0
    %v259 = vsel %vm248, %v246, 0
    %vm261 = vcmask 1043456
    %v263 = vsel %vm261, %v247, 0
    %265 = vmatprep.subr.bf16.mxu0 0
    %266 = vmatpush1.bf16.msra.mxu0 %v263
    %267 = vmatprep.subr.bf16.mxu0 0
    %268 = vmatpush1.bf16.msra.mxu0 0
    %269 = vmatprep.subr.bf16.mxu0 0
    %270 = vmatpush1.bf16.msra.mxu0 0
    %271 = vmatprep.subr.bf16.mxu0 0
    %272 = vmatpush1.bf16.msra.mxu0 0
    %273 = vmatprep.subr.bf16.mxu0 0
    %274 = vmatpush1.bf16.msra.mxu0 0
    %275 = vmatprep.subr.bf16.mxu0 0
    %276 = vmatpush1.bf16.msra.mxu0 0
    %277 = vmatprep.subr.bf16.mxu0 0
    %278 = vmatpush1.bf16.msra.mxu0 0
    %279 = vmatprep.subr.bf16.mxu0 0
    %280 = vmatpush1.bf16.msra.mxu0 0
    %281 = vmatprep.subr.bf16.mxu0 0
    %282 = vmatpush1.bf16.msra.mxu0 0
    %283 = vmatprep.subr.bf16.mxu0 0
    %284 = vmatpush1.bf16.msra.mxu0 0
    %285 = vmatprep.subr.bf16.mxu0 0
    %286 = vmatpush1.bf16.msra.mxu0 0
    %287 = vmatprep.subr.bf16.mxu0 0
    %288 = vmatpush1.bf16.msra.mxu0 0
    %289 = vmatprep.subr.bf16.mxu0 0
    %290 = vmatpush1.bf16.msra.mxu0 0
    %291 = vmatprep.subr.bf16.mxu0 0
    %292 = vmatpush1.bf16.msra.mxu0 0
    %293 = vmatprep.subr.bf16.mxu0 0
    %294 = vmatpush1.bf16.msra.mxu0 0
    %295 = vmatprep.subr.bf16.mxu0 0
    %296 = vmatpush1.bf16.msra.mxu0 0
    %297 = vmatprep.mubr.bf16.mxu0 0
    %298 = vmatmul.mubr.bf16.gmra.mrb[0].mxu0 %v250
    %v299 = vpop.f32.mrb[0].mxu0
    %v300 = vadd.f32 0.0, %v299
    %v301 = vpop.f32.mrb[0].mxu0
    %v302 = vpop.f32.mrb[0].mxu0
    %v303 = vadd.f32 0.0, %v302
    %v304 = vpop.f32.mrb[0].mxu0
    %305 = vmatprep.mubr.bf16.mxu0 0
    %306 = vmatmul.mubr.bf16.gmra.mrb[0].mxu0 %v253
    %v307 = vpop.f32.mrb[0].mxu0
    %v308 = vadd.f32 0.0, %v307
    %v309 = vpop.f32.mrb[0].mxu0
    %v310 = vpop.f32.mrb[0].mxu0
    %v311 = vadd.f32 0.0, %v310
    %v312 = vpop.f32.mrb[0].mxu0
    %313 = vmatprep.mubr.bf16.mxu0 0
    %314 = vmatmul.mubr.bf16.gmra.mrb[0].mxu0 %v256
    %v315 = vpop.f32.mrb[0].mxu0
    %v316 = vadd.f32 0.0, %v315
    %v317 = vpop.f32.mrb[0].mxu0
    %v318 = vpop.f32.mrb[0].mxu0
    %v319 = vadd.f32 0.0, %v318
    %v320 = vpop.f32.mrb[0].mxu0
    %321 = vmatprep.mubr.bf16.mxu0 0
    %322 = vmatmul.mubr.bf16.gmra.mrb[0].mxu0 %v259
    %v323 = vpop.f32.mrb[0].mxu0
    %v324 = vadd.f32 0.0, %v323
    %v325 = vpop.f32.mrb[0].mxu0
    %v326 = vpop.f32.mrb[0].mxu0
    %v327 = vadd.f32 0.0, %v326
    %v328 = vpop.f32.mrb[0].mxu0
    %329 = vdwg.mxu0
    %v330 = vrot.slane %v300, 7
    %v331 = vrot.slane %v303, 7
    %v332 = vrot.slane %v308, 7
    %v333 = vrot.slane %v311, 7
    %v334 = vrot.slane %v316, 7
    %v335 = vrot.slane %v319, 7
    %v336 = vrot.slane %v324, 7
    %v337 = vrot.slane %v327, 7
    %v338 = vsel %vm169, %v336, %v337
    %v339 = vsel %vm169, %v335, %v336
    %v340 = vsel %vm169, %v334, %v335
    %v341 = vsel %vm169, %v333, %v334
    %v342 = vsel %vm169, %v332, %v333
    %v343 = vsel %vm169, %v331, %v332
    %v344 = vsel %vm169, %v330, %v331
    %v345 = vsel %vm169, %v337, %v330
    %354 = vrot.lane.b32.xlu0 %v300, 32
    %v355 = vpop.permute.xlu0 %354
    %356 = vrot.lane.b32.xlu0 %v303, 32
    %v357 = vpop.permute.xlu0 %356
    %358 = vrot.lane.b32.xlu0 %v308, 32
    %v359 = vpop.permute.xlu0 %358
    %360 = vrot.lane.b32.xlu0 %v311, 32
    %v361 = vpop.permute.xlu0 %360
    %362 = vrot.lane.b32.xlu0 %v316, 32
    %v363 = vpop.permute.xlu0 %362
    %364 = vrot.lane.b32.xlu0 %v319, 32
    %v365 = vpop.permute.xlu0 %364
    %366 = vrot.lane.b32.xlu0 %v324, 32
    %v367 = vpop.permute.xlu0 %366
    %368 = vrot.lane.b32.xlu0 %v327, 32
    %v369 = vpop.permute.xlu0 %368
    %vm378 = vcmask 261120
    %v379 = vsel %vm378, %v345, %v355
    %v380 = vsel %vm378, %v344, %v357
    %v381 = vsel %vm378, %v343, %v359
    %v382 = vsel %vm378, %v342, %v361
    %v383 = vsel %vm378, %v341, %v363
    %v384 = vsel %vm378, %v340, %v365
    %v385 = vsel %vm378, %v339, %v367
    %v386 = vsel %vm378, %v338, %v369
    %v387 = vpack.c.bf16 %v380, %v379
    %v388 = vpack.c.bf16 %v382, %v381
    %v389 = vpack.c.bf16 %v384, %v383
    %v390 = vpack.c.bf16 %v386, %v385
    %v391 = vld [vmem:[%s2] sm:$0xf]
    %v392 = vld [vmem:[%s2 + $0x4] sm:$0xf]
    %v393 = vld [vmem:[%s2 + $0x8] sm:$0xf]
    %v394 = vld [vmem:[%s2 + $0xc] sm:$0xf]
    %v395 = vld [vmem:[%s2 + $0x10] sm:$0xf]
    %v396 = vld [vmem:[%s2 + $0x14] sm:$0xf]
    %v397 = vld [vmem:[%s2 + $0x18] sm:$0xf]
    %v398 = vld [vmem:[%s2 + $0x1c] sm:$0xf]
    %v407 = vunpack.c.l.b16 %v391
    %v408 = vunpack.c.l.b16 %v392
    %v409 = vunpack.c.l.b16 %v393
    %v410 = vunpack.c.l.b16 %v394
    %v411 = vunpack.c.l.b16 %v395
    %v412 = vunpack.c.l.b16 %v396
    %v413 = vunpack.c.l.b16 %v397
    %v414 = vunpack.c.l.b16 %v398
    %v415 = vpack.c.b16 %v408, %v407
    %v416 = vpack.c.b16 %v410, %v409
    %v417 = vpack.c.b16 %v412, %v411
    %v418 = vpack.c.b16 %v414, %v413
    %vm423 = vcmask 523264
    %v425 = vsel %vm423, %v387, 0
    %v428 = vsel %vm423, %v388, 0
    %v431 = vsel %vm423, %v389, 0
    %v434 = vsel %vm423, %v390, 0
    %436 = vmatprep.subr.bf16.mxu0 0
    %437 = vmatpush1.bf16.msra.mxu0 %v415
    %438 = vmatprep.subr.bf16.mxu0 0
    %439 = vmatpush1.bf16.msra.mxu0 %v416
    %440 = vmatprep.subr.bf16.mxu0 0
    %441 = vmatpush1.bf16.msra.mxu0 %v417
    %442 = vmatprep.subr.bf16.mxu0 0
    %443 = vmatpush1.bf16.msra.mxu0 %v418
    %444 = vmatprep.subr.bf16.mxu0 0
    %445 = vmatpush1.bf16.msra.mxu0 0
    %446 = vmatprep.subr.bf16.mxu0 0
    %447 = vmatpush1.bf16.msra.mxu0 0
    %448 = vmatprep.subr.bf16.mxu0 0
    %449 = vmatpush1.bf16.msra.mxu0 0
    %450 = vmatprep.subr.bf16.mxu0 0
    %451 = vmatpush1.bf16.msra.mxu0 0
    %452 = vmatprep.subr.bf16.mxu0 0
    %453 = vmatpush1.bf16.msra.mxu0 0
    %454 = vmatprep.subr.bf16.mxu0 0
    %455 = vmatpush1.bf16.msra.mxu0 0
    %456 = vmatprep.subr.bf16.mxu0 0
    %457 = vmatpush1.bf16.msra.mxu0 0
    %458 = vmatprep.subr.bf16.mxu0 0
    %459 = vmatpush1.bf16.msra.mxu0 0
    %460 = vmatprep.subr.bf16.mxu0 0
    %461 = vmatpush1.bf16.msra.mxu0 0
    %462 = vmatprep.subr.bf16.mxu0 0
    %463 = vmatpush1.bf16.msra.mxu0 0
    %464 = vmatprep.subr.bf16.mxu0 0
    %465 = vmatpush1.bf16.msra.mxu0 0
    %466 = vmatprep.subr.bf16.mxu0 0
    %467 = vmatpush1.bf16.msra.mxu0 0
    %468 = vmatprep.mubr.bf16.mxu0 0
    %469 = vmatmul.mubr.bf16.gmra.mrb[0].mxu0 %v425
    %v470 = vpop.f32.mrb[0].mxu0
    %v471 = vadd.f32 0.0, %v470
    %v472 = vpop.f32.mrb[0].mxu0
    %v473 = vpop.f32.mrb[0].mxu0
    %v474 = vadd.f32 0.0, %v473
    %v475 = vpop.f32.mrb[0].mxu0
    %476 = vmatprep.mubr.bf16.mxu0 0
    %477 = vmatmul.mubr.bf16.gmra.mrb[0].mxu0 %v428
    %v478 = vpop.f32.mrb[0].mxu0
    %v479 = vadd.f32 0.0, %v478
    %v480 = vpop.f32.mrb[0].mxu0
    %v481 = vpop.f32.mrb[0].mxu0
    %v482 = vadd.f32 0.0, %v481
    %v483 = vpop.f32.mrb[0].mxu0
    %484 = vmatprep.mubr.bf16.mxu0 0
    %485 = vmatmul.mubr.bf16.gmra.mrb[0].mxu0 %v431
    %v486 = vpop.f32.mrb[0].mxu0
    %v487 = vadd.f32 0.0, %v486
    %v488 = vpop.f32.mrb[0].mxu0
    %v489 = vpop.f32.mrb[0].mxu0
    %v490 = vadd.f32 0.0, %v489
    %v491 = vpop.f32.mrb[0].mxu0
    %492 = vmatprep.mubr.bf16.mxu0 0
    %493 = vmatmul.mubr.bf16.gmra.mrb[0].mxu0 %v434
    %v494 = vpop.f32.mrb[0].mxu0
    %v495 = vadd.f32 0.0, %v494
    %v496 = vpop.f32.mrb[0].mxu0
    %v497 = vpop.f32.mrb[0].mxu0
    %v498 = vadd.f32 0.0, %v497
    %v499 = vpop.f32.mrb[0].mxu0
    %500 = vdwg.mxu0
    %v501 = vpack.c.bf16 %v474, %v471
    %v502 = vpack.c.bf16 %v482, %v479
    %v503 = vpack.c.bf16 %v490, %v487
    %v504 = vpack.c.bf16 %v498, %v495
    %v505 = vld [vmem:[%s3] sm:$0xf]
    %v506 = vld [vmem:[%s3 + $0x4] sm:$0xf]
    %v507 = vld [vmem:[%s3 + $0x8] sm:$0xf]
    %v508 = vld [vmem:[%s3 + $0xc] sm:$0xf]
    %v509 = vld [vmem:[%s4] sm:$0x1]
    %v511 = vlaneseq
    %v512 = vshrl.u32 %v511, 7
    %v513 = vsub.s32 0, %v512
    %v514 = vrot.slane %v509, %v513
    %v520 = vunpack.c.l.b16 %v505
    %v521 = vunpack.c.l.b16 %v506
    %v522 = vunpack.c.l.b16 %v507
    %v523 = vunpack.c.l.b16 %v508
    %v524 = vpack.c.b16 %v521, %v520
    %v525 = vpack.c.b16 %v523, %v522
    %v529 = vsel %vm378, %v501, 0
    %v532 = vsel %vm378, %v502, 0
    %v535 = vsel %vm378, %v503, 0
    %v538 = vsel %vm378, %v504, 0
    %540 = vmatprep.subr.bf16.mxu0 0
    %541 = vmatpush1.bf16.msra.mxu0 %v524
    %542 = vmatprep.subr.bf16.mxu0 0
    %543 = vmatpush1.bf16.msra.mxu0 %v525
    %544 = vmatprep.subr.bf16.mxu0 0
    %545 = vmatpush1.bf16.msra.mxu0 0
    %546 = vmatprep.subr.bf16.mxu0 0
    %547 = vmatpush1.bf16.msra.mxu0 0
    %548 = vmatprep.subr.bf16.mxu0 0
    %549 = vmatpush1.bf16.msra.mxu0 0
    %550 = vmatprep.subr.bf16.mxu0 0
    %551 = vmatpush1.bf16.msra.mxu0 0
    %552 = vmatprep.subr.bf16.mxu0 0
    %553 = vmatpush1.bf16.msra.mxu0 0
    %554 = vmatprep.subr.bf16.mxu0 0
    %555 = vmatpush1.bf16.msra.mxu0 0
    %556 = vmatprep.subr.bf16.mxu0 0
    %557 = vmatpush1.bf16.msra.mxu0 0
    %558 = vmatprep.subr.bf16.mxu0 0
    %559 = vmatpush1.bf16.msra.mxu0 0
    %560 = vmatprep.subr.bf16.mxu0 0
    %561 = vmatpush1.bf16.msra.mxu0 0
    %562 = vmatprep.subr.bf16.mxu0 0
    %563 = vmatpush1.bf16.msra.mxu0 0
    %564 = vmatprep.subr.bf16.mxu0 0
    %565 = vmatpush1.bf16.msra.mxu0 0
    %566 = vmatprep.subr.bf16.mxu0 0
    %567 = vmatpush1.bf16.msra.mxu0 0
    %568 = vmatprep.subr.bf16.mxu0 0
    %569 = vmatpush1.bf16.msra.mxu0 0
    %570 = vmatprep.subr.bf16.mxu0 0
    %571 = vmatpush1.bf16.msra.mxu0 0
    %572 = vmatprep.mubr.bf16.mxu0 0
    %573 = vmatmul.mubr.bf16.gmra.mrb[0].mxu0 %v529
    %v574 = vpop.f32.mrb[0].mxu0
    %v575 = vadd.f32 %v514, %v574
    %v576 = vpop.f32.mrb[0].mxu0
    %v577 = vpop.f32.mrb[0].mxu0
    %v578 = vadd.f32 %v514, %v577
    %v579 = vpop.f32.mrb[0].mxu0
    %580 = vmatprep.mubr.bf16.mxu0 0
    %581 = vmatmul.mubr.bf16.gmra.mrb[0].mxu0 %v532
    %v582 = vpop.f32.mrb[0].mxu0
    %v583 = vadd.f32 %v514, %v582
    %v584 = vpop.f32.mrb[0].mxu0
    %v585 = vpop.f32.mrb[0].mxu0
    %v586 = vadd.f32 %v514, %v585
    %v587 = vpop.f32.mrb[0].mxu0
    %588 = vmatprep.mubr.bf16.mxu0 0
    %589 = vmatmul.mubr.bf16.gmra.mrb[0].mxu0 %v535
    %v590 = vpop.f32.mrb[0].mxu0
    %v591 = vadd.f32 %v514, %v590
    %v592 = vpop.f32.mrb[0].mxu0
    %v593 = vpop.f32.mrb[0].mxu0
    %v594 = vadd.f32 %v514, %v593
    %v595 = vpop.f32.mrb[0].mxu0
    %596 = vmatprep.mubr.bf16.mxu0 0
    %597 = vmatmul.mubr.bf16.gmra.mrb[0].mxu0 %v538
    %v598 = vpop.f32.mrb[0].mxu0
    %v599 = vadd.f32 %v514, %v598
    %v600 = vpop.f32.mrb[0].mxu0
    %v601 = vpop.f32.mrb[0].mxu0
    %v602 = vadd.f32 %v514, %v601
    %v603 = vpop.f32.mrb[0].mxu0
    %604 = vdwg.mxu0
    %v605 = vtanh.pop %v575
    %v606 = vtanh.pop %v578
    %v607 = vtanh.pop %v583
    %v608 = vtanh.pop %v586
    %v609 = vtanh.pop %v591
    %v610 = vtanh.pop %v594
    %v611 = vtanh.pop %v599
    %v612 = vtanh.pop %v602
    %v613 = vxor.u32 %v575, 2147483648
    %v614 = vxor.u32 %v578, 2147483648
    %v615 = vxor.u32 %v583, 2147483648
    %v616 = vxor.u32 %v586, 2147483648
    %v617 = vxor.u32 %v591, 2147483648
    %v618 = vxor.u32 %v594, 2147483648
    %v619 = vxor.u32 %v599, 2147483648
    %v620 = vxor.u32 %v602, 2147483648
    %v621 = vmul.f32 %v613, 1.442695
    %v622 = vpow.pop %v621
    %v623 = vmul.f32 %v614, 1.442695
    %v624 = vpow.pop %v623
    %v625 = vmul.f32 %v615, 1.442695
    %v626 = vpow.pop %v625
    %v627 = vmul.f32 %v616, 1.442695
    %v628 = vpow.pop %v627
    %v629 = vmul.f32 %v617, 1.442695
    %v630 = vpow.pop %v629
    %v631 = vmul.f32 %v618, 1.442695
    %v632 = vpow.pop %v631
    %v633 = vmul.f32 %v619, 1.442695
    %v634 = vpow.pop %v633
    %v635 = vmul.f32 %v620, 1.442695
    %v636 = vpow.pop %v635
    %v637 = vadd.f32 %v622, 1.0
    %v638 = vadd.f32 %v624, 1.0
    %v639 = vadd.f32 %v626, 1.0
    %v640 = vadd.f32 %v628, 1.0
    %v641 = vadd.f32 %v630, 1.0
    %v642 = vadd.f32 %v632, 1.0
    %v643 = vadd.f32 %v634, 1.0
    %v644 = vadd.f32 %v636, 1.0
    %v645 = vrcp.pop %v637
    %v646 = vmul.f32 1.0, %v645
    %v647 = vrcp.pop %v638
    %v648 = vmul.f32 1.0, %v647
    %v649 = vrcp.pop %v639
    %v650 = vmul.f32 1.0, %v649
    %v651 = vrcp.pop %v640
    %v652 = vmul.f32 1.0, %v651
    %v653 = vrcp.pop %v641
    %v654 = vmul.f32 1.0, %v653
    %v655 = vrcp.pop %v642
    %v656 = vmul.f32 1.0, %v655
    %v657 = vrcp.pop %v643
    %v658 = vmul.f32 1.0, %v657
    %v659 = vrcp.pop %v644
    %v660 = vmul.f32 1.0, %v659
    %669 = vrot.lane.b32.xlu0 %v646, 96
    %v670 = vpop.permute.xlu0 %669
    %671 = vrot.lane.b32.xlu0 %v648, 96
    %v672 = vpop.permute.xlu0 %671
    %673 = vrot.lane.b32.xlu0 %v650, 96
    %v674 = vpop.permute.xlu0 %673
    %675 = vrot.lane.b32.xlu0 %v652, 96
    %v676 = vpop.permute.xlu0 %675
    %677 = vrot.lane.b32.xlu0 %v654, 96
    %v678 = vpop.permute.xlu0 %677
    %679 = vrot.lane.b32.xlu0 %v656, 96
    %v680 = vpop.permute.xlu0 %679
    %681 = vrot.lane.b32.xlu0 %v658, 96
    %v682 = vpop.permute.xlu0 %681
    %683 = vrot.lane.b32.xlu0 %v660, 96
    %v684 = vpop.permute.xlu0 %683
    %v693 = vmul.f32 %v605, %v670
    %v694 = vmul.f32 %v606, %v672
    %v695 = vmul.f32 %v607, %v674
    %v696 = vmul.f32 %v608, %v676
    %v697 = vmul.f32 %v609, %v678
    %v698 = vmul.f32 %v610, %v680
    %v699 = vmul.f32 %v611, %v682
    %v700 = vmul.f32 %v612, %v684
    %v701 = vpack.c.bf16 %v694, %v693
    %v702 = vpack.c.bf16 %v696, %v695
    %v703 = vpack.c.bf16 %v698, %v697
    %v704 = vpack.c.bf16 %v700, %v699
    %v705 = vld [vmem:[%s5] sm:$0xf]
    %v706 = vld [vmem:[%s5 + $0x4] sm:$0xf]
    %v707 = vld [vmem:[%s5 + $0x8] sm:$0xf]
    %v708 = vld [vmem:[%s5 + $0xc] sm:$0xf]
    %v709 = vld [vmem:[%s6] sm:$0x1]
    %v711 = vlaneseq
    %v712 = vshrl.u32 %v711, 7
    %v713 = vsub.s32 0, %v712
    %v714 = vrot.slane %v709, %v713
    %v720 = vunpack.c.l.b16 %v705
    %v721 = vunpack.c.l.b16 %v706
    %v722 = vunpack.c.l.b16 %v707
    %v723 = vunpack.c.l.b16 %v708
    %v724 = vpack.c.b16 %v721, %v720
    %v725 = vpack.c.b16 %v723, %v722
    %v729 = vsel %vm378, %v701, 0
    %v732 = vsel %vm378, %v702, 0
    %v735 = vsel %vm378, %v703, 0
    %v738 = vsel %vm378, %v704, 0
    %740 = vmatprep.subr.bf16.mxu0 0
    %741 = vmatpush1.bf16.msra.mxu0 %v724
    %742 = vmatprep.subr.bf16.mxu0 0
    %743 = vmatpush1.bf16.msra.mxu0 %v725
    %744 = vmatprep.subr.bf16.mxu0 0
    %745 = vmatpush1.bf16.msra.mxu0 0
    %746 = vmatprep.subr.bf16.mxu0 0
    %747 = vmatpush1.bf16.msra.mxu0 0
    %748 = vmatprep.subr.bf16.mxu0 0
    %749 = vmatpush1.bf16.msra.mxu0 0
    %750 = vmatprep.subr.bf16.mxu0 0
    %751 = vmatpush1.bf16.msra.mxu0 0
    %752 = vmatprep.subr.bf16.mxu0 0
    %753 = vmatpush1.bf16.msra.mxu0 0
    %754 = vmatprep.subr.bf16.mxu0 0
    %755 = vmatpush1.bf16.msra.mxu0 0
    %756 = vmatprep.subr.bf16.mxu0 0
    %757 = vmatpush1.bf16.msra.mxu0 0
    %758 = vmatprep.subr.bf16.mxu0 0
    %759 = vmatpush1.bf16.msra.mxu0 0
    %760 = vmatprep.subr.bf16.mxu0 0
    %761 = vmatpush1.bf16.msra.mxu0 0
    %762 = vmatprep.subr.bf16.mxu0 0
    %763 = vmatpush1.bf16.msra.mxu0 0
    %764 = vmatprep.subr.bf16.mxu0 0
    %765 = vmatpush1.bf16.msra.mxu0 0
    %766 = vmatprep.subr.bf16.mxu0 0
    %767 = vmatpush1.bf16.msra.mxu0 0
    %768 = vmatprep.subr.bf16.mxu0 0
    %769 = vmatpush1.bf16.msra.mxu0 0
    %770 = vmatprep.subr.bf16.mxu0 0
    %771 = vmatpush1.bf16.msra.mxu0 0
    %772 = vmatprep.mubr.bf16.mxu0 0
    %773 = vmatmul.mubr.bf16.gmra.mrb[0].mxu0 %v729
    %v774 = vpop.f32.mrb[0].mxu0
    %v775 = vadd.f32 %v714, %v774
    %v776 = vpop.f32.mrb[0].mxu0
    %v777 = vpop.f32.mrb[0].mxu0
    %v778 = vadd.f32 %v714, %v777
    %v779 = vpop.f32.mrb[0].mxu0
    %780 = vmatprep.mubr.bf16.mxu0 0
    %781 = vmatmul.mubr.bf16.gmra.mrb[0].mxu0 %v732
    %v782 = vpop.f32.mrb[0].mxu0
    %v783 = vadd.f32 %v714, %v782
    %v784 = vpop.f32.mrb[0].mxu0
    %v785 = vpop.f32.mrb[0].mxu0
    %v786 = vadd.f32 %v714, %v785
    %v787 = vpop.f32.mrb[0].mxu0
    %788 = vmatprep.mubr.bf16.mxu0 0
    %789 = vmatmul.mubr.bf16.gmra.mrb[0].mxu0 %v735
    %v790 = vpop.f32.mrb[0].mxu0
    %v791 = vadd.f32 %v714, %v790
    %v792 = vpop.f32.mrb[0].mxu0
    %v793 = vpop.f32.mrb[0].mxu0
    %v794 = vadd.f32 %v714, %v793
    %v795 = vpop.f32.mrb[0].mxu0
    %796 = vmatprep.mubr.bf16.mxu0 0
    %797 = vmatmul.mubr.bf16.gmra.mrb[0].mxu0 %v738
    %v798 = vpop.f32.mrb[0].mxu0
    %v799 = vadd.f32 %v714, %v798
    %v800 = vpop.f32.mrb[0].mxu0
    %v801 = vpop.f32.mrb[0].mxu0
    %v802 = vadd.f32 %v714, %v801
    %v803 = vpop.f32.mrb[0].mxu0
    %804 = vdwg.mxu0
    %v805 = vadd.f32 %v775, %v300
    %v806 = vadd.f32 %v778, %v303
    %v807 = vadd.f32 %v783, %v308
    %v808 = vadd.f32 %v786, %v311
    %v809 = vadd.f32 %v791, %v316
    %v810 = vadd.f32 %v794, %v319
    %v811 = vadd.f32 %v799, %v324
    %v812 = vadd.f32 %v802, %v327
    %v813 = vadd.f32 %v775, 0.0
    %v814 = vadd.f32 %v778, 0.0
    %v815 = vadd.f32 %v783, 0.0
    %v816 = vadd.f32 %v786, 0.0
    %v817 = vadd.f32 %v791, 0.0
    %v818 = vadd.f32 %v794, 0.0
    %v819 = vadd.f32 %v799, 0.0
    %v820 = vadd.f32 %v802, 0.0
    %v821 = vrot.slane %v805, 6
    %v822 = vrot.slane %v806, 6
    %v823 = vrot.slane %v807, 6
    %v824 = vrot.slane %v808, 6
    %v825 = vrot.slane %v809, 6
    %v826 = vrot.slane %v810, 6
    %v827 = vrot.slane %v811, 6
    %v828 = vrot.slane %v812, 6
    %vm829 = vcmp.lt.s32.totalorder %v49, 2
    %v830 = vsel %vm829, %v827, %v828
    %v831 = vsel %vm829, %v826, %v827
    %v832 = vsel %vm829, %v825, %v826
    %v833 = vsel %vm829, %v824, %v825
    %v834 = vsel %vm829, %v823, %v824
    %v835 = vsel %vm829, %v822, %v823
    %v836 = vsel %vm829, %v821, %v822
    %v837 = vsel %vm829, %v828, %v821
    %846 = vrot.lane.b32.xlu0 %v805, 32
    %v847 = vpop.permute.xlu0 %846
    %848 = vrot.lane.b32.xlu0 %v806, 32
    %v849 = vpop.permute.xlu0 %848
    %850 = vrot.lane.b32.xlu0 %v807, 32
    %v851 = vpop.permute.xlu0 %850
    %852 = vrot.lane.b32.xlu0 %v808, 32
    %v853 = vpop.permute.xlu0 %852
    %854 = vrot.lane.b32.xlu0 %v809, 32
    %v855 = vpop.permute.xlu0 %854
    %856 = vrot.lane.b32.xlu0 %v810, 32
    %v857 = vpop.permute.xlu0 %856
    %858 = vrot.lane.b32.xlu0 %v811, 32
    %v859 = vpop.permute.xlu0 %858
    %860 = vrot.lane.b32.xlu0 %v812, 32
    %v861 = vpop.permute.xlu0 %860
    %v870 = vsel %vm378, %v837, %v847
    %v871 = vsel %vm378, %v836, %v849
    %v872 = vsel %vm378, %v835, %v851
    %v873 = vsel %vm378, %v834, %v853
    %v874 = vsel %vm378, %v833, %v855
    %v875 = vsel %vm378, %v832, %v857
    %v876 = vsel %vm378, %v831, %v859
    %v877 = vsel %vm378, %v830, %v861
    %v878 = vpack.c.bf16 %v871, %v870
    %v879 = vpack.c.bf16 %v873, %v872
    %v880 = vpack.c.bf16 %v875, %v874
    %v881 = vpack.c.bf16 %v877, %v876
    %s882 = scalar_lea.vmem %s2, 32
    %v883 = vld [vmem:[%s882] sm:$0xf]
    %v884 = vld [vmem:[%s882 + $0x4] sm:$0xf]
    %v885 = vld [vmem:[%s882 + $0x8] sm:$0xf]
    %v886 = vld [vmem:[%s882 + $0xc] sm:$0xf]
    %v887 = vld [vmem:[%s882 + $0x10] sm:$0xf]
    %v888 = vld [vmem:[%s882 + $0x14] sm:$0xf]
    %v889 = vld [vmem:[%s882 + $0x18] sm:$0xf]
    %v890 = vld [vmem:[%s882 + $0x1c] sm:$0xf]
    %v899 = vunpack.c.l.b16 %v883
    %v900 = vunpack.c.l.b16 %v884
    %v901 = vunpack.c.l.b16 %v885
    %v902 = vunpack.c.l.b16 %v886
    %v903 = vunpack.c.l.b16 %v887
    %v904 = vunpack.c.l.b16 %v888
    %v905 = vunpack.c.l.b16 %v889
    %v906 = vunpack.c.l.b16 %v890
    %v907 = vpack.c.b16 %v900, %v899
    %v908 = vpack.c.b16 %v902, %v901
    %v909 = vpack.c.b16 %v904, %v903
    %v910 = vpack.c.b16 %v906, %v905
    %v916 = vsel %vm423, %v878, 0
    %v919 = vsel %vm423, %v879, 0
    %v922 = vsel %vm423, %v880, 0
    %v925 = vsel %vm423, %v881, 0
    %927 = vmatprep.subr.bf16.mxu0 0
    %928 = vmatpush1.bf16.msra.mxu0 %v907
    %929 = vmatprep.subr.bf16.mxu0 0
    %930 = vmatpush1.bf16.msra.mxu0 %v908
    %931 = vmatprep.subr.bf16.mxu0 0
    %932 = vmatpush1.bf16.msra.mxu0 %v909
    %933 = vmatprep.subr.bf16.mxu0 0
    %934 = vmatpush1.bf16.msra.mxu0 %v910
    %935 = vmatprep.subr.bf16.mxu0 0
    %936 = vmatpush1.bf16.msra.mxu0 0
    %937 = vmatprep.subr.bf16.mxu0 0
    %938 = vmatpush1.bf16.msra.mxu0 0
    %939 = vmatprep.subr.bf16.mxu0 0
    %940 = vmatpush1.bf16.msra.mxu0 0
    %941 = vmatprep.subr.bf16.mxu0 0
    %942 = vmatpush1.bf16.msra.mxu0 0
    %943 = vmatprep.subr.bf16.mxu0 0
    %944 = vmatpush1.bf16.msra.mxu0 0
    %945 = vmatprep.subr.bf16.mxu0 0
    %946 = vmatpush1.bf16.msra.mxu0 0
    %947 = vmatprep.subr.bf16.mxu0 0
    %948 = vmatpush1.bf16.msra.mxu0 0
    %949 = vmatprep.subr.bf16.mxu0 0
    %950 = vmatpush1.bf16.msra.mxu0 0
    %951 = vmatprep.subr.bf16.mxu0 0
    %952 = vmatpush1.bf16.msra.mxu0 0
    %953 = vmatprep.subr.bf16.mxu0 0
    %954 = vmatpush1.bf16.msra.mxu0 0
    %955 = vmatprep.subr.bf16.mxu0 0
    %956 = vmatpush1.bf16.msra.mxu0 0
    %957 = vmatprep.subr.bf16.mxu0 0
    %958 = vmatpush1.bf16.msra.mxu0 0
    %959 = vmatprep.mubr.bf16.mxu0 0
    %960 = vmatmul.mubr.bf16.gmra.mrb[0].mxu0 %v916
    %v961 = vpop.f32.mrb[0].mxu0
    %v962 = vadd.f32 0.0, %v961
    %v963 = vpop.f32.mrb[0].mxu0
    %v964 = vpop.f32.mrb[0].mxu0
    %v965 = vadd.f32 0.0, %v964
    %v966 = vpop.f32.mrb[0].mxu0
    %967 = vmatprep.mubr.bf16.mxu0 0
    %968 = vmatmul.mubr.bf16.gmra.mrb[0].mxu0 %v919
    %v969 = vpop.f32.mrb[0].mxu0
    %v970 = vadd.f32 0.0, %v969
    %v971 = vpop.f32.mrb[0].mxu0
    %v972 = vpop.f32.mrb[0].mxu0
    %v973 = vadd.f32 0.0, %v972
    %v974 = vpop.f32.mrb[0].mxu0
    %975 = vmatprep.mubr.bf16.mxu0 0
    %976 = vmatmul.mubr.bf16.gmra.mrb[0].mxu0 %v922
    %v977 = vpop.f32.mrb[0].mxu0
    %v978 = vadd.f32 0.0, %v977
    %v979 = vpop.f32.mrb[0].mxu0
    %v980 = vpop.f32.mrb[0].mxu0
    %v981 = vadd.f32 0.0, %v980
    %v982 = vpop.f32.mrb[0].mxu0
    %983 = vmatprep.mubr.bf16.mxu0 0
    %984 = vmatmul.mubr.bf16.gmra.mrb[0].mxu0 %v925
    %v985 = vpop.f32.mrb[0].mxu0
    %v986 = vadd.f32 0.0, %v985
    %v987 = vpop.f32.mrb[0].mxu0
    %v988 = vpop.f32.mrb[0].mxu0
    %v989 = vadd.f32 0.0, %v988
    %v990 = vpop.f32.mrb[0].mxu0
    %991 = vdwg.mxu0
    %v992 = vpack.c.bf16 %v965, %v962
    %v993 = vpack.c.bf16 %v973, %v970
    %v994 = vpack.c.bf16 %v981, %v978
    %v995 = vpack.c.bf16 %v989, %v986
    %s996 = scalar_lea.vmem %s3, 16
    %v997 = vld [vmem:[%s996] sm:$0xf]
    %v998 = vld [vmem:[%s996 + $0x4] sm:$0xf]
    %v999 = vld [vmem:[%s996 + $0x8] sm:$0xf]
    %v1000 = vld [vmem:[%s996 + $0xc] sm:$0xf]
    %s1001 = scalar_lea.vmem %s4, 1
    %v1002 = vld [vmem:[%s1001] sm:$0x1]
    %v1004 = vlaneseq
    %v1005 = vshrl.u32 %v1004, 7
    %v1006 = vsub.s32 0, %v1005
    %v1007 = vrot.slane %v1002, %v1006
    %v1013 = vunpack.c.l.b16 %v997
    %v1014 = vunpack.c.l.b16 %v998
    %v1015 = vunpack.c.l.b16 %v999
    %v1016 = vunpack.c.l.b16 %v1000
    %v1017 = vpack.c.b16 %v1014, %v1013
    %v1018 = vpack.c.b16 %v1016, %v1015
    %v1022 = vsel %vm378, %v992, 0
    %v1025 = vsel %vm378, %v993, 0
    %v1028 = vsel %vm378, %v994, 0
    %v1031 = vsel %vm378, %v995, 0
    %1033 = vmatprep.subr.bf16.mxu0 0
    %1034 = vmatpush1.bf16.msra.mxu0 %v1017
    %1035 = vmatprep.subr.bf16.mxu0 0
    %1036 = vmatpush1.bf16.msra.mxu0 %v1018
    %1037 = vmatprep.subr.bf16.mxu0 0
    %1038 = vmatpush1.bf16.msra.mxu0 0
    %1039 = vmatprep.subr.bf16.mxu0 0
    %1040 = vmatpush1.bf16.msra.mxu0 0
    %1041 = vmatprep.subr.bf16.mxu0 0
    %1042 = vmatpush1.bf16.msra.mxu0 0
    %1043 = vmatprep.subr.bf16.mxu0 0
    %1044 = vmatpush1.bf16.msra.mxu0 0
    %1045 = vmatprep.subr.bf16.mxu0 0
    %1046 = vmatpush1.bf16.msra.mxu0 0
    %1047 = vmatprep.subr.bf16.mxu0 0
    %1048 = vmatpush1.bf16.msra.mxu0 0
    %1049 = vmatprep.subr.bf16.mxu0 0
    %1050 = vmatpush1.bf16.msra.mxu0 0
    %1051 = vmatprep.subr.bf16.mxu0 0
    %1052 = vmatpush1.bf16.msra.mxu0 0
    %1053 = vmatprep.subr.bf16.mxu0 0
    %1054 = vmatpush1.bf16.msra.mxu0 0
    %1055 = vmatprep.subr.bf16.mxu0 0
    %1056 = vmatpush1.bf16.msra.mxu0 0
    %1057 = vmatprep.subr.bf16.mxu0 0
    %1058 = vmatpush1.bf16.msra.mxu0 0
    %1059 = vmatprep.subr.bf16.mxu0 0
    %1060 = vmatpush1.bf16.msra.mxu0 0
    %1061 = vmatprep.subr.bf16.mxu0 0
    %1062 = vmatpush1.bf16.msra.mxu0 0
    %1063 = vmatprep.subr.bf16.mxu0 0
    %1064 = vmatpush1.bf16.msra.mxu0 0
    %1065 = vmatprep.mubr.bf16.mxu0 0
    %1066 = vmatmul.mubr.bf16.gmra.mrb[0].mxu0 %v1022
    %v1067 = vpop.f32.mrb[0].mxu0
    %v1068 = vadd.f32 %v1007, %v1067
    %v1069 = vpop.f32.mrb[0].mxu0
    %v1070 = vpop.f32.mrb[0].mxu0
    %v1071 = vadd.f32 %v1007, %v1070
    %v1072 = vpop.f32.mrb[0].mxu0
    %1073 = vmatprep.mubr.bf16.mxu0 0
    %1074 = vmatmul.mubr.bf16.gmra.mrb[0].mxu0 %v1025
    %v1075 = vpop.f32.mrb[0].mxu0
    %v1076 = vadd.f32 %v1007, %v1075
    %v1077 = vpop.f32.mrb[0].mxu0
    %v1078 = vpop.f32.mrb[0].mxu0
    %v1079 = vadd.f32 %v1007, %v1078
    %v1080 = vpop.f32.mrb[0].mxu0
    %1081 = vmatprep.mubr.bf16.mxu0 0
    %1082 = vmatmul.mubr.bf16.gmra.mrb[0].mxu0 %v1028
    %v1083 = vpop.f32.mrb[0].mxu0
    %v1084 = vadd.f32 %v1007, %v1083
    %v1085 = vpop.f32.mrb[0].mxu0
    %v1086 = vpop.f32.mrb[0].mxu0
    %v1087 = vadd.f32 %v1007, %v1086
    %v1088 = vpop.f32.mrb[0].mxu0
    %1089 = vmatprep.mubr.bf16.mxu0 0
    %1090 = vmatmul.mubr.bf16.gmra.mrb[0].mxu0 %v1031
    %v1091 = vpop.f32.mrb[0].mxu0
    %v1092 = vadd.f32 %v1007, %v1091
    %v1093 = vpop.f32.mrb[0].mxu0
    %v1094 = vpop.f32.mrb[0].mxu0
    %v1095 = vadd.f32 %v1007, %v1094
    %v1096 = vpop.f32.mrb[0].mxu0
    %1097 = vdwg.mxu0
    %v1098 = vtanh.pop %v1068
    %v1099 = vtanh.pop %v1071
    %v1100 = vtanh.pop %v1076
    %v1101 = vtanh.pop %v1079
    %v1102 = vtanh.pop %v1084
    %v1103 = vtanh.pop %v1087
    %v1104 = vtanh.pop %v1092
    %v1105 = vtanh.pop %v1095
    %v1106 = vxor.u32 %v1068, 2147483648
    %v1107 = vxor.u32 %v1071, 2147483648
    %v1108 = vxor.u32 %v1076, 2147483648
    %v1109 = vxor.u32 %v1079, 2147483648
    %v1110 = vxor.u32 %v1084, 2147483648
    %v1111 = vxor.u32 %v1087, 2147483648
    %v1112 = vxor.u32 %v1092, 2147483648
    %v1113 = vxor.u32 %v1095, 2147483648
    %v1114 = vmul.f32 %v1106, 1.442695
    %v1115 = vpow.pop %v1114
    %v1116 = vmul.f32 %v1107, 1.442695
    %v1117 = vpow.pop %v1116
    %v1118 = vmul.f32 %v1108, 1.442695
    %v1119 = vpow.pop %v1118
    %v1120 = vmul.f32 %v1109, 1.442695
    %v1121 = vpow.pop %v1120
    %v1122 = vmul.f32 %v1110, 1.442695
    %v1123 = vpow.pop %v1122
    %v1124 = vmul.f32 %v1111, 1.442695
    %v1125 = vpow.pop %v1124
    %v1126 = vmul.f32 %v1112, 1.442695
    %v1127 = vpow.pop %v1126
    %v1128 = vmul.f32 %v1113, 1.442695
    %v1129 = vpow.pop %v1128
    %v1130 = vadd.f32 %v1115, 1.0
    %v1131 = vadd.f32 %v1117, 1.0
    %v1132 = vadd.f32 %v1119, 1.0
    %v1133 = vadd.f32 %v1121, 1.0
    %v1134 = vadd.f32 %v1123, 1.0
    %v1135 = vadd.f32 %v1125, 1.0
    %v1136 = vadd.f32 %v1127, 1.0
    %v1137 = vadd.f32 %v1129, 1.0
    %v1138 = vrcp.pop %v1130
    %v1139 = vmul.f32 1.0, %v1138
    %v1140 = vrcp.pop %v1131
    %v1141 = vmul.f32 1.0, %v1140
    %v1142 = vrcp.pop %v1132
    %v1143 = vmul.f32 1.0, %v1142
    %v1144 = vrcp.pop %v1133
    %v1145 = vmul.f32 1.0, %v1144
    %v1146 = vrcp.pop %v1134
    %v1147 = vmul.f32 1.0, %v1146
    %v1148 = vrcp.pop %v1135
    %v1149 = vmul.f32 1.0, %v1148
    %v1150 = vrcp.pop %v1136
    %v1151 = vmul.f32 1.0, %v1150
    %v1152 = vrcp.pop %v1137
    %v1153 = vmul.f32 1.0, %v1152
    %1162 = vrot.lane.b32.xlu0 %v1139, 96
    %v1163 = vpop.permute.xlu0 %1162
    %1164 = vrot.lane.b32.xlu0 %v1141, 96
    %v1165 = vpop.permute.xlu0 %1164
    %1166 = vrot.lane.b32.xlu0 %v1143, 96
    %v1167 = vpop.permute.xlu0 %1166
    %1168 = vrot.lane.b32.xlu0 %v1145, 96
    %v1169 = vpop.permute.xlu0 %1168
    %1170 = vrot.lane.b32.xlu0 %v1147, 96
    %v1171 = vpop.permute.xlu0 %1170
    %1172 = vrot.lane.b32.xlu0 %v1149, 96
    %v1173 = vpop.permute.xlu0 %1172
    %1174 = vrot.lane.b32.xlu0 %v1151, 96
    %v1175 = vpop.permute.xlu0 %1174
    %1176 = vrot.lane.b32.xlu0 %v1153, 96
    %v1177 = vpop.permute.xlu0 %1176
    %v1186 = vmul.f32 %v1098, %v1163
    %v1187 = vmul.f32 %v1099, %v1165
    %v1188 = vmul.f32 %v1100, %v1167
    %v1189 = vmul.f32 %v1101, %v1169
    %v1190 = vmul.f32 %v1102, %v1171
    %v1191 = vmul.f32 %v1103, %v1173
    %v1192 = vmul.f32 %v1104, %v1175
    %v1193 = vmul.f32 %v1105, %v1177
    %v1194 = vpack.c.bf16 %v1187, %v1186
    %v1195 = vpack.c.bf16 %v1189, %v1188
    %v1196 = vpack.c.bf16 %v1191, %v1190
    %v1197 = vpack.c.bf16 %v1193, %v1192
    %s1198 = scalar_lea.vmem %s5, 16
    %v1199 = vld [vmem:[%s1198] sm:$0xf]
    %v1200 = vld [vmem:[%s1198 + $0x4] sm:$0xf]
    %v1201 = vld [vmem:[%s1198 + $0x8] sm:$0xf]
    %v1202 = vld [vmem:[%s1198 + $0xc] sm:$0xf]
    %s1203 = scalar_lea.vmem %s6, 1
    %v1204 = vld [vmem:[%s1203] sm:$0x1]
    %v1206 = vlaneseq
    %v1207 = vshrl.u32 %v1206, 7
    %v1208 = vsub.s32 0, %v1207
    %v1209 = vrot.slane %v1204, %v1208
    %v1215 = vunpack.c.l.b16 %v1199
    %v1216 = vunpack.c.l.b16 %v1200
    %v1217 = vunpack.c.l.b16 %v1201
    %v1218 = vunpack.c.l.b16 %v1202
    %v1219 = vpack.c.b16 %v1216, %v1215
    %v1220 = vpack.c.b16 %v1218, %v1217
    %v1224 = vsel %vm378, %v1194, 0
    %v1227 = vsel %vm378, %v1195, 0
    %v1230 = vsel %vm378, %v1196, 0
    %v1233 = vsel %vm378, %v1197, 0
    %1235 = vmatprep.subr.bf16.mxu0 0
    %1236 = vmatpush1.bf16.msra.mxu0 %v1219
    %1237 = vmatprep.subr.bf16.mxu0 0
    %1238 = vmatpush1.bf16.msra.mxu0 %v1220
    %1239 = vmatprep.subr.bf16.mxu0 0
    %1240 = vmatpush1.bf16.msra.mxu0 0
    %1241 = vmatprep.subr.bf16.mxu0 0
    %1242 = vmatpush1.bf16.msra.mxu0 0
    %1243 = vmatprep.subr.bf16.mxu0 0
    %1244 = vmatpush1.bf16.msra.mxu0 0
    %1245 = vmatprep.subr.bf16.mxu0 0
    %1246 = vmatpush1.bf16.msra.mxu0 0
    %1247 = vmatprep.subr.bf16.mxu0 0
    %1248 = vmatpush1.bf16.msra.mxu0 0
    %1249 = vmatprep.subr.bf16.mxu0 0
    %1250 = vmatpush1.bf16.msra.mxu0 0
    %1251 = vmatprep.subr.bf16.mxu0 0
    %1252 = vmatpush1.bf16.msra.mxu0 0
    %1253 = vmatprep.subr.bf16.mxu0 0
    %1254 = vmatpush1.bf16.msra.mxu0 0
    %1255 = vmatprep.subr.bf16.mxu0 0
    %1256 = vmatpush1.bf16.msra.mxu0 0
    %1257 = vmatprep.subr.bf16.mxu0 0
    %1258 = vmatpush1.bf16.msra.mxu0 0
    %1259 = vmatprep.subr.bf16.mxu0 0
    %1260 = vmatpush1.bf16.msra.mxu0 0
    %1261 = vmatprep.subr.bf16.mxu0 0
    %1262 = vmatpush1.bf16.msra.mxu0 0
    %1263 = vmatprep.subr.bf16.mxu0 0
    %1264 = vmatpush1.bf16.msra.mxu0 0
    %1265 = vmatprep.subr.bf16.mxu0 0
    %1266 = vmatpush1.bf16.msra.mxu0 0
    %1267 = vmatprep.mubr.bf16.mxu0 0
    %1268 = vmatmul.mubr.bf16.gmra.mrb[0].mxu0 %v1224
    %v1269 = vpop.f32.mrb[0].mxu0
    %v1270 = vadd.f32 %v1209, %v1269
    %v1271 = vpop.f32.mrb[0].mxu0
    %v1272 = vpop.f32.mrb[0].mxu0
    %v1273 = vadd.f32 %v1209, %v1272
    %v1274 = vpop.f32.mrb[0].mxu0
    %1275 = vmatprep.mubr.bf16.mxu0 0
    %1276 = vmatmul.mubr.bf16.gmra.mrb[0].mxu0 %v1227
    %v1277 = vpop.f32.mrb[0].mxu0
    %v1278 = vadd.f32 %v1209, %v1277
    %v1279 = vpop.f32.mrb[0].mxu0
    %v1280 = vpop.f32.mrb[0].mxu0
    %v1281 = vadd.f32 %v1209, %v1280
    %v1282 = vpop.f32.mrb[0].mxu0
    %1283 = vmatprep.mubr.bf16.mxu0 0
    %1284 = vmatmul.mubr.bf16.gmra.mrb[0].mxu0 %v1230
    %v1285 = vpop.f32.mrb[0].mxu0
    %v1286 = vadd.f32 %v1209, %v1285
    %v1287 = vpop.f32.mrb[0].mxu0
    %v1288 = vpop.f32.mrb[0].mxu0
    %v1289 = vadd.f32 %v1209, %v1288
    %v1290 = vpop.f32.mrb[0].mxu0
    %1291 = vmatprep.mubr.bf16.mxu0 0
    %1292 = vmatmul.mubr.bf16.gmra.mrb[0].mxu0 %v1233
    %v1293 = vpop.f32.mrb[0].mxu0
    %v1294 = vadd.f32 %v1209, %v1293
    %v1295 = vpop.f32.mrb[0].mxu0
    %v1296 = vpop.f32.mrb[0].mxu0
    %v1297 = vadd.f32 %v1209, %v1296
    %v1298 = vpop.f32.mrb[0].mxu0
    %1299 = vdwg.mxu0
    %v1300 = vadd.f32 %v1270, %v805
    %v1301 = vadd.f32 %v1273, %v806
    %v1302 = vadd.f32 %v1278, %v807
    %v1303 = vadd.f32 %v1281, %v808
    %v1304 = vadd.f32 %v1286, %v809
    %v1305 = vadd.f32 %v1289, %v810
    %v1306 = vadd.f32 %v1294, %v811
    %v1307 = vadd.f32 %v1297, %v812
    %v1308 = vadd.f32 %v813, %v1270
    %v1309 = vadd.f32 %v814, %v1273
    %v1310 = vadd.f32 %v815, %v1278
    %v1311 = vadd.f32 %v816, %v1281
    %v1312 = vadd.f32 %v817, %v1286
    %v1313 = vadd.f32 %v818, %v1289
    %v1314 = vadd.f32 %v819, %v1294
    %v1315 = vadd.f32 %v820, %v1297
    %v1316 = vrot.slane %v1300, 4
    %v1317 = vrot.slane %v1301, 4
    %v1318 = vrot.slane %v1302, 4
    %v1319 = vrot.slane %v1303, 4
    %v1320 = vrot.slane %v1304, 4
    %v1321 = vrot.slane %v1305, 4
    %v1322 = vrot.slane %v1306, 4
    %v1323 = vrot.slane %v1307, 4
    %vm1324 = vcmp.lt.s32.totalorder %v49, 4
    %v1325 = vsel %vm1324, %v1322, %v1323
    %v1326 = vsel %vm1324, %v1321, %v1322
    %v1327 = vsel %vm1324, %v1320, %v1321
    %v1328 = vsel %vm1324, %v1319, %v1320
    %v1329 = vsel %vm1324, %v1318, %v1319
    %v1330 = vsel %vm1324, %v1317, %v1318
    %v1331 = vsel %vm1324, %v1316, %v1317
    %v1332 = vsel %vm1324, %v1323, %v1316
    %1341 = vrot.lane.b32.xlu0 %v1300, 32
    %v1342 = vpop.permute.xlu0 %1341
    %1343 = vrot.lane.b32.xlu0 %v1301, 32
    %v1344 = vpop.permute.xlu0 %1343
    %1345 = vrot.lane.b32.xlu0 %v1302, 32
    %v1346 = vpop.permute.xlu0 %1345
    %1347 = vrot.lane.b32.xlu0 %v1303, 32
    %v1348 = vpop.permute.xlu0 %1347
    %1349 = vrot.lane.b32.xlu0 %v1304, 32
    %v1350 = vpop.permute.xlu0 %1349
    %1351 = vrot.lane.b32.xlu0 %v1305, 32
    %v1352 = vpop.permute.xlu0 %1351
    %1353 = vrot.lane.b32.xlu0 %v1306, 32
    %v1354 = vpop.permute.xlu0 %1353
    %1355 = vrot.lane.b32.xlu0 %v1307, 32
    %v1356 = vpop.permute.xlu0 %1355
    %v1365 = vsel %vm378, %v1332, %v1342
    %v1366 = vsel %vm378, %v1331, %v1344
    %v1367 = vsel %vm378, %v1330, %v1346
    %v1368 = vsel %vm378, %v1329, %v1348
    %v1369 = vsel %vm378, %v1328, %v1350
    %v1370 = vsel %vm378, %v1327, %v1352
    %v1371 = vsel %vm378, %v1326, %v1354
    %v1372 = vsel %vm378, %v1325, %v1356
    %v1373 = vpack.c.bf16 %v1366, %v1365
    %v1374 = vpack.c.bf16 %v1368, %v1367
    %v1375 = vpack.c.bf16 %v1370, %v1369
    %v1376 = vpack.c.bf16 %v1372, %v1371
    %s1377 = scalar_lea.vmem %s2, 64
    %v1378 = vld [vmem:[%s1377] sm:$0xf]
    %v1379 = vld [vmem:[%s1377 + $0x4] sm:$0xf]
    %v1380 = vld [vmem:[%s1377 + $0x8] sm:$0xf]
    %v1381 = vld [vmem:[%s1377 + $0xc] sm:$0xf]
    %v1382 = vld [vmem:[%s1377 + $0x10] sm:$0xf]
    %v1383 = vld [vmem:[%s1377 + $0x14] sm:$0xf]
    %v1384 = vld [vmem:[%s1377 + $0x18] sm:$0xf]
    %v1385 = vld [vmem:[%s1377 + $0x1c] sm:$0xf]
    %v1394 = vunpack.c.l.b16 %v1378
    %v1395 = vunpack.c.l.b16 %v1379
    %v1396 = vunpack.c.l.b16 %v1380
    %v1397 = vunpack.c.l.b16 %v1381
    %v1398 = vunpack.c.l.b16 %v1382
    %v1399 = vunpack.c.l.b16 %v1383
    %v1400 = vunpack.c.l.b16 %v1384
    %v1401 = vunpack.c.l.b16 %v1385
    %v1402 = vpack.c.b16 %v1395, %v1394
    %v1403 = vpack.c.b16 %v1397, %v1396
    %v1404 = vpack.c.b16 %v1399, %v1398
    %v1405 = vpack.c.b16 %v1401, %v1400
    %v1411 = vsel %vm423, %v1373, 0
    %v1414 = vsel %vm423, %v1374, 0
    %v1417 = vsel %vm423, %v1375, 0
    %v1420 = vsel %vm423, %v1376, 0
    %1422 = vmatprep.subr.bf16.mxu0 0
    %1423 = vmatpush1.bf16.msra.mxu0 %v1402
    %1424 = vmatprep.subr.bf16.mxu0 0
    %1425 = vmatpush1.bf16.msra.mxu0 %v1403
    %1426 = vmatprep.subr.bf16.mxu0 0
    %1427 = vmatpush1.bf16.msra.mxu0 %v1404
    %1428 = vmatprep.subr.bf16.mxu0 0
    %1429 = vmatpush1.bf16.msra.mxu0 %v1405
    %1430 = vmatprep.subr.bf16.mxu0 0
    %1431 = vmatpush1.bf16.msra.mxu0 0
    %1432 = vmatprep.subr.bf16.mxu0 0
    %1433 = vmatpush1.bf16.msra.mxu0 0
    %1434 = vmatprep.subr.bf16.mxu0 0
    %1435 = vmatpush1.bf16.msra.mxu0 0
    %1436 = vmatprep.subr.bf16.mxu0 0
    %1437 = vmatpush1.bf16.msra.mxu0 0
    %1438 = vmatprep.subr.bf16.mxu0 0
    %1439 = vmatpush1.bf16.msra.mxu0 0
    %1440 = vmatprep.subr.bf16.mxu0 0
    %1441 = vmatpush1.bf16.msra.mxu0 0
    %1442 = vmatprep.subr.bf16.mxu0 0
    %1443 = vmatpush1.bf16.msra.mxu0 0
    %1444 = vmatprep.subr.bf16.mxu0 0
    %1445 = vmatpush1.bf16.msra.mxu0 0
    %1446 = vmatprep.subr.bf16.mxu0 0
    %1447 = vmatpush1.bf16.msra.mxu0 0
    %1448 = vmatprep.subr.bf16.mxu0 0
    %1449 = vmatpush1.bf16.msra.mxu0 0
    %1450 = vmatprep.subr.bf16.mxu0 0
    %1451 = vmatpush1.bf16.msra.mxu0 0
    %1452 = vmatprep.subr.bf16.mxu0 0
    %1453 = vmatpush1.bf16.msra.mxu0 0
    %1454 = vmatprep.mubr.bf16.mxu0 0
    %1455 = vmatmul.mubr.bf16.gmra.mrb[0].mxu0 %v1411
    %v1456 = vpop.f32.mrb[0].mxu0
    %v1457 = vadd.f32 0.0, %v1456
    %v1458 = vpop.f32.mrb[0].mxu0
    %v1459 = vpop.f32.mrb[0].mxu0
    %v1460 = vadd.f32 0.0, %v1459
    %v1461 = vpop.f32.mrb[0].mxu0
    %1462 = vmatprep.mubr.bf16.mxu0 0
    %1463 = vmatmul.mubr.bf16.gmra.mrb[0].mxu0 %v1414
    %v1464 = vpop.f32.mrb[0].mxu0
    %v1465 = vadd.f32 0.0, %v1464
    %v1466 = vpop.f32.mrb[0].mxu0
    %v1467 = vpop.f32.mrb[0].mxu0
    %v1468 = vadd.f32 0.0, %v1467
    %v1469 = vpop.f32.mrb[0].mxu0
    %1470 = vmatprep.mubr.bf16.mxu0 0
    %1471 = vmatmul.mubr.bf16.gmra.mrb[0].mxu0 %v1417
    %v1472 = vpop.f32.mrb[0].mxu0
    %v1473 = vadd.f32 0.0, %v1472
    %v1474 = vpop.f32.mrb[0].mxu0
    %v1475 = vpop.f32.mrb[0].mxu0
    %v1476 = vadd.f32 0.0, %v1475
    %v1477 = vpop.f32.mrb[0].mxu0
    %1478 = vmatprep.mubr.bf16.mxu0 0
    %1479 = vmatmul.mubr.bf16.gmra.mrb[0].mxu0 %v1420
    %v1480 = vpop.f32.mrb[0].mxu0
    %v1481 = vadd.f32 0.0, %v1480
    %v1482 = vpop.f32.mrb[0].mxu0
    %v1483 = vpop.f32.mrb[0].mxu0
    %v1484 = vadd.f32 0.0, %v1483
    %v1485 = vpop.f32.mrb[0].mxu0
    %1486 = vdwg.mxu0
    %v1487 = vpack.c.bf16 %v1460, %v1457
    %v1488 = vpack.c.bf16 %v1468, %v1465
    %v1489 = vpack.c.bf16 %v1476, %v1473
    %v1490 = vpack.c.bf16 %v1484, %v1481
    %s1491 = scalar_lea.vmem %s3, 32
    %v1492 = vld [vmem:[%s1491] sm:$0xf]
    %v1493 = vld [vmem:[%s1491 + $0x4] sm:$0xf]
    %v1494 = vld [vmem:[%s1491 + $0x8] sm:$0xf]
    %v1495 = vld [vmem:[%s1491 + $0xc] sm:$0xf]
    %s1496 = scalar_lea.vmem %s4, 2
    %v1497 = vld [vmem:[%s1496] sm:$0x1]
    %v1499 = vlaneseq
    %v1500 = vshrl.u32 %v1499, 7
    %v1501 = vsub.s32 0, %v1500
    %v1502 = vrot.slane %v1497, %v1501
    %v1508 = vunpack.c.l.b16 %v1492
    %v1509 = vunpack.c.l.b16 %v1493
    %v1510 = vunpack.c.l.b16 %v1494
    %v1511 = vunpack.c.l.b16 %v1495
    %v1512 = vpack.c.b16 %v1509, %v1508
    %v1513 = vpack.c.b16 %v1511, %v1510
    %v1517 = vsel %vm378, %v1487, 0
    %v1520 = vsel %vm378, %v1488, 0
    %v1523 = vsel %vm378, %v1489, 0
    %v1526 = vsel %vm378, %v1490, 0
    %1528 = vmatprep.subr.bf16.mxu0 0
    %1529 = vmatpush1.bf16.msra.mxu0 %v1512
    %1530 = vmatprep.subr.bf16.mxu0 0
    %1531 = vmatpush1.bf16.msra.mxu0 %v1513
    %1532 = vmatprep.subr.bf16.mxu0 0
    %1533 = vmatpush1.bf16.msra.mxu0 0
    %1534 = vmatprep.subr.bf16.mxu0 0
    %1535 = vmatpush1.bf16.msra.mxu0 0
    %1536 = vmatprep.subr.bf16.mxu0 0
    %1537 = vmatpush1.bf16.msra.mxu0 0
    %1538 = vmatprep.subr.bf16.mxu0 0
    %1539 = vmatpush1.bf16.msra.mxu0 0
    %1540 = vmatprep.subr.bf16.mxu0 0
    %1541 = vmatpush1.bf16.msra.mxu0 0
    %1542 = vmatprep.subr.bf16.mxu0 0
    %1543 = vmatpush1.bf16.msra.mxu0 0
    %1544 = vmatprep.subr.bf16.mxu0 0
    %1545 = vmatpush1.bf16.msra.mxu0 0
    %1546 = vmatprep.subr.bf16.mxu0 0
    %1547 = vmatpush1.bf16.msra.mxu0 0
    %1548 = vmatprep.subr.bf16.mxu0 0
    %1549 = vmatpush1.bf16.msra.mxu0 0
    %1550 = vmatprep.subr.bf16.mxu0 0
    %1551 = vmatpush1.bf16.msra.mxu0 0
    %1552 = vmatprep.subr.bf16.mxu0 0
    %1553 = vmatpush1.bf16.msra.mxu0 0
    %1554 = vmatprep.subr.bf16.mxu0 0
    %1555 = vmatpush1.bf16.msra.mxu0 0
    %1556 = vmatprep.subr.bf16.mxu0 0
    %1557 = vmatpush1.bf16.msra.mxu0 0
    %1558 = vmatprep.subr.bf16.mxu0 0
    %1559 = vmatpush1.bf16.msra.mxu0 0
    %1560 = vmatprep.mubr.bf16.mxu0 0
    %1561 = vmatmul.mubr.bf16.gmra.mrb[0].mxu0 %v1517
    %v1562 = vpop.f32.mrb[0].mxu0
    %v1563 = vadd.f32 %v1502, %v1562
    %v1564 = vpop.f32.mrb[0].mxu0
    %v1565 = vpop.f32.mrb[0].mxu0
    %v1566 = vadd.f32 %v1502, %v1565
    %v1567 = vpop.f32.mrb[0].mxu0
    %1568 = vmatprep.mubr.bf16.mxu0 0
    %1569 = vmatmul.mubr.bf16.gmra.mrb[0].mxu0 %v1520
    %v1570 = vpop.f32.mrb[0].mxu0
    %v1571 = vadd.f32 %v1502, %v1570
    %v1572 = vpop.f32.mrb[0].mxu0
    %v1573 = vpop.f32.mrb[0].mxu0
    %v1574 = vadd.f32 %v1502, %v1573
    %v1575 = vpop.f32.mrb[0].mxu0
    %1576 = vmatprep.mubr.bf16.mxu0 0
    %1577 = vmatmul.mubr.bf16.gmra.mrb[0].mxu0 %v1523
    %v1578 = vpop.f32.mrb[0].mxu0
    %v1579 = vadd.f32 %v1502, %v1578
    %v1580 = vpop.f32.mrb[0].mxu0
    %v1581 = vpop.f32.mrb[0].mxu0
    %v1582 = vadd.f32 %v1502, %v1581
    %v1583 = vpop.f32.mrb[0].mxu0
    %1584 = vmatprep.mubr.bf16.mxu0 0
    %1585 = vmatmul.mubr.bf16.gmra.mrb[0].mxu0 %v1526
    %v1586 = vpop.f32.mrb[0].mxu0
    %v1587 = vadd.f32 %v1502, %v1586
    %v1588 = vpop.f32.mrb[0].mxu0
    %v1589 = vpop.f32.mrb[0].mxu0
    %v1590 = vadd.f32 %v1502, %v1589
    %v1591 = vpop.f32.mrb[0].mxu0
    %1592 = vdwg.mxu0
    %v1593 = vtanh.pop %v1563
    %v1594 = vtanh.pop %v1566
    %v1595 = vtanh.pop %v1571
    %v1596 = vtanh.pop %v1574
    %v1597 = vtanh.pop %v1579
    %v1598 = vtanh.pop %v1582
    %v1599 = vtanh.pop %v1587
    %v1600 = vtanh.pop %v1590
    %v1601 = vxor.u32 %v1563, 2147483648
    %v1602 = vxor.u32 %v1566, 2147483648
    %v1603 = vxor.u32 %v1571, 2147483648
    %v1604 = vxor.u32 %v1574, 2147483648
    %v1605 = vxor.u32 %v1579, 2147483648
    %v1606 = vxor.u32 %v1582, 2147483648
    %v1607 = vxor.u32 %v1587, 2147483648
    %v1608 = vxor.u32 %v1590, 2147483648
    %v1609 = vmul.f32 %v1601, 1.442695
    %v1610 = vpow.pop %v1609
    %v1611 = vmul.f32 %v1602, 1.442695
    %v1612 = vpow.pop %v1611
    %v1613 = vmul.f32 %v1603, 1.442695
    %v1614 = vpow.pop %v1613
    %v1615 = vmul.f32 %v1604, 1.442695
    %v1616 = vpow.pop %v1615
    %v1617 = vmul.f32 %v1605, 1.442695
    %v1618 = vpow.pop %v1617
    %v1619 = vmul.f32 %v1606, 1.442695
    %v1620 = vpow.pop %v1619
    %v1621 = vmul.f32 %v1607, 1.442695
    %v1622 = vpow.pop %v1621
    %v1623 = vmul.f32 %v1608, 1.442695
    %v1624 = vpow.pop %v1623
    %v1625 = vadd.f32 %v1610, 1.0
    %v1626 = vadd.f32 %v1612, 1.0
    %v1627 = vadd.f32 %v1614, 1.0
    %v1628 = vadd.f32 %v1616, 1.0
    %v1629 = vadd.f32 %v1618, 1.0
    %v1630 = vadd.f32 %v1620, 1.0
    %v1631 = vadd.f32 %v1622, 1.0
    %v1632 = vadd.f32 %v1624, 1.0
    %v1633 = vrcp.pop %v1625
    %v1634 = vmul.f32 1.0, %v1633
    %v1635 = vrcp.pop %v1626
    %v1636 = vmul.f32 1.0, %v1635
    %v1637 = vrcp.pop %v1627
    %v1638 = vmul.f32 1.0, %v1637
    %v1639 = vrcp.pop %v1628
    %v1640 = vmul.f32 1.0, %v1639
    %v1641 = vrcp.pop %v1629
    %v1642 = vmul.f32 1.0, %v1641
    %v1643 = vrcp.pop %v1630
    %v1644 = vmul.f32 1.0, %v1643
    %v1645 = vrcp.pop %v1631
    %v1646 = vmul.f32 1.0, %v1645
    %v1647 = vrcp.pop %v1632
    %v1648 = vmul.f32 1.0, %v1647
    %1657 = vrot.lane.b32.xlu0 %v1634, 96
    %v1658 = vpop.permute.xlu0 %1657
    %1659 = vrot.lane.b32.xlu0 %v1636, 96
    %v1660 = vpop.permute.xlu0 %1659
    %1661 = vrot.lane.b32.xlu0 %v1638, 96
    %v1662 = vpop.permute.xlu0 %1661
    %1663 = vrot.lane.b32.xlu0 %v1640, 96
    %v1664 = vpop.permute.xlu0 %1663
    %1665 = vrot.lane.b32.xlu0 %v1642, 96
    %v1666 = vpop.permute.xlu0 %1665
    %1667 = vrot.lane.b32.xlu0 %v1644, 96
    %v1668 = vpop.permute.xlu0 %1667
    %1669 = vrot.lane.b32.xlu0 %v1646, 96
    %v1670 = vpop.permute.xlu0 %1669
    %1671 = vrot.lane.b32.xlu0 %v1648, 96
    %v1672 = vpop.permute.xlu0 %1671
    %v1681 = vmul.f32 %v1593, %v1658
    %v1682 = vmul.f32 %v1594, %v1660
    %v1683 = vmul.f32 %v1595, %v1662
    %v1684 = vmul.f32 %v1596, %v1664
    %v1685 = vmul.f32 %v1597, %v1666
    %v1686 = vmul.f32 %v1598, %v1668
    %v1687 = vmul.f32 %v1599, %v1670
    %v1688 = vmul.f32 %v1600, %v1672
    %v1689 = vpack.c.bf16 %v1682, %v1681
    %v1690 = vpack.c.bf16 %v1684, %v1683
    %v1691 = vpack.c.bf16 %v1686, %v1685
    %v1692 = vpack.c.bf16 %v1688, %v1687
    %s1693 = scalar_lea.vmem %s5, 32
    %v1694 = vld [vmem:[%s1693] sm:$0xf]
    %v1695 = vld [vmem:[%s1693 + $0x4] sm:$0xf]
    %v1696 = vld [vmem:[%s1693 + $0x8] sm:$0xf]
    %v1697 = vld [vmem:[%s1693 + $0xc] sm:$0xf]
    %s1698 = scalar_lea.vmem %s6, 2
    %v1699 = vld [vmem:[%s1698] sm:$0x1]
    %v1701 = vlaneseq
    %v1702 = vshrl.u32 %v1701, 7
    %v1703 = vsub.s32 0, %v1702
    %v1704 = vrot.slane %v1699, %v1703
    %v1710 = vunpack.c.l.b16 %v1694
    %v1711 = vunpack.c.l.b16 %v1695
    %v1712 = vunpack.c.l.b16 %v1696
    %v1713 = vunpack.c.l.b16 %v1697
    %v1714 = vpack.c.b16 %v1711, %v1710
    %v1715 = vpack.c.b16 %v1713, %v1712
    %v1719 = vsel %vm378, %v1689, 0
    %v1722 = vsel %vm378, %v1690, 0
    %v1725 = vsel %vm378, %v1691, 0
    %v1728 = vsel %vm378, %v1692, 0
    %1730 = vmatprep.subr.bf16.mxu0 0
    %1731 = vmatpush1.bf16.msra.mxu0 %v1714
    %1732 = vmatprep.subr.bf16.mxu0 0
    %1733 = vmatpush1.bf16.msra.mxu0 %v1715
    %1734 = vmatprep.subr.bf16.mxu0 0
    %1735 = vmatpush1.bf16.msra.mxu0 0
    %1736 = vmatprep.subr.bf16.mxu0 0
    %1737 = vmatpush1.bf16.msra.mxu0 0
    %1738 = vmatprep.subr.bf16.mxu0 0
    %1739 = vmatpush1.bf16.msra.mxu0 0
    %1740 = vmatprep.subr.bf16.mxu0 0
    %1741 = vmatpush1.bf16.msra.mxu0 0
    %1742 = vmatprep.subr.bf16.mxu0 0
    %1743 = vmatpush1.bf16.msra.mxu0 0
    %1744 = vmatprep.subr.bf16.mxu0 0
    %1745 = vmatpush1.bf16.msra.mxu0 0
    %1746 = vmatprep.subr.bf16.mxu0 0
    %1747 = vmatpush1.bf16.msra.mxu0 0
    %1748 = vmatprep.subr.bf16.mxu0 0
    %1749 = vmatpush1.bf16.msra.mxu0 0
    %1750 = vmatprep.subr.bf16.mxu0 0
    %1751 = vmatpush1.bf16.msra.mxu0 0
    %1752 = vmatprep.subr.bf16.mxu0 0
    %1753 = vmatpush1.bf16.msra.mxu0 0
    %1754 = vmatprep.subr.bf16.mxu0 0
    %1755 = vmatpush1.bf16.msra.mxu0 0
    %1756 = vmatprep.subr.bf16.mxu0 0
    %1757 = vmatpush1.bf16.msra.mxu0 0
    %1758 = vmatprep.subr.bf16.mxu0 0
    %1759 = vmatpush1.bf16.msra.mxu0 0
    %1760 = vmatprep.subr.bf16.mxu0 0
    %1761 = vmatpush1.bf16.msra.mxu0 0
    %1762 = vmatprep.mubr.bf16.mxu0 0
    %1763 = vmatmul.mubr.bf16.gmra.mrb[0].mxu0 %v1719
    %v1764 = vpop.f32.mrb[0].mxu0
    %v1765 = vadd.f32 %v1704, %v1764
    %v1766 = vpop.f32.mrb[0].mxu0
    %v1767 = vpop.f32.mrb[0].mxu0
    %v1768 = vadd.f32 %v1704, %v1767
    %v1769 = vpop.f32.mrb[0].mxu0
    %1770 = vmatprep.mubr.bf16.mxu0 0
    %1771 = vmatmul.mubr.bf16.gmra.mrb[0].mxu0 %v1722
    %v1772 = vpop.f32.mrb[0].mxu0
    %v1773 = vadd.f32 %v1704, %v1772
    %v1774 = vpop.f32.mrb[0].mxu0
    %v1775 = vpop.f32.mrb[0].mxu0
    %v1776 = vadd.f32 %v1704, %v1775
    %v1777 = vpop.f32.mrb[0].mxu0
    %1778 = vmatprep.mubr.bf16.mxu0 0
    %1779 = vmatmul.mubr.bf16.gmra.mrb[0].mxu0 %v1725
    %v1780 = vpop.f32.mrb[0].mxu0
    %v1781 = vadd.f32 %v1704, %v1780
    %v1782 = vpop.f32.mrb[0].mxu0
    %v1783 = vpop.f32.mrb[0].mxu0
    %v1784 = vadd.f32 %v1704, %v1783
    %v1785 = vpop.f32.mrb[0].mxu0
    %1786 = vmatprep.mubr.bf16.mxu0 0
    %1787 = vmatmul.mubr.bf16.gmra.mrb[0].mxu0 %v1728
    %v1788 = vpop.f32.mrb[0].mxu0
    %v1789 = vadd.f32 %v1704, %v1788
    %v1790 = vpop.f32.mrb[0].mxu0
    %v1791 = vpop.f32.mrb[0].mxu0
    %v1792 = vadd.f32 %v1704, %v1791
    %v1793 = vpop.f32.mrb[0].mxu0
    %1794 = vdwg.mxu0
    %v1795 = vadd.f32 %v1765, %v1300
    %v1796 = vadd.f32 %v1768, %v1301
    %v1797 = vadd.f32 %v1773, %v1302
    %v1798 = vadd.f32 %v1776, %v1303
    %v1799 = vadd.f32 %v1781, %v1304
    %v1800 = vadd.f32 %v1784, %v1305
    %v1801 = vadd.f32 %v1789, %v1306
    %v1802 = vadd.f32 %v1792, %v1307
    %v1803 = vadd.f32 %v1308, %v1765
    %v1804 = vadd.f32 %v1309, %v1768
    %v1805 = vadd.f32 %v1310, %v1773
    %v1806 = vadd.f32 %v1311, %v1776
    %v1807 = vadd.f32 %v1312, %v1781
    %v1808 = vadd.f32 %v1313, %v1784
    %v1809 = vadd.f32 %v1314, %v1789
    %v1810 = vadd.f32 %v1315, %v1792
    %v1811 = vrot.slane %v1795, 7
    %v1812 = vrot.slane %v1796, 7
    %v1813 = vrot.slane %v1797, 7
    %v1814 = vrot.slane %v1798, 7
    %v1815 = vrot.slane %v1799, 7
    %v1816 = vrot.slane %v1800, 7
    %v1817 = vrot.slane %v1801, 7
    %v1818 = vrot.slane %v1802, 7
    %v1819 = vsel %vm169, %v1817, %v1818
    %v1820 = vsel %vm169, %v1816, %v1817
    %v1821 = vsel %vm169, %v1815, %v1816
    %v1822 = vsel %vm169, %v1814, %v1815
    %v1823 = vsel %vm169, %v1813, %v1814
    %v1824 = vsel %vm169, %v1812, %v1813
    %v1825 = vsel %vm169, %v1811, %v1812
    %v1826 = vsel %vm169, %v1818, %v1811
    %1835 = vrot.lane.b32.xlu0 %v1795, 32
    %v1836 = vpop.permute.xlu0 %1835
    %1837 = vrot.lane.b32.xlu0 %v1796, 32
    %v1838 = vpop.permute.xlu0 %1837
    %1839 = vrot.lane.b32.xlu0 %v1797, 32
    %v1840 = vpop.permute.xlu0 %1839
    %1841 = vrot.lane.b32.xlu0 %v1798, 32
    %v1842 = vpop.permute.xlu0 %1841
    %1843 = vrot.lane.b32.xlu0 %v1799, 32
    %v1844 = vpop.permute.xlu0 %1843
    %1845 = vrot.lane.b32.xlu0 %v1800, 32
    %v1846 = vpop.permute.xlu0 %1845
    %1847 = vrot.lane.b32.xlu0 %v1801, 32
    %v1848 = vpop.permute.xlu0 %1847
    %1849 = vrot.lane.b32.xlu0 %v1802, 32
    %v1850 = vpop.permute.xlu0 %1849
    %v1859 = vsel %vm378, %v1826, %v1836
    %v1860 = vsel %vm378, %v1825, %v1838
    %v1861 = vsel %vm378, %v1824, %v1840
    %v1862 = vsel %vm378, %v1823, %v1842
    %v1863 = vsel %vm378, %v1822, %v1844
    %v1864 = vsel %vm378, %v1821, %v1846
    %v1865 = vsel %vm378, %v1820, %v1848
    %v1866 = vsel %vm378, %v1819, %v1850
    %v1867 = vpack.c.bf16 %v1860, %v1859
    %v1868 = vpack.c.bf16 %v1862, %v1861
    %v1869 = vpack.c.bf16 %v1864, %v1863
    %v1870 = vpack.c.bf16 %v1866, %v1865
    %s1871 = scalar_lea.vmem %s2, 96
    %v1872 = vld [vmem:[%s1871] sm:$0xf]
    %v1873 = vld [vmem:[%s1871 + $0x4] sm:$0xf]
    %v1874 = vld [vmem:[%s1871 + $0x8] sm:$0xf]
    %v1875 = vld [vmem:[%s1871 + $0xc] sm:$0xf]
    %v1876 = vld [vmem:[%s1871 + $0x10] sm:$0xf]
    %v1877 = vld [vmem:[%s1871 + $0x14] sm:$0xf]
    %v1878 = vld [vmem:[%s1871 + $0x18] sm:$0xf]
    %v1879 = vld [vmem:[%s1871 + $0x1c] sm:$0xf]
    %v1888 = vunpack.c.l.b16 %v1872
    %v1889 = vunpack.c.l.b16 %v1873
    %v1890 = vunpack.c.l.b16 %v1874
    %v1891 = vunpack.c.l.b16 %v1875
    %v1892 = vunpack.c.l.b16 %v1876
    %v1893 = vunpack.c.l.b16 %v1877
    %v1894 = vunpack.c.l.b16 %v1878
    %v1895 = vunpack.c.l.b16 %v1879
    %v1896 = vpack.c.b16 %v1889, %v1888
    %v1897 = vpack.c.b16 %v1891, %v1890
    %v1898 = vpack.c.b16 %v1893, %v1892
    %v1899 = vpack.c.b16 %v1895, %v1894
    %v1905 = vsel %vm423, %v1867, 0
    %v1908 = vsel %vm423, %v1868, 0
    %v1911 = vsel %vm423, %v1869, 0
    %v1914 = vsel %vm423, %v1870, 0
    %1916 = vmatprep.subr.bf16.mxu0 0
    %1917 = vmatpush1.bf16.msra.mxu0 %v1896
    %1918 = vmatprep.subr.bf16.mxu0 0
    %1919 = vmatpush1.bf16.msra.mxu0 %v1897
    %1920 = vmatprep.subr.bf16.mxu0 0
    %1921 = vmatpush1.bf16.msra.mxu0 %v1898
    %1922 = vmatprep.subr.bf16.mxu0 0
    %1923 = vmatpush1.bf16.msra.mxu0 %v1899
    %1924 = vmatprep.subr.bf16.mxu0 0
    %1925 = vmatpush1.bf16.msra.mxu0 0
    %1926 = vmatprep.subr.bf16.mxu0 0
    %1927 = vmatpush1.bf16.msra.mxu0 0
    %1928 = vmatprep.subr.bf16.mxu0 0
    %1929 = vmatpush1.bf16.msra.mxu0 0
    %1930 = vmatprep.subr.bf16.mxu0 0
    %1931 = vmatpush1.bf16.msra.mxu0 0
    %1932 = vmatprep.subr.bf16.mxu0 0
    %1933 = vmatpush1.bf16.msra.mxu0 0
    %1934 = vmatprep.subr.bf16.mxu0 0
    %1935 = vmatpush1.bf16.msra.mxu0 0
    %1936 = vmatprep.subr.bf16.mxu0 0
    %1937 = vmatpush1.bf16.msra.mxu0 0
    %1938 = vmatprep.subr.bf16.mxu0 0
    %1939 = vmatpush1.bf16.msra.mxu0 0
    %1940 = vmatprep.subr.bf16.mxu0 0
    %1941 = vmatpush1.bf16.msra.mxu0 0
    %1942 = vmatprep.subr.bf16.mxu0 0
    %1943 = vmatpush1.bf16.msra.mxu0 0
    %1944 = vmatprep.subr.bf16.mxu0 0
    %1945 = vmatpush1.bf16.msra.mxu0 0
    %1946 = vmatprep.subr.bf16.mxu0 0
    %1947 = vmatpush1.bf16.msra.mxu0 0
    %1948 = vmatprep.mubr.bf16.mxu0 0
    %1949 = vmatmul.mubr.bf16.gmra.mrb[0].mxu0 %v1905
    %v1950 = vpop.f32.mrb[0].mxu0
    %v1951 = vadd.f32 0.0, %v1950
    %v1952 = vpop.f32.mrb[0].mxu0
    %v1953 = vpop.f32.mrb[0].mxu0
    %v1954 = vadd.f32 0.0, %v1953
    %v1955 = vpop.f32.mrb[0].mxu0
    %1956 = vmatprep.mubr.bf16.mxu0 0
    %1957 = vmatmul.mubr.bf16.gmra.mrb[0].mxu0 %v1908
    %v1958 = vpop.f32.mrb[0].mxu0
    %v1959 = vadd.f32 0.0, %v1958
    %v1960 = vpop.f32.mrb[0].mxu0
    %v1961 = vpop.f32.mrb[0].mxu0
    %v1962 = vadd.f32 0.0, %v1961
    %v1963 = vpop.f32.mrb[0].mxu0
    %1964 = vmatprep.mubr.bf16.mxu0 0
    %1965 = vmatmul.mubr.bf16.gmra.mrb[0].mxu0 %v1911
    %v1966 = vpop.f32.mrb[0].mxu0
    %v1967 = vadd.f32 0.0, %v1966
    %v1968 = vpop.f32.mrb[0].mxu0
    %v1969 = vpop.f32.mrb[0].mxu0
    %v1970 = vadd.f32 0.0, %v1969
    %v1971 = vpop.f32.mrb[0].mxu0
    %1972 = vmatprep.mubr.bf16.mxu0 0
    %1973 = vmatmul.mubr.bf16.gmra.mrb[0].mxu0 %v1914
    %v1974 = vpop.f32.mrb[0].mxu0
    %v1975 = vadd.f32 0.0, %v1974
    %v1976 = vpop.f32.mrb[0].mxu0
    %v1977 = vpop.f32.mrb[0].mxu0
    %v1978 = vadd.f32 0.0, %v1977
    %v1979 = vpop.f32.mrb[0].mxu0
    %1980 = vdwg.mxu0
    %v1981 = vpack.c.bf16 %v1954, %v1951
    %v1982 = vpack.c.bf16 %v1962, %v1959
    %v1983 = vpack.c.bf16 %v1970, %v1967
    %v1984 = vpack.c.bf16 %v1978, %v1975
    %s1985 = scalar_lea.vmem %s3, 48
    %v1986 = vld [vmem:[%s1985] sm:$0xf]
    %v1987 = vld [vmem:[%s1985 + $0x4] sm:$0xf]
    %v1988 = vld [vmem:[%s1985 + $0x8] sm:$0xf]
    %v1989 = vld [vmem:[%s1985 + $0xc] sm:$0xf]
    %s1990 = scalar_lea.vmem %s4, 3
    %v1991 = vld [vmem:[%s1990] sm:$0x1]
    %v1993 = vlaneseq
    %v1994 = vshrl.u32 %v1993, 7
    %v1995 = vsub.s32 0, %v1994
    %v1996 = vrot.slane %v1991, %v1995
    %v2002 = vunpack.c.l.b16 %v1986
    %v2003 = vunpack.c.l.b16 %v1987
    %v2004 = vunpack.c.l.b16 %v1988
    %v2005 = vunpack.c.l.b16 %v1989
    %v2006 = vpack.c.b16 %v2003, %v2002
    %v2007 = vpack.c.b16 %v2005, %v2004
    %v2011 = vsel %vm378, %v1981, 0
    %v2014 = vsel %vm378, %v1982, 0
    %v2017 = vsel %vm378, %v1983, 0
    %v2020 = vsel %vm378, %v1984, 0
    %2022 = vmatprep.subr.bf16.mxu0 0
    %2023 = vmatpush1.bf16.msra.mxu0 %v2006
    %2024 = vmatprep.subr.bf16.mxu0 0
    %2025 = vmatpush1.bf16.msra.mxu0 %v2007
    %2026 = vmatprep.subr.bf16.mxu0 0
    %2027 = vmatpush1.bf16.msra.mxu0 0
    %2028 = vmatprep.subr.bf16.mxu0 0
    %2029 = vmatpush1.bf16.msra.mxu0 0
    %2030 = vmatprep.subr.bf16.mxu0 0
    %2031 = vmatpush1.bf16.msra.mxu0 0
    %2032 = vmatprep.subr.bf16.mxu0 0
    %2033 = vmatpush1.bf16.msra.mxu0 0
    %2034 = vmatprep.subr.bf16.mxu0 0
    %2035 = vmatpush1.bf16.msra.mxu0 0
    %2036 = vmatprep.subr.bf16.mxu0 0
    %2037 = vmatpush1.bf16.msra.mxu0 0
    %2038 = vmatprep.subr.bf16.mxu0 0
    %2039 = vmatpush1.bf16.msra.mxu0 0
    %2040 = vmatprep.subr.bf16.mxu0 0
    %2041 = vmatpush1.bf16.msra.mxu0 0
    %2042 = vmatprep.subr.bf16.mxu0 0
    %2043 = vmatpush1.bf16.msra.mxu0 0
    %2044 = vmatprep.subr.bf16.mxu0 0
    %2045 = vmatpush1.bf16.msra.mxu0 0
    %2046 = vmatprep.subr.bf16.mxu0 0
    %2047 = vmatpush1.bf16.msra.mxu0 0
    %2048 = vmatprep.subr.bf16.mxu0 0
    %2049 = vmatpush1.bf16.msra.mxu0 0
    %2050 = vmatprep.subr.bf16.mxu0 0
    %2051 = vmatpush1.bf16.msra.mxu0 0
    %2052 = vmatprep.subr.bf16.mxu0 0
    %2053 = vmatpush1.bf16.msra.mxu0 0
    %2054 = vmatprep.mubr.bf16.mxu0 0
    %2055 = vmatmul.mubr.bf16.gmra.mrb[0].mxu0 %v2011
    %v2056 = vpop.f32.mrb[0].mxu0
    %v2057 = vadd.f32 %v1996, %v2056
    %v2058 = vpop.f32.mrb[0].mxu0
    %v2059 = vpop.f32.mrb[0].mxu0
    %v2060 = vadd.f32 %v1996, %v2059
    %v2061 = vpop.f32.mrb[0].mxu0
    %2062 = vmatprep.mubr.bf16.mxu0 0
    %2063 = vmatmul.mubr.bf16.gmra.mrb[0].mxu0 %v2014
    %v2064 = vpop.f32.mrb[0].mxu0
    %v2065 = vadd.f32 %v1996, %v2064
    %v2066 = vpop.f32.mrb[0].mxu0
    %v2067 = vpop.f32.mrb[0].mxu0
    %v2068 = vadd.f32 %v1996, %v2067
    %v2069 = vpop.f32.mrb[0].mxu0
    %2070 = vmatprep.mubr.bf16.mxu0 0
    %2071 = vmatmul.mubr.bf16.gmra.mrb[0].mxu0 %v2017
    %v2072 = vpop.f32.mrb[0].mxu0
    %v2073 = vadd.f32 %v1996, %v2072
    %v2074 = vpop.f32.mrb[0].mxu0
    %v2075 = vpop.f32.mrb[0].mxu0
    %v2076 = vadd.f32 %v1996, %v2075
    %v2077 = vpop.f32.mrb[0].mxu0
    %2078 = vmatprep.mubr.bf16.mxu0 0
    %2079 = vmatmul.mubr.bf16.gmra.mrb[0].mxu0 %v2020
    %v2080 = vpop.f32.mrb[0].mxu0
    %v2081 = vadd.f32 %v1996, %v2080
    %v2082 = vpop.f32.mrb[0].mxu0
    %v2083 = vpop.f32.mrb[0].mxu0
    %v2084 = vadd.f32 %v1996, %v2083
    %v2085 = vpop.f32.mrb[0].mxu0
    %2086 = vdwg.mxu0
    %v2087 = vtanh.pop %v2057
    %v2088 = vtanh.pop %v2060
    %v2089 = vtanh.pop %v2065
    %v2090 = vtanh.pop %v2068
    %v2091 = vtanh.pop %v2073
    %v2092 = vtanh.pop %v2076
    %v2093 = vtanh.pop %v2081
    %v2094 = vtanh.pop %v2084
    %v2095 = vxor.u32 %v2057, 2147483648
    %v2096 = vxor.u32 %v2060, 2147483648
    %v2097 = vxor.u32 %v2065, 2147483648
    %v2098 = vxor.u32 %v2068, 2147483648
    %v2099 = vxor.u32 %v2073, 2147483648
    %v2100 = vxor.u32 %v2076, 2147483648
    %v2101 = vxor.u32 %v2081, 2147483648
    %v2102 = vxor.u32 %v2084, 2147483648
    %v2103 = vmul.f32 %v2095, 1.442695
    %v2104 = vpow.pop %v2103
    %v2105 = vmul.f32 %v2096, 1.442695
    %v2106 = vpow.pop %v2105
    %v2107 = vmul.f32 %v2097, 1.442695
    %v2108 = vpow.pop %v2107
    %v2109 = vmul.f32 %v2098, 1.442695
    %v2110 = vpow.pop %v2109
    %v2111 = vmul.f32 %v2099, 1.442695
    %v2112 = vpow.pop %v2111
    %v2113 = vmul.f32 %v2100, 1.442695
    %v2114 = vpow.pop %v2113
    %v2115 = vmul.f32 %v2101, 1.442695
    %v2116 = vpow.pop %v2115
    %v2117 = vmul.f32 %v2102, 1.442695
    %v2118 = vpow.pop %v2117
    %v2119 = vadd.f32 %v2104, 1.0
    %v2120 = vadd.f32 %v2106, 1.0
    %v2121 = vadd.f32 %v2108, 1.0
    %v2122 = vadd.f32 %v2110, 1.0
    %v2123 = vadd.f32 %v2112, 1.0
    %v2124 = vadd.f32 %v2114, 1.0
    %v2125 = vadd.f32 %v2116, 1.0
    %v2126 = vadd.f32 %v2118, 1.0
    %v2127 = vrcp.pop %v2119
    %v2128 = vmul.f32 1.0, %v2127
    %v2129 = vrcp.pop %v2120
    %v2130 = vmul.f32 1.0, %v2129
    %v2131 = vrcp.pop %v2121
    %v2132 = vmul.f32 1.0, %v2131
    %v2133 = vrcp.pop %v2122
    %v2134 = vmul.f32 1.0, %v2133
    %v2135 = vrcp.pop %v2123
    %v2136 = vmul.f32 1.0, %v2135
    %v2137 = vrcp.pop %v2124
    %v2138 = vmul.f32 1.0, %v2137
    %v2139 = vrcp.pop %v2125
    %v2140 = vmul.f32 1.0, %v2139
    %v2141 = vrcp.pop %v2126
    %v2142 = vmul.f32 1.0, %v2141
    %2151 = vrot.lane.b32.xlu0 %v2128, 96
    %v2152 = vpop.permute.xlu0 %2151
    %2153 = vrot.lane.b32.xlu0 %v2130, 96
    %v2154 = vpop.permute.xlu0 %2153
    %2155 = vrot.lane.b32.xlu0 %v2132, 96
    %v2156 = vpop.permute.xlu0 %2155
    %2157 = vrot.lane.b32.xlu0 %v2134, 96
    %v2158 = vpop.permute.xlu0 %2157
    %2159 = vrot.lane.b32.xlu0 %v2136, 96
    %v2160 = vpop.permute.xlu0 %2159
    %2161 = vrot.lane.b32.xlu0 %v2138, 96
    %v2162 = vpop.permute.xlu0 %2161
    %2163 = vrot.lane.b32.xlu0 %v2140, 96
    %v2164 = vpop.permute.xlu0 %2163
    %2165 = vrot.lane.b32.xlu0 %v2142, 96
    %v2166 = vpop.permute.xlu0 %2165
    %v2175 = vmul.f32 %v2087, %v2152
    %v2176 = vmul.f32 %v2088, %v2154
    %v2177 = vmul.f32 %v2089, %v2156
    %v2178 = vmul.f32 %v2090, %v2158
    %v2179 = vmul.f32 %v2091, %v2160
    %v2180 = vmul.f32 %v2092, %v2162
    %v2181 = vmul.f32 %v2093, %v2164
    %v2182 = vmul.f32 %v2094, %v2166
    %v2183 = vpack.c.bf16 %v2176, %v2175
    %v2184 = vpack.c.bf16 %v2178, %v2177
    %v2185 = vpack.c.bf16 %v2180, %v2179
    %v2186 = vpack.c.bf16 %v2182, %v2181
    %s2187 = scalar_lea.vmem %s5, 48
    %v2188 = vld [vmem:[%s2187] sm:$0xf]
    %v2189 = vld [vmem:[%s2187 + $0x4] sm:$0xf]
    %v2190 = vld [vmem:[%s2187 + $0x8] sm:$0xf]
    %v2191 = vld [vmem:[%s2187 + $0xc] sm:$0xf]
    %s2192 = scalar_lea.vmem %s6, 3
    %v2193 = vld [vmem:[%s2192] sm:$0x1]
    %v2195 = vlaneseq
    %v2196 = vshrl.u32 %v2195, 7
    %v2197 = vsub.s32 0, %v2196
    %v2198 = vrot.slane %v2193, %v2197
    %v2204 = vunpack.c.l.b16 %v2188
    %v2205 = vunpack.c.l.b16 %v2189
    %v2206 = vunpack.c.l.b16 %v2190
    %v2207 = vunpack.c.l.b16 %v2191
    %v2208 = vpack.c.b16 %v2205, %v2204
    %v2209 = vpack.c.b16 %v2207, %v2206
    %v2213 = vsel %vm378, %v2183, 0
    %v2216 = vsel %vm378, %v2184, 0
    %v2219 = vsel %vm378, %v2185, 0
    %v2222 = vsel %vm378, %v2186, 0
    %2224 = vmatprep.subr.bf16.mxu0 0
    %2225 = vmatpush1.bf16.msra.mxu0 %v2208
    %2226 = vmatprep.subr.bf16.mxu0 0
    %2227 = vmatpush1.bf16.msra.mxu0 %v2209
    %2228 = vmatprep.subr.bf16.mxu0 0
    %2229 = vmatpush1.bf16.msra.mxu0 0
    %2230 = vmatprep.subr.bf16.mxu0 0
    %2231 = vmatpush1.bf16.msra.mxu0 0
    %2232 = vmatprep.subr.bf16.mxu0 0
    %2233 = vmatpush1.bf16.msra.mxu0 0
    %2234 = vmatprep.subr.bf16.mxu0 0
    %2235 = vmatpush1.bf16.msra.mxu0 0
    %2236 = vmatprep.subr.bf16.mxu0 0
    %2237 = vmatpush1.bf16.msra.mxu0 0
    %2238 = vmatprep.subr.bf16.mxu0 0
    %2239 = vmatpush1.bf16.msra.mxu0 0
    %2240 = vmatprep.subr.bf16.mxu0 0
    %2241 = vmatpush1.bf16.msra.mxu0 0
    %2242 = vmatprep.subr.bf16.mxu0 0
    %2243 = vmatpush1.bf16.msra.mxu0 0
    %2244 = vmatprep.subr.bf16.mxu0 0
    %2245 = vmatpush1.bf16.msra.mxu0 0
    %2246 = vmatprep.subr.bf16.mxu0 0
    %2247 = vmatpush1.bf16.msra.mxu0 0
    %2248 = vmatprep.subr.bf16.mxu0 0
    %2249 = vmatpush1.bf16.msra.mxu0 0
    %2250 = vmatprep.subr.bf16.mxu0 0
    %2251 = vmatpush1.bf16.msra.mxu0 0
    %2252 = vmatprep.subr.bf16.mxu0 0
    %2253 = vmatpush1.bf16.msra.mxu0 0
    %2254 = vmatprep.subr.bf16.mxu0 0
    %2255 = vmatpush1.bf16.msra.mxu0 0
    %2256 = vmatprep.mubr.bf16.mxu0 0
    %2257 = vmatmul.mubr.bf16.gmra.mrb[0].mxu0 %v2213
    %v2258 = vpop.f32.mrb[0].mxu0
    %v2259 = vadd.f32 %v2198, %v2258
    %v2260 = vpop.f32.mrb[0].mxu0
    %v2261 = vpop.f32.mrb[0].mxu0
    %v2262 = vadd.f32 %v2198, %v2261
    %v2263 = vpop.f32.mrb[0].mxu0
    %2264 = vmatprep.mubr.bf16.mxu0 0
    %2265 = vmatmul.mubr.bf16.gmra.mrb[0].mxu0 %v2216
    %v2266 = vpop.f32.mrb[0].mxu0
    %v2267 = vadd.f32 %v2198, %v2266
    %v2268 = vpop.f32.mrb[0].mxu0
    %v2269 = vpop.f32.mrb[0].mxu0
    %v2270 = vadd.f32 %v2198, %v2269
    %v2271 = vpop.f32.mrb[0].mxu0
    %2272 = vmatprep.mubr.bf16.mxu0 0
    %2273 = vmatmul.mubr.bf16.gmra.mrb[0].mxu0 %v2219
    %v2274 = vpop.f32.mrb[0].mxu0
    %v2275 = vadd.f32 %v2198, %v2274
    %v2276 = vpop.f32.mrb[0].mxu0
    %v2277 = vpop.f32.mrb[0].mxu0
    %v2278 = vadd.f32 %v2198, %v2277
    %v2279 = vpop.f32.mrb[0].mxu0
    %2280 = vmatprep.mubr.bf16.mxu0 0
    %2281 = vmatmul.mubr.bf16.gmra.mrb[0].mxu0 %v2222
    %v2282 = vpop.f32.mrb[0].mxu0
    %v2283 = vadd.f32 %v2198, %v2282
    %v2284 = vpop.f32.mrb[0].mxu0
    %v2285 = vpop.f32.mrb[0].mxu0
    %v2286 = vadd.f32 %v2198, %v2285
    %v2287 = vpop.f32.mrb[0].mxu0
    %2288 = vdwg.mxu0
    %v2289 = vadd.f32 %v2259, %v1795
    %v2290 = vadd.f32 %v2262, %v1796
    %v2291 = vadd.f32 %v2267, %v1797
    %v2292 = vadd.f32 %v2270, %v1798
    %v2293 = vadd.f32 %v2275, %v1799
    %v2294 = vadd.f32 %v2278, %v1800
    %v2295 = vadd.f32 %v2283, %v1801
    %v2296 = vadd.f32 %v2286, %v1802
    %v2297 = vadd.f32 %v1803, %v2259
    %v2298 = vadd.f32 %v1804, %v2262
    %v2299 = vadd.f32 %v1805, %v2267
    %v2300 = vadd.f32 %v1806, %v2270
    %v2301 = vadd.f32 %v1807, %v2275
    %v2302 = vadd.f32 %v1808, %v2278
    %v2303 = vadd.f32 %v1809, %v2283
    %v2304 = vadd.f32 %v1810, %v2286
    %v2305 = vrot.slane %v2289, 6
    %v2306 = vrot.slane %v2290, 6
    %v2307 = vrot.slane %v2291, 6
    %v2308 = vrot.slane %v2292, 6
    %v2309 = vrot.slane %v2293, 6
    %v2310 = vrot.slane %v2294, 6
    %v2311 = vrot.slane %v2295, 6
    %v2312 = vrot.slane %v2296, 6
    %v2313 = vsel %vm829, %v2311, %v2312
    %v2314 = vsel %vm829, %v2310, %v2311
    %v2315 = vsel %vm829, %v2309, %v2310
    %v2316 = vsel %vm829, %v2308, %v2309
    %v2317 = vsel %vm829, %v2307, %v2308
    %v2318 = vsel %vm829, %v2306, %v2307
    %v2319 = vsel %vm829, %v2305, %v2306
    %v2320 = vsel %vm829, %v2312, %v2305
    %2329 = vrot.lane.b32.xlu0 %v2289, 32
    %v2330 = vpop.permute.xlu0 %2329
    %2331 = vrot.lane.b32.xlu0 %v2290, 32
    %v2332 = vpop.permute.xlu0 %2331
    %2333 = vrot.lane.b32.xlu0 %v2291, 32
    %v2334 = vpop.permute.xlu0 %2333
    %2335 = vrot.lane.b32.xlu0 %v2292, 32
    %v2336 = vpop.permute.xlu0 %2335
    %2337 = vrot.lane.b32.xlu0 %v2293, 32
    %v2338 = vpop.permute.xlu0 %2337
    %2339 = vrot.lane.b32.xlu0 %v2294, 32
    %v2340 = vpop.permute.xlu0 %2339
    %2341 = vrot.lane.b32.xlu0 %v2295, 32
    %v2342 = vpop.permute.xlu0 %2341
    %2343 = vrot.lane.b32.xlu0 %v2296, 32
    %v2344 = vpop.permute.xlu0 %2343
    %v2353 = vsel %vm378, %v2320, %v2330
    %v2354 = vsel %vm378, %v2319, %v2332
    %v2355 = vsel %vm378, %v2318, %v2334
    %v2356 = vsel %vm378, %v2317, %v2336
    %v2357 = vsel %vm378, %v2316, %v2338
    %v2358 = vsel %vm378, %v2315, %v2340
    %v2359 = vsel %vm378, %v2314, %v2342
    %v2360 = vsel %vm378, %v2313, %v2344
    %v2361 = vpack.c.bf16 %v2354, %v2353
    %v2362 = vpack.c.bf16 %v2356, %v2355
    %v2363 = vpack.c.bf16 %v2358, %v2357
    %v2364 = vpack.c.bf16 %v2360, %v2359
    %s2365 = scalar_lea.vmem %s2, 128
    %v2366 = vld [vmem:[%s2365] sm:$0xf]
    %v2367 = vld [vmem:[%s2365 + $0x4] sm:$0xf]
    %v2368 = vld [vmem:[%s2365 + $0x8] sm:$0xf]
    %v2369 = vld [vmem:[%s2365 + $0xc] sm:$0xf]
    %v2370 = vld [vmem:[%s2365 + $0x10] sm:$0xf]
    %v2371 = vld [vmem:[%s2365 + $0x14] sm:$0xf]
    %v2372 = vld [vmem:[%s2365 + $0x18] sm:$0xf]
    %v2373 = vld [vmem:[%s2365 + $0x1c] sm:$0xf]
    %v2382 = vunpack.c.l.b16 %v2366
    %v2383 = vunpack.c.l.b16 %v2367
    %v2384 = vunpack.c.l.b16 %v2368
    %v2385 = vunpack.c.l.b16 %v2369
    %v2386 = vunpack.c.l.b16 %v2370
    %v2387 = vunpack.c.l.b16 %v2371
    %v2388 = vunpack.c.l.b16 %v2372
    %v2389 = vunpack.c.l.b16 %v2373
    %v2390 = vpack.c.b16 %v2383, %v2382
    %v2391 = vpack.c.b16 %v2385, %v2384
    %v2392 = vpack.c.b16 %v2387, %v2386
    %v2393 = vpack.c.b16 %v2389, %v2388
    %v2399 = vsel %vm423, %v2361, 0
    %v2402 = vsel %vm423, %v2362, 0
    %v2405 = vsel %vm423, %v2363, 0
    %v2408 = vsel %vm423, %v2364, 0
    %2410 = vmatprep.subr.bf16.mxu0 0
    %2411 = vmatpush1.bf16.msra.mxu0 %v2390
    %2412 = vmatprep.subr.bf16.mxu0 0
    %2413 = vmatpush1.bf16.msra.mxu0 %v2391
    %2414 = vmatprep.subr.bf16.mxu0 0
    %2415 = vmatpush1.bf16.msra.mxu0 %v2392
    %2416 = vmatprep.subr.bf16.mxu0 0
    %2417 = vmatpush1.bf16.msra.mxu0 %v2393
    %2418 = vmatprep.subr.bf16.mxu0 0
    %2419 = vmatpush1.bf16.msra.mxu0 0
    %2420 = vmatprep.subr.bf16.mxu0 0
    %2421 = vmatpush1.bf16.msra.mxu0 0
    %2422 = vmatprep.subr.bf16.mxu0 0
    %2423 = vmatpush1.bf16.msra.mxu0 0
    %2424 = vmatprep.subr.bf16.mxu0 0
    %2425 = vmatpush1.bf16.msra.mxu0 0
    %2426 = vmatprep.subr.bf16.mxu0 0
    %2427 = vmatpush1.bf16.msra.mxu0 0
    %2428 = vmatprep.subr.bf16.mxu0 0
    %2429 = vmatpush1.bf16.msra.mxu0 0
    %2430 = vmatprep.subr.bf16.mxu0 0
    %2431 = vmatpush1.bf16.msra.mxu0 0
    %2432 = vmatprep.subr.bf16.mxu0 0
    %2433 = vmatpush1.bf16.msra.mxu0 0
    %2434 = vmatprep.subr.bf16.mxu0 0
    %2435 = vmatpush1.bf16.msra.mxu0 0
    %2436 = vmatprep.subr.bf16.mxu0 0
    %2437 = vmatpush1.bf16.msra.mxu0 0
    %2438 = vmatprep.subr.bf16.mxu0 0
    %2439 = vmatpush1.bf16.msra.mxu0 0
    %2440 = vmatprep.subr.bf16.mxu0 0
    %2441 = vmatpush1.bf16.msra.mxu0 0
    %2442 = vmatprep.mubr.bf16.mxu0 0
    %2443 = vmatmul.mubr.bf16.gmra.mrb[0].mxu0 %v2399
    %v2444 = vpop.f32.mrb[0].mxu0
    %v2445 = vadd.f32 0.0, %v2444
    %v2446 = vpop.f32.mrb[0].mxu0
    %v2447 = vpop.f32.mrb[0].mxu0
    %v2448 = vadd.f32 0.0, %v2447
    %v2449 = vpop.f32.mrb[0].mxu0
    %2450 = vmatprep.mubr.bf16.mxu0 0
    %2451 = vmatmul.mubr.bf16.gmra.mrb[0].mxu0 %v2402
    %v2452 = vpop.f32.mrb[0].mxu0
    %v2453 = vadd.f32 0.0, %v2452
    %v2454 = vpop.f32.mrb[0].mxu0
    %v2455 = vpop.f32.mrb[0].mxu0
    %v2456 = vadd.f32 0.0, %v2455
    %v2457 = vpop.f32.mrb[0].mxu0
    %2458 = vmatprep.mubr.bf16.mxu0 0
    %2459 = vmatmul.mubr.bf16.gmra.mrb[0].mxu0 %v2405
    %v2460 = vpop.f32.mrb[0].mxu0
    %v2461 = vadd.f32 0.0, %v2460
    %v2462 = vpop.f32.mrb[0].mxu0
    %v2463 = vpop.f32.mrb[0].mxu0
    %v2464 = vadd.f32 0.0, %v2463
    %v2465 = vpop.f32.mrb[0].mxu0
    %2466 = vmatprep.mubr.bf16.mxu0 0
    %2467 = vmatmul.mubr.bf16.gmra.mrb[0].mxu0 %v2408
    %v2468 = vpop.f32.mrb[0].mxu0
    %v2469 = vadd.f32 0.0, %v2468
    %v2470 = vpop.f32.mrb[0].mxu0
    %v2471 = vpop.f32.mrb[0].mxu0
    %v2472 = vadd.f32 0.0, %v2471
    %v2473 = vpop.f32.mrb[0].mxu0
    %2474 = vdwg.mxu0
    %v2475 = vpack.c.bf16 %v2448, %v2445
    %v2476 = vpack.c.bf16 %v2456, %v2453
    %v2477 = vpack.c.bf16 %v2464, %v2461
    %v2478 = vpack.c.bf16 %v2472, %v2469
    %s2479 = scalar_lea.vmem %s3, 64
    %v2480 = vld [vmem:[%s2479] sm:$0xf]
    %v2481 = vld [vmem:[%s2479 + $0x4] sm:$0xf]
    %v2482 = vld [vmem:[%s2479 + $0x8] sm:$0xf]
    %v2483 = vld [vmem:[%s2479 + $0xc] sm:$0xf]
    %s2484 = scalar_lea.vmem %s4, 4
    %v2485 = vld [vmem:[%s2484] sm:$0x1]
    %v2487 = vlaneseq
    %v2488 = vshrl.u32 %v2487, 7
    %v2489 = vsub.s32 0, %v2488
    %v2490 = vrot.slane %v2485, %v2489
    %v2496 = vunpack.c.l.b16 %v2480
    %v2497 = vunpack.c.l.b16 %v2481
    %v2498 = vunpack.c.l.b16 %v2482
    %v2499 = vunpack.c.l.b16 %v2483
    %v2500 = vpack.c.b16 %v2497, %v2496
    %v2501 = vpack.c.b16 %v2499, %v2498
    %v2505 = vsel %vm378, %v2475, 0
    %v2508 = vsel %vm378, %v2476, 0
    %v2511 = vsel %vm378, %v2477, 0
    %v2514 = vsel %vm378, %v2478, 0
    %2516 = vmatprep.subr.bf16.mxu0 0
    %2517 = vmatpush1.bf16.msra.mxu0 %v2500
    %2518 = vmatprep.subr.bf16.mxu0 0
    %2519 = vmatpush1.bf16.msra.mxu0 %v2501
    %2520 = vmatprep.subr.bf16.mxu0 0
    %2521 = vmatpush1.bf16.msra.mxu0 0
    %2522 = vmatprep.subr.bf16.mxu0 0
    %2523 = vmatpush1.bf16.msra.mxu0 0
    %2524 = vmatprep.subr.bf16.mxu0 0
    %2525 = vmatpush1.bf16.msra.mxu0 0
    %2526 = vmatprep.subr.bf16.mxu0 0
    %2527 = vmatpush1.bf16.msra.mxu0 0
    %2528 = vmatprep.subr.bf16.mxu0 0
    %2529 = vmatpush1.bf16.msra.mxu0 0
    %2530 = vmatprep.subr.bf16.mxu0 0
    %2531 = vmatpush1.bf16.msra.mxu0 0
    %2532 = vmatprep.subr.bf16.mxu0 0
    %2533 = vmatpush1.bf16.msra.mxu0 0
    %2534 = vmatprep.subr.bf16.mxu0 0
    %2535 = vmatpush1.bf16.msra.mxu0 0
    %2536 = vmatprep.subr.bf16.mxu0 0
    %2537 = vmatpush1.bf16.msra.mxu0 0
    %2538 = vmatprep.subr.bf16.mxu0 0
    %2539 = vmatpush1.bf16.msra.mxu0 0
    %2540 = vmatprep.subr.bf16.mxu0 0
    %2541 = vmatpush1.bf16.msra.mxu0 0
    %2542 = vmatprep.subr.bf16.mxu0 0
    %2543 = vmatpush1.bf16.msra.mxu0 0
    %2544 = vmatprep.subr.bf16.mxu0 0
    %2545 = vmatpush1.bf16.msra.mxu0 0
    %2546 = vmatprep.subr.bf16.mxu0 0
    %2547 = vmatpush1.bf16.msra.mxu0 0
    %2548 = vmatprep.mubr.bf16.mxu0 0
    %2549 = vmatmul.mubr.bf16.gmra.mrb[0].mxu0 %v2505
    %v2550 = vpop.f32.mrb[0].mxu0
    %v2551 = vadd.f32 %v2490, %v2550
    %v2552 = vpop.f32.mrb[0].mxu0
    %v2553 = vpop.f32.mrb[0].mxu0
    %v2554 = vadd.f32 %v2490, %v2553
    %v2555 = vpop.f32.mrb[0].mxu0
    %2556 = vmatprep.mubr.bf16.mxu0 0
    %2557 = vmatmul.mubr.bf16.gmra.mrb[0].mxu0 %v2508
    %v2558 = vpop.f32.mrb[0].mxu0
    %v2559 = vadd.f32 %v2490, %v2558
    %v2560 = vpop.f32.mrb[0].mxu0
    %v2561 = vpop.f32.mrb[0].mxu0
    %v2562 = vadd.f32 %v2490, %v2561
    %v2563 = vpop.f32.mrb[0].mxu0
    %2564 = vmatprep.mubr.bf16.mxu0 0
    %2565 = vmatmul.mubr.bf16.gmra.mrb[0].mxu0 %v2511
    %v2566 = vpop.f32.mrb[0].mxu0
    %v2567 = vadd.f32 %v2490, %v2566
    %v2568 = vpop.f32.mrb[0].mxu0
    %v2569 = vpop.f32.mrb[0].mxu0
    %v2570 = vadd.f32 %v2490, %v2569
    %v2571 = vpop.f32.mrb[0].mxu0
    %2572 = vmatprep.mubr.bf16.mxu0 0
    %2573 = vmatmul.mubr.bf16.gmra.mrb[0].mxu0 %v2514
    %v2574 = vpop.f32.mrb[0].mxu0
    %v2575 = vadd.f32 %v2490, %v2574
    %v2576 = vpop.f32.mrb[0].mxu0
    %v2577 = vpop.f32.mrb[0].mxu0
    %v2578 = vadd.f32 %v2490, %v2577
    %v2579 = vpop.f32.mrb[0].mxu0
    %2580 = vdwg.mxu0
    %v2581 = vtanh.pop %v2551
    %v2582 = vtanh.pop %v2554
    %v2583 = vtanh.pop %v2559
    %v2584 = vtanh.pop %v2562
    %v2585 = vtanh.pop %v2567
    %v2586 = vtanh.pop %v2570
    %v2587 = vtanh.pop %v2575
    %v2588 = vtanh.pop %v2578
    %v2589 = vxor.u32 %v2551, 2147483648
    %v2590 = vxor.u32 %v2554, 2147483648
    %v2591 = vxor.u32 %v2559, 2147483648
    %v2592 = vxor.u32 %v2562, 2147483648
    %v2593 = vxor.u32 %v2567, 2147483648
    %v2594 = vxor.u32 %v2570, 2147483648
    %v2595 = vxor.u32 %v2575, 2147483648
    %v2596 = vxor.u32 %v2578, 2147483648
    %v2597 = vmul.f32 %v2589, 1.442695
    %v2598 = vpow.pop %v2597
    %v2599 = vmul.f32 %v2590, 1.442695
    %v2600 = vpow.pop %v2599
    %v2601 = vmul.f32 %v2591, 1.442695
    %v2602 = vpow.pop %v2601
    %v2603 = vmul.f32 %v2592, 1.442695
    %v2604 = vpow.pop %v2603
    %v2605 = vmul.f32 %v2593, 1.442695
    %v2606 = vpow.pop %v2605
    %v2607 = vmul.f32 %v2594, 1.442695
    %v2608 = vpow.pop %v2607
    %v2609 = vmul.f32 %v2595, 1.442695
    %v2610 = vpow.pop %v2609
    %v2611 = vmul.f32 %v2596, 1.442695
    %v2612 = vpow.pop %v2611
    %v2613 = vadd.f32 %v2598, 1.0
    %v2614 = vadd.f32 %v2600, 1.0
    %v2615 = vadd.f32 %v2602, 1.0
    %v2616 = vadd.f32 %v2604, 1.0
    %v2617 = vadd.f32 %v2606, 1.0
    %v2618 = vadd.f32 %v2608, 1.0
    %v2619 = vadd.f32 %v2610, 1.0
    %v2620 = vadd.f32 %v2612, 1.0
    %v2621 = vrcp.pop %v2613
    %v2622 = vmul.f32 1.0, %v2621
    %v2623 = vrcp.pop %v2614
    %v2624 = vmul.f32 1.0, %v2623
    %v2625 = vrcp.pop %v2615
    %v2626 = vmul.f32 1.0, %v2625
    %v2627 = vrcp.pop %v2616
    %v2628 = vmul.f32 1.0, %v2627
    %v2629 = vrcp.pop %v2617
    %v2630 = vmul.f32 1.0, %v2629
    %v2631 = vrcp.pop %v2618
    %v2632 = vmul.f32 1.0, %v2631
    %v2633 = vrcp.pop %v2619
    %v2634 = vmul.f32 1.0, %v2633
    %v2635 = vrcp.pop %v2620
    %v2636 = vmul.f32 1.0, %v2635
    %2645 = vrot.lane.b32.xlu0 %v2622, 96
    %v2646 = vpop.permute.xlu0 %2645
    %2647 = vrot.lane.b32.xlu0 %v2624, 96
    %v2648 = vpop.permute.xlu0 %2647
    %2649 = vrot.lane.b32.xlu0 %v2626, 96
    %v2650 = vpop.permute.xlu0 %2649
    %2651 = vrot.lane.b32.xlu0 %v2628, 96
    %v2652 = vpop.permute.xlu0 %2651
    %2653 = vrot.lane.b32.xlu0 %v2630, 96
    %v2654 = vpop.permute.xlu0 %2653
    %2655 = vrot.lane.b32.xlu0 %v2632, 96
    %v2656 = vpop.permute.xlu0 %2655
    %2657 = vrot.lane.b32.xlu0 %v2634, 96
    %v2658 = vpop.permute.xlu0 %2657
    %2659 = vrot.lane.b32.xlu0 %v2636, 96
    %v2660 = vpop.permute.xlu0 %2659
    %v2669 = vmul.f32 %v2581, %v2646
    %v2670 = vmul.f32 %v2582, %v2648
    %v2671 = vmul.f32 %v2583, %v2650
    %v2672 = vmul.f32 %v2584, %v2652
    %v2673 = vmul.f32 %v2585, %v2654
    %v2674 = vmul.f32 %v2586, %v2656
    %v2675 = vmul.f32 %v2587, %v2658
    %v2676 = vmul.f32 %v2588, %v2660
    %v2677 = vpack.c.bf16 %v2670, %v2669
    %v2678 = vpack.c.bf16 %v2672, %v2671
    %v2679 = vpack.c.bf16 %v2674, %v2673
    %v2680 = vpack.c.bf16 %v2676, %v2675
    %s2681 = scalar_lea.vmem %s5, 64
    %v2682 = vld [vmem:[%s2681] sm:$0xf]
    %v2683 = vld [vmem:[%s2681 + $0x4] sm:$0xf]
    %v2684 = vld [vmem:[%s2681 + $0x8] sm:$0xf]
    %v2685 = vld [vmem:[%s2681 + $0xc] sm:$0xf]
    %s2686 = scalar_lea.vmem %s6, 4
    %v2687 = vld [vmem:[%s2686] sm:$0x1]
    %v2689 = vlaneseq
    %v2690 = vshrl.u32 %v2689, 7
    %v2691 = vsub.s32 0, %v2690
    %v2692 = vrot.slane %v2687, %v2691
    %v2698 = vunpack.c.l.b16 %v2682
    %v2699 = vunpack.c.l.b16 %v2683
    %v2700 = vunpack.c.l.b16 %v2684
    %v2701 = vunpack.c.l.b16 %v2685
    %v2702 = vpack.c.b16 %v2699, %v2698
    %v2703 = vpack.c.b16 %v2701, %v2700
    %v2707 = vsel %vm378, %v2677, 0
    %v2710 = vsel %vm378, %v2678, 0
    %v2713 = vsel %vm378, %v2679, 0
    %v2716 = vsel %vm378, %v2680, 0
    %2718 = vmatprep.subr.bf16.mxu0 0
    %2719 = vmatpush1.bf16.msra.mxu0 %v2702
    %2720 = vmatprep.subr.bf16.mxu0 0
    %2721 = vmatpush1.bf16.msra.mxu0 %v2703
    %2722 = vmatprep.subr.bf16.mxu0 0
    %2723 = vmatpush1.bf16.msra.mxu0 0
    %2724 = vmatprep.subr.bf16.mxu0 0
    %2725 = vmatpush1.bf16.msra.mxu0 0
    %2726 = vmatprep.subr.bf16.mxu0 0
    %2727 = vmatpush1.bf16.msra.mxu0 0
    %2728 = vmatprep.subr.bf16.mxu0 0
    %2729 = vmatpush1.bf16.msra.mxu0 0
    %2730 = vmatprep.subr.bf16.mxu0 0
    %2731 = vmatpush1.bf16.msra.mxu0 0
    %2732 = vmatprep.subr.bf16.mxu0 0
    %2733 = vmatpush1.bf16.msra.mxu0 0
    %2734 = vmatprep.subr.bf16.mxu0 0
    %2735 = vmatpush1.bf16.msra.mxu0 0
    %2736 = vmatprep.subr.bf16.mxu0 0
    %2737 = vmatpush1.bf16.msra.mxu0 0
    %2738 = vmatprep.subr.bf16.mxu0 0
    %2739 = vmatpush1.bf16.msra.mxu0 0
    %2740 = vmatprep.subr.bf16.mxu0 0
    %2741 = vmatpush1.bf16.msra.mxu0 0
    %2742 = vmatprep.subr.bf16.mxu0 0
    %2743 = vmatpush1.bf16.msra.mxu0 0
    %2744 = vmatprep.subr.bf16.mxu0 0
    %2745 = vmatpush1.bf16.msra.mxu0 0
    %2746 = vmatprep.subr.bf16.mxu0 0
    %2747 = vmatpush1.bf16.msra.mxu0 0
    %2748 = vmatprep.subr.bf16.mxu0 0
    %2749 = vmatpush1.bf16.msra.mxu0 0
    %2750 = vmatprep.mubr.bf16.mxu0 0
    %2751 = vmatmul.mubr.bf16.gmra.mrb[0].mxu0 %v2707
    %v2752 = vpop.f32.mrb[0].mxu0
    %v2753 = vadd.f32 %v2692, %v2752
    %v2754 = vpop.f32.mrb[0].mxu0
    %v2755 = vpop.f32.mrb[0].mxu0
    %v2756 = vadd.f32 %v2692, %v2755
    %v2757 = vpop.f32.mrb[0].mxu0
    %2758 = vmatprep.mubr.bf16.mxu0 0
    %2759 = vmatmul.mubr.bf16.gmra.mrb[0].mxu0 %v2710
    %v2760 = vpop.f32.mrb[0].mxu0
    %v2761 = vadd.f32 %v2692, %v2760
    %v2762 = vpop.f32.mrb[0].mxu0
    %v2763 = vpop.f32.mrb[0].mxu0
    %v2764 = vadd.f32 %v2692, %v2763
    %v2765 = vpop.f32.mrb[0].mxu0
    %2766 = vmatprep.mubr.bf16.mxu0 0
    %2767 = vmatmul.mubr.bf16.gmra.mrb[0].mxu0 %v2713
    %v2768 = vpop.f32.mrb[0].mxu0
    %v2769 = vadd.f32 %v2692, %v2768
    %v2770 = vpop.f32.mrb[0].mxu0
    %v2771 = vpop.f32.mrb[0].mxu0
    %v2772 = vadd.f32 %v2692, %v2771
    %v2773 = vpop.f32.mrb[0].mxu0
    %2774 = vmatprep.mubr.bf16.mxu0 0
    %2775 = vmatmul.mubr.bf16.gmra.mrb[0].mxu0 %v2716
    %v2776 = vpop.f32.mrb[0].mxu0
    %v2777 = vadd.f32 %v2692, %v2776
    %v2778 = vpop.f32.mrb[0].mxu0
    %v2779 = vpop.f32.mrb[0].mxu0
    %v2780 = vadd.f32 %v2692, %v2779
    %v2781 = vpop.f32.mrb[0].mxu0
    %2782 = vdwg.mxu0
    %v2783 = vadd.f32 %v2753, %v2289
    %v2784 = vadd.f32 %v2756, %v2290
    %v2785 = vadd.f32 %v2761, %v2291
    %v2786 = vadd.f32 %v2764, %v2292
    %v2787 = vadd.f32 %v2769, %v2293
    %v2788 = vadd.f32 %v2772, %v2294
    %v2789 = vadd.f32 %v2777, %v2295
    %v2790 = vadd.f32 %v2780, %v2296
    %v2791 = vadd.f32 %v2297, %v2753
    %v2792 = vadd.f32 %v2298, %v2756
    %v2793 = vadd.f32 %v2299, %v2761
    %v2794 = vadd.f32 %v2300, %v2764
    %v2795 = vadd.f32 %v2301, %v2769
    %v2796 = vadd.f32 %v2302, %v2772
    %v2797 = vadd.f32 %v2303, %v2777
    %v2798 = vadd.f32 %v2304, %v2780
    %v2799 = vrot.slane %v2783, 4
    %v2800 = vrot.slane %v2784, 4
    %v2801 = vrot.slane %v2785, 4
    %v2802 = vrot.slane %v2786, 4
    %v2803 = vrot.slane %v2787, 4
    %v2804 = vrot.slane %v2788, 4
    %v2805 = vrot.slane %v2789, 4
    %v2806 = vrot.slane %v2790, 4
    %v2807 = vsel %vm1324, %v2805, %v2806
    %v2808 = vsel %vm1324, %v2804, %v2805
    %v2809 = vsel %vm1324, %v2803, %v2804
    %v2810 = vsel %vm1324, %v2802, %v2803
    %v2811 = vsel %vm1324, %v2801, %v2802
    %v2812 = vsel %vm1324, %v2800, %v2801
    %v2813 = vsel %vm1324, %v2799, %v2800
    %v2814 = vsel %vm1324, %v2806, %v2799
    %2823 = vrot.lane.b32.xlu0 %v2783, 32
    %v2824 = vpop.permute.xlu0 %2823
    %2825 = vrot.lane.b32.xlu0 %v2784, 32
    %v2826 = vpop.permute.xlu0 %2825
    %2827 = vrot.lane.b32.xlu0 %v2785, 32
    %v2828 = vpop.permute.xlu0 %2827
    %2829 = vrot.lane.b32.xlu0 %v2786, 32
    %v2830 = vpop.permute.xlu0 %2829
    %2831 = vrot.lane.b32.xlu0 %v2787, 32
    %v2832 = vpop.permute.xlu0 %2831
    %2833 = vrot.lane.b32.xlu0 %v2788, 32
    %v2834 = vpop.permute.xlu0 %2833
    %2835 = vrot.lane.b32.xlu0 %v2789, 32
    %v2836 = vpop.permute.xlu0 %2835
    %2837 = vrot.lane.b32.xlu0 %v2790, 32
    %v2838 = vpop.permute.xlu0 %2837
    %v2847 = vsel %vm378, %v2814, %v2824
    %v2848 = vsel %vm378, %v2813, %v2826
    %v2849 = vsel %vm378, %v2812, %v2828
    %v2850 = vsel %vm378, %v2811, %v2830
    %v2851 = vsel %vm378, %v2810, %v2832
    %v2852 = vsel %vm378, %v2809, %v2834
    %v2853 = vsel %vm378, %v2808, %v2836
    %v2854 = vsel %vm378, %v2807, %v2838
    %v2855 = vpack.c.bf16 %v2848, %v2847
    %v2856 = vpack.c.bf16 %v2850, %v2849
    %v2857 = vpack.c.bf16 %v2852, %v2851
    %v2858 = vpack.c.bf16 %v2854, %v2853
    %s2859 = scalar_lea.vmem %s2, 160
    %v2860 = vld [vmem:[%s2859] sm:$0xf]
    %v2861 = vld [vmem:[%s2859 + $0x4] sm:$0xf]
    %v2862 = vld [vmem:[%s2859 + $0x8] sm:$0xf]
    %v2863 = vld [vmem:[%s2859 + $0xc] sm:$0xf]
    %v2864 = vld [vmem:[%s2859 + $0x10] sm:$0xf]
    %v2865 = vld [vmem:[%s2859 + $0x14] sm:$0xf]
    %v2866 = vld [vmem:[%s2859 + $0x18] sm:$0xf]
    %v2867 = vld [vmem:[%s2859 + $0x1c] sm:$0xf]
    %v2876 = vunpack.c.l.b16 %v2860
    %v2877 = vunpack.c.l.b16 %v2861
    %v2878 = vunpack.c.l.b16 %v2862
    %v2879 = vunpack.c.l.b16 %v2863
    %v2880 = vunpack.c.l.b16 %v2864
    %v2881 = vunpack.c.l.b16 %v2865
    %v2882 = vunpack.c.l.b16 %v2866
    %v2883 = vunpack.c.l.b16 %v2867
    %v2884 = vpack.c.b16 %v2877, %v2876
    %v2885 = vpack.c.b16 %v2879, %v2878
    %v2886 = vpack.c.b16 %v2881, %v2880
    %v2887 = vpack.c.b16 %v2883, %v2882
    %v2893 = vsel %vm423, %v2855, 0
    %v2896 = vsel %vm423, %v2856, 0
    %v2899 = vsel %vm423, %v2857, 0
    %v2902 = vsel %vm423, %v2858, 0
    %2904 = vmatprep.subr.bf16.mxu0 0
    %2905 = vmatpush1.bf16.msra.mxu0 %v2884
    %2906 = vmatprep.subr.bf16.mxu0 0
    %2907 = vmatpush1.bf16.msra.mxu0 %v2885
    %2908 = vmatprep.subr.bf16.mxu0 0
    %2909 = vmatpush1.bf16.msra.mxu0 %v2886
    %2910 = vmatprep.subr.bf16.mxu0 0
    %2911 = vmatpush1.bf16.msra.mxu0 %v2887
    %2912 = vmatprep.subr.bf16.mxu0 0
    %2913 = vmatpush1.bf16.msra.mxu0 0
    %2914 = vmatprep.subr.bf16.mxu0 0
    %2915 = vmatpush1.bf16.msra.mxu0 0
    %2916 = vmatprep.subr.bf16.mxu0 0
    %2917 = vmatpush1.bf16.msra.mxu0 0
    %2918 = vmatprep.subr.bf16.mxu0 0
    %2919 = vmatpush1.bf16.msra.mxu0 0
    %2920 = vmatprep.subr.bf16.mxu0 0
    %2921 = vmatpush1.bf16.msra.mxu0 0
    %2922 = vmatprep.subr.bf16.mxu0 0
    %2923 = vmatpush1.bf16.msra.mxu0 0
    %2924 = vmatprep.subr.bf16.mxu0 0
    %2925 = vmatpush1.bf16.msra.mxu0 0
    %2926 = vmatprep.subr.bf16.mxu0 0
    %2927 = vmatpush1.bf16.msra.mxu0 0
    %2928 = vmatprep.subr.bf16.mxu0 0
    %2929 = vmatpush1.bf16.msra.mxu0 0
    %2930 = vmatprep.subr.bf16.mxu0 0
    %2931 = vmatpush1.bf16.msra.mxu0 0
    %2932 = vmatprep.subr.bf16.mxu0 0
    %2933 = vmatpush1.bf16.msra.mxu0 0
    %2934 = vmatprep.subr.bf16.mxu0 0
    %2935 = vmatpush1.bf16.msra.mxu0 0
    %2936 = vmatprep.mubr.bf16.mxu0 0
    %2937 = vmatmul.mubr.bf16.gmra.mrb[0].mxu0 %v2893
    %v2938 = vpop.f32.mrb[0].mxu0
    %v2939 = vadd.f32 0.0, %v2938
    %v2940 = vpop.f32.mrb[0].mxu0
    %v2941 = vpop.f32.mrb[0].mxu0
    %v2942 = vadd.f32 0.0, %v2941
    %v2943 = vpop.f32.mrb[0].mxu0
    %2944 = vmatprep.mubr.bf16.mxu0 0
    %2945 = vmatmul.mubr.bf16.gmra.mrb[0].mxu0 %v2896
    %v2946 = vpop.f32.mrb[0].mxu0
    %v2947 = vadd.f32 0.0, %v2946
    %v2948 = vpop.f32.mrb[0].mxu0
    %v2949 = vpop.f32.mrb[0].mxu0
    %v2950 = vadd.f32 0.0, %v2949
    %v2951 = vpop.f32.mrb[0].mxu0
    %2952 = vmatprep.mubr.bf16.mxu0 0
    %2953 = vmatmul.mubr.bf16.gmra.mrb[0].mxu0 %v2899
    %v2954 = vpop.f32.mrb[0].mxu0
    %v2955 = vadd.f32 0.0, %v2954
    %v2956 = vpop.f32.mrb[0].mxu0
    %v2957 = vpop.f32.mrb[0].mxu0
    %v2958 = vadd.f32 0.0, %v2957
    %v2959 = vpop.f32.mrb[0].mxu0
    %2960 = vmatprep.mubr.bf16.mxu0 0
    %2961 = vmatmul.mubr.bf16.gmra.mrb[0].mxu0 %v2902
    %v2962 = vpop.f32.mrb[0].mxu0
    %v2963 = vadd.f32 0.0, %v2962
    %v2964 = vpop.f32.mrb[0].mxu0
    %v2965 = vpop.f32.mrb[0].mxu0
    %v2966 = vadd.f32 0.0, %v2965
    %v2967 = vpop.f32.mrb[0].mxu0
    %2968 = vdwg.mxu0
    %v2969 = vpack.c.bf16 %v2942, %v2939
    %v2970 = vpack.c.bf16 %v2950, %v2947
    %v2971 = vpack.c.bf16 %v2958, %v2955
    %v2972 = vpack.c.bf16 %v2966, %v2963
    %s2973 = scalar_lea.vmem %s3, 80
    %v2974 = vld [vmem:[%s2973] sm:$0xf]
    %v2975 = vld [vmem:[%s2973 + $0x4] sm:$0xf]
    %v2976 = vld [vmem:[%s2973 + $0x8] sm:$0xf]
    %v2977 = vld [vmem:[%s2973 + $0xc] sm:$0xf]
    %s2978 = scalar_lea.vmem %s4, 5
    %v2979 = vld [vmem:[%s2978] sm:$0x1]
    %v2981 = vlaneseq
    %v2982 = vshrl.u32 %v2981, 7
    %v2983 = vsub.s32 0, %v2982
    %v2984 = vrot.slane %v2979, %v2983
    %v2990 = vunpack.c.l.b16 %v2974
    %v2991 = vunpack.c.l.b16 %v2975
    %v2992 = vunpack.c.l.b16 %v2976
    %v2993 = vunpack.c.l.b16 %v2977
    %v2994 = vpack.c.b16 %v2991, %v2990
    %v2995 = vpack.c.b16 %v2993, %v2992
    %v2999 = vsel %vm378, %v2969, 0
    %v3002 = vsel %vm378, %v2970, 0
    %v3005 = vsel %vm378, %v2971, 0
    %v3008 = vsel %vm378, %v2972, 0
    %3010 = vmatprep.subr.bf16.mxu0 0
    %3011 = vmatpush1.bf16.msra.mxu0 %v2994
    %3012 = vmatprep.subr.bf16.mxu0 0
    %3013 = vmatpush1.bf16.msra.mxu0 %v2995
    %3014 = vmatprep.subr.bf16.mxu0 0
    %3015 = vmatpush1.bf16.msra.mxu0 0
    %3016 = vmatprep.subr.bf16.mxu0 0
    %3017 = vmatpush1.bf16.msra.mxu0 0
    %3018 = vmatprep.subr.bf16.mxu0 0
    %3019 = vmatpush1.bf16.msra.mxu0 0
    %3020 = vmatprep.subr.bf16.mxu0 0
    %3021 = vmatpush1.bf16.msra.mxu0 0
    %3022 = vmatprep.subr.bf16.mxu0 0
    %3023 = vmatpush1.bf16.msra.mxu0 0
    %3024 = vmatprep.subr.bf16.mxu0 0
    %3025 = vmatpush1.bf16.msra.mxu0 0
    %3026 = vmatprep.subr.bf16.mxu0 0
    %3027 = vmatpush1.bf16.msra.mxu0 0
    %3028 = vmatprep.subr.bf16.mxu0 0
    %3029 = vmatpush1.bf16.msra.mxu0 0
    %3030 = vmatprep.subr.bf16.mxu0 0
    %3031 = vmatpush1.bf16.msra.mxu0 0
    %3032 = vmatprep.subr.bf16.mxu0 0
    %3033 = vmatpush1.bf16.msra.mxu0 0
    %3034 = vmatprep.subr.bf16.mxu0 0
    %3035 = vmatpush1.bf16.msra.mxu0 0
    %3036 = vmatprep.subr.bf16.mxu0 0
    %3037 = vmatpush1.bf16.msra.mxu0 0
    %3038 = vmatprep.subr.bf16.mxu0 0
    %3039 = vmatpush1.bf16.msra.mxu0 0
    %3040 = vmatprep.subr.bf16.mxu0 0
    %3041 = vmatpush1.bf16.msra.mxu0 0
    %3042 = vmatprep.mubr.bf16.mxu0 0
    %3043 = vmatmul.mubr.bf16.gmra.mrb[0].mxu0 %v2999
    %v3044 = vpop.f32.mrb[0].mxu0
    %v3045 = vadd.f32 %v2984, %v3044
    %v3046 = vpop.f32.mrb[0].mxu0
    %v3047 = vpop.f32.mrb[0].mxu0
    %v3048 = vadd.f32 %v2984, %v3047
    %v3049 = vpop.f32.mrb[0].mxu0
    %3050 = vmatprep.mubr.bf16.mxu0 0
    %3051 = vmatmul.mubr.bf16.gmra.mrb[0].mxu0 %v3002
    %v3052 = vpop.f32.mrb[0].mxu0
    %v3053 = vadd.f32 %v2984, %v3052
    %v3054 = vpop.f32.mrb[0].mxu0
    %v3055 = vpop.f32.mrb[0].mxu0
    %v3056 = vadd.f32 %v2984, %v3055
    %v3057 = vpop.f32.mrb[0].mxu0
    %3058 = vmatprep.mubr.bf16.mxu0 0
    %3059 = vmatmul.mubr.bf16.gmra.mrb[0].mxu0 %v3005
    %v3060 = vpop.f32.mrb[0].mxu0
    %v3061 = vadd.f32 %v2984, %v3060
    %v3062 = vpop.f32.mrb[0].mxu0
    %v3063 = vpop.f32.mrb[0].mxu0
    %v3064 = vadd.f32 %v2984, %v3063
    %v3065 = vpop.f32.mrb[0].mxu0
    %3066 = vmatprep.mubr.bf16.mxu0 0
    %3067 = vmatmul.mubr.bf16.gmra.mrb[0].mxu0 %v3008
    %v3068 = vpop.f32.mrb[0].mxu0
    %v3069 = vadd.f32 %v2984, %v3068
    %v3070 = vpop.f32.mrb[0].mxu0
    %v3071 = vpop.f32.mrb[0].mxu0
    %v3072 = vadd.f32 %v2984, %v3071
    %v3073 = vpop.f32.mrb[0].mxu0
    %3074 = vdwg.mxu0
    %v3075 = vtanh.pop %v3045
    %v3076 = vtanh.pop %v3048
    %v3077 = vtanh.pop %v3053
    %v3078 = vtanh.pop %v3056
    %v3079 = vtanh.pop %v3061
    %v3080 = vtanh.pop %v3064
    %v3081 = vtanh.pop %v3069
    %v3082 = vtanh.pop %v3072
    %v3083 = vxor.u32 %v3045, 2147483648
    %v3084 = vxor.u32 %v3048, 2147483648
    %v3085 = vxor.u32 %v3053, 2147483648
    %v3086 = vxor.u32 %v3056, 2147483648
    %v3087 = vxor.u32 %v3061, 2147483648
    %v3088 = vxor.u32 %v3064, 2147483648
    %v3089 = vxor.u32 %v3069, 2147483648
    %v3090 = vxor.u32 %v3072, 2147483648
    %v3091 = vmul.f32 %v3083, 1.442695
    %v3092 = vpow.pop %v3091
    %v3093 = vmul.f32 %v3084, 1.442695
    %v3094 = vpow.pop %v3093
    %v3095 = vmul.f32 %v3085, 1.442695
    %v3096 = vpow.pop %v3095
    %v3097 = vmul.f32 %v3086, 1.442695
    %v3098 = vpow.pop %v3097
    %v3099 = vmul.f32 %v3087, 1.442695
    %v3100 = vpow.pop %v3099
    %v3101 = vmul.f32 %v3088, 1.442695
    %v3102 = vpow.pop %v3101
    %v3103 = vmul.f32 %v3089, 1.442695
    %v3104 = vpow.pop %v3103
    %v3105 = vmul.f32 %v3090, 1.442695
    %v3106 = vpow.pop %v3105
    %v3107 = vadd.f32 %v3092, 1.0
    %v3108 = vadd.f32 %v3094, 1.0
    %v3109 = vadd.f32 %v3096, 1.0
    %v3110 = vadd.f32 %v3098, 1.0
    %v3111 = vadd.f32 %v3100, 1.0
    %v3112 = vadd.f32 %v3102, 1.0
    %v3113 = vadd.f32 %v3104, 1.0
    %v3114 = vadd.f32 %v3106, 1.0
    %v3115 = vrcp.pop %v3107
    %v3116 = vmul.f32 1.0, %v3115
    %v3117 = vrcp.pop %v3108
    %v3118 = vmul.f32 1.0, %v3117
    %v3119 = vrcp.pop %v3109
    %v3120 = vmul.f32 1.0, %v3119
    %v3121 = vrcp.pop %v3110
    %v3122 = vmul.f32 1.0, %v3121
    %v3123 = vrcp.pop %v3111
    %v3124 = vmul.f32 1.0, %v3123
    %v3125 = vrcp.pop %v3112
    %v3126 = vmul.f32 1.0, %v3125
    %v3127 = vrcp.pop %v3113
    %v3128 = vmul.f32 1.0, %v3127
    %v3129 = vrcp.pop %v3114
    %v3130 = vmul.f32 1.0, %v3129
    %3139 = vrot.lane.b32.xlu0 %v3116, 96
    %v3140 = vpop.permute.xlu0 %3139
    %3141 = vrot.lane.b32.xlu0 %v3118, 96
    %v3142 = vpop.permute.xlu0 %3141
    %3143 = vrot.lane.b32.xlu0 %v3120, 96
    %v3144 = vpop.permute.xlu0 %3143
    %3145 = vrot.lane.b32.xlu0 %v3122, 96
    %v3146 = vpop.permute.xlu0 %3145
    %3147 = vrot.lane.b32.xlu0 %v3124, 96
    %v3148 = vpop.permute.xlu0 %3147
    %3149 = vrot.lane.b32.xlu0 %v3126, 96
    %v3150 = vpop.permute.xlu0 %3149
    %3151 = vrot.lane.b32.xlu0 %v3128, 96
    %v3152 = vpop.permute.xlu0 %3151
    %3153 = vrot.lane.b32.xlu0 %v3130, 96
    %v3154 = vpop.permute.xlu0 %3153
    %v3163 = vmul.f32 %v3075, %v3140
    %v3164 = vmul.f32 %v3076, %v3142
    %v3165 = vmul.f32 %v3077, %v3144
    %v3166 = vmul.f32 %v3078, %v3146
    %v3167 = vmul.f32 %v3079, %v3148
    %v3168 = vmul.f32 %v3080, %v3150
    %v3169 = vmul.f32 %v3081, %v3152
    %v3170 = vmul.f32 %v3082, %v3154
    %v3171 = vpack.c.bf16 %v3164, %v3163
    %v3172 = vpack.c.bf16 %v3166, %v3165
    %v3173 = vpack.c.bf16 %v3168, %v3167
    %v3174 = vpack.c.bf16 %v3170, %v3169
    %s3175 = scalar_lea.vmem %s5, 80
    %v3176 = vld [vmem:[%s3175] sm:$0xf]
    %v3177 = vld [vmem:[%s3175 + $0x4] sm:$0xf]
    %v3178 = vld [vmem:[%s3175 + $0x8] sm:$0xf]
    %v3179 = vld [vmem:[%s3175 + $0xc] sm:$0xf]
    %s3180 = scalar_lea.vmem %s6, 5
    %v3181 = vld [vmem:[%s3180] sm:$0x1]
    %v3183 = vlaneseq
    %v3184 = vshrl.u32 %v3183, 7
    %v3185 = vsub.s32 0, %v3184
    %v3186 = vrot.slane %v3181, %v3185
    %v3192 = vunpack.c.l.b16 %v3176
    %v3193 = vunpack.c.l.b16 %v3177
    %v3194 = vunpack.c.l.b16 %v3178
    %v3195 = vunpack.c.l.b16 %v3179
    %v3196 = vpack.c.b16 %v3193, %v3192
    %v3197 = vpack.c.b16 %v3195, %v3194
    %v3201 = vsel %vm378, %v3171, 0
    %v3204 = vsel %vm378, %v3172, 0
    %v3207 = vsel %vm378, %v3173, 0
    %v3210 = vsel %vm378, %v3174, 0
    %3212 = vmatprep.subr.bf16.mxu0 0
    %3213 = vmatpush1.bf16.msra.mxu0 %v3196
    %3214 = vmatprep.subr.bf16.mxu0 0
    %3215 = vmatpush1.bf16.msra.mxu0 %v3197
    %3216 = vmatprep.subr.bf16.mxu0 0
    %3217 = vmatpush1.bf16.msra.mxu0 0
    %3218 = vmatprep.subr.bf16.mxu0 0
    %3219 = vmatpush1.bf16.msra.mxu0 0
    %3220 = vmatprep.subr.bf16.mxu0 0
    %3221 = vmatpush1.bf16.msra.mxu0 0
    %3222 = vmatprep.subr.bf16.mxu0 0
    %3223 = vmatpush1.bf16.msra.mxu0 0
    %3224 = vmatprep.subr.bf16.mxu0 0
    %3225 = vmatpush1.bf16.msra.mxu0 0
    %3226 = vmatprep.subr.bf16.mxu0 0
    %3227 = vmatpush1.bf16.msra.mxu0 0
    %3228 = vmatprep.subr.bf16.mxu0 0
    %3229 = vmatpush1.bf16.msra.mxu0 0
    %3230 = vmatprep.subr.bf16.mxu0 0
    %3231 = vmatpush1.bf16.msra.mxu0 0
    %3232 = vmatprep.subr.bf16.mxu0 0
    %3233 = vmatpush1.bf16.msra.mxu0 0
    %3234 = vmatprep.subr.bf16.mxu0 0
    %3235 = vmatpush1.bf16.msra.mxu0 0
    %3236 = vmatprep.subr.bf16.mxu0 0
    %3237 = vmatpush1.bf16.msra.mxu0 0
    %3238 = vmatprep.subr.bf16.mxu0 0
    %3239 = vmatpush1.bf16.msra.mxu0 0
    %3240 = vmatprep.subr.bf16.mxu0 0
    %3241 = vmatpush1.bf16.msra.mxu0 0
    %3242 = vmatprep.subr.bf16.mxu0 0
    %3243 = vmatpush1.bf16.msra.mxu0 0
    %3244 = vmatprep.mubr.bf16.mxu0 0
    %3245 = vmatmul.mubr.bf16.gmra.mrb[0].mxu0 %v3201
    %v3246 = vpop.f32.mrb[0].mxu0
    %v3247 = vadd.f32 %v3186, %v3246
    %v3248 = vpop.f32.mrb[0].mxu0
    %v3249 = vpop.f32.mrb[0].mxu0
    %v3250 = vadd.f32 %v3186, %v3249
    %v3251 = vpop.f32.mrb[0].mxu0
    %3252 = vmatprep.mubr.bf16.mxu0 0
    %3253 = vmatmul.mubr.bf16.gmra.mrb[0].mxu0 %v3204
    %v3254 = vpop.f32.mrb[0].mxu0
    %v3255 = vadd.f32 %v3186, %v3254
    %v3256 = vpop.f32.mrb[0].mxu0
    %v3257 = vpop.f32.mrb[0].mxu0
    %v3258 = vadd.f32 %v3186, %v3257
    %v3259 = vpop.f32.mrb[0].mxu0
    %3260 = vmatprep.mubr.bf16.mxu0 0
    %3261 = vmatmul.mubr.bf16.gmra.mrb[0].mxu0 %v3207
    %v3262 = vpop.f32.mrb[0].mxu0
    %v3263 = vadd.f32 %v3186, %v3262
    %v3264 = vpop.f32.mrb[0].mxu0
    %v3265 = vpop.f32.mrb[0].mxu0
    %v3266 = vadd.f32 %v3186, %v3265
    %v3267 = vpop.f32.mrb[0].mxu0
    %3268 = vmatprep.mubr.bf16.mxu0 0
    %3269 = vmatmul.mubr.bf16.gmra.mrb[0].mxu0 %v3210
    %v3270 = vpop.f32.mrb[0].mxu0
    %v3271 = vadd.f32 %v3186, %v3270
    %v3272 = vpop.f32.mrb[0].mxu0
    %v3273 = vpop.f32.mrb[0].mxu0
    %v3274 = vadd.f32 %v3186, %v3273
    %v3275 = vpop.f32.mrb[0].mxu0
    %3276 = vdwg.mxu0
    %v3277 = vadd.f32 %v2791, %v3247
    %v3278 = vadd.f32 %v2792, %v3250
    %v3279 = vadd.f32 %v2793, %v3255
    %v3280 = vadd.f32 %v2794, %v3258
    %v3281 = vadd.f32 %v2795, %v3263
    %v3282 = vadd.f32 %v2796, %v3266
    %v3283 = vadd.f32 %v2797, %v3271
    %v3284 = vadd.f32 %v2798, %v3274
    %v3285 = vmax.f32 %v3277, 0.0
    %v3286 = vmax.f32 %v3278, 0.0
    %v3287 = vmax.f32 %v3279, 0.0
    %v3288 = vmax.f32 %v3280, 0.0
    %v3289 = vmax.f32 %v3281, 0.0
    %v3290 = vmax.f32 %v3282, 0.0
    %v3291 = vmax.f32 %v3283, 0.0
    %v3292 = vmax.f32 %v3284, 0.0
    %v3293 = vpack.c.bf16 %v3286, %v3285
    %v3294 = vpack.c.bf16 %v3288, %v3287
    %v3295 = vpack.c.bf16 %v3290, %v3289
    %v3296 = vpack.c.bf16 %v3292, %v3291
    %v3297 = vld [vmem:[%s7] sm:$0xf]
    %v3298 = vld [vmem:[%s7 + $0x4] sm:$0xf]
    %v3299 = vld [vmem:[%s7 + $0x8] sm:$0xf]
    %v3300 = vld [vmem:[%s7 + $0xc] sm:$0xf]
    %v3301 = vld [vmem:[%s8] sm:$0x1]
    %v3303 = vlaneseq
    %v3304 = vshrl.u32 %v3303, 7
    %v3305 = vsub.s32 0, %v3304
    %v3306 = vrot.slane %v3301, %v3305
    %3312 = vrot.lane.b32.xlu0 %v3293, 96
    %v3313 = vpop.permute.xlu0 %3312
    %3314 = vrot.lane.b32.xlu0 %v3294, 96
    %v3315 = vpop.permute.xlu0 %3314
    %3316 = vrot.lane.b32.xlu0 %v3295, 96
    %v3317 = vpop.permute.xlu0 %3316
    %3318 = vrot.lane.b32.xlu0 %v3296, 96
    %v3319 = vpop.permute.xlu0 %3318
    %v3324 = vunpack.c.l.b16 %v3297
    %v3325 = vunpack.c.l.b16 %v3298
    %v3326 = vunpack.c.l.b16 %v3299
    %v3327 = vunpack.c.l.b16 %v3300
    %v3328 = vpack.c.b16 %v3325, %v3324
    %v3329 = vpack.c.b16 %v3327, %v3326
    %v3333 = vsel %vm378, %v3313, 0
    %v3336 = vsel %vm378, %v3315, 0
    %v3339 = vsel %vm378, %v3317, 0
    %v3342 = vsel %vm378, %v3319, 0
    %3344 = vmatprep.subr.bf16.mxu0 0
    %3345 = vmatpush1.bf16.msra.mxu0 %v3328
    %3346 = vmatprep.subr.bf16.mxu0 0
    %3347 = vmatpush1.bf16.msra.mxu0 %v3329
    %3348 = vmatprep.subr.bf16.mxu0 0
    %3349 = vmatpush1.bf16.msra.mxu0 0
    %3350 = vmatprep.subr.bf16.mxu0 0
    %3351 = vmatpush1.bf16.msra.mxu0 0
    %3352 = vmatprep.subr.bf16.mxu0 0
    %3353 = vmatpush1.bf16.msra.mxu0 0
    %3354 = vmatprep.subr.bf16.mxu0 0
    %3355 = vmatpush1.bf16.msra.mxu0 0
    %3356 = vmatprep.subr.bf16.mxu0 0
    %3357 = vmatpush1.bf16.msra.mxu0 0
    %3358 = vmatprep.subr.bf16.mxu0 0
    %3359 = vmatpush1.bf16.msra.mxu0 0
    %3360 = vmatprep.subr.bf16.mxu0 0
    %3361 = vmatpush1.bf16.msra.mxu0 0
    %3362 = vmatprep.subr.bf16.mxu0 0
    %3363 = vmatpush1.bf16.msra.mxu0 0
    %3364 = vmatprep.subr.bf16.mxu0 0
    %3365 = vmatpush1.bf16.msra.mxu0 0
    %3366 = vmatprep.subr.bf16.mxu0 0
    %3367 = vmatpush1.bf16.msra.mxu0 0
    %3368 = vmatprep.subr.bf16.mxu0 0
    %3369 = vmatpush1.bf16.msra.mxu0 0
    %3370 = vmatprep.subr.bf16.mxu0 0
    %3371 = vmatpush1.bf16.msra.mxu0 0
    %3372 = vmatprep.subr.bf16.mxu0 0
    %3373 = vmatpush1.bf16.msra.mxu0 0
    %3374 = vmatprep.subr.bf16.mxu0 0
    %3375 = vmatpush1.bf16.msra.mxu0 0
    %3376 = vmatprep.mubr.bf16.mxu0 0
    %3377 = vmatmul.mubr.bf16.gmra.mrb[0].mxu0 %v3333
    %v3378 = vpop.f32.mrb[0].mxu0
    %v3379 = vadd.f32 %v3306, %v3378
    %v3380 = vpop.f32.mrb[0].mxu0
    %v3381 = vpop.f32.mrb[0].mxu0
    %v3382 = vadd.f32 %v3306, %v3381
    %v3383 = vpop.f32.mrb[0].mxu0
    %3384 = vmatprep.mubr.bf16.mxu0 0
    %3385 = vmatmul.mubr.bf16.gmra.mrb[0].mxu0 %v3336
    %v3386 = vpop.f32.mrb[0].mxu0
    %v3387 = vadd.f32 %v3306, %v3386
    %v3388 = vpop.f32.mrb[0].mxu0
    %v3389 = vpop.f32.mrb[0].mxu0
    %v3390 = vadd.f32 %v3306, %v3389
    %v3391 = vpop.f32.mrb[0].mxu0
    %3392 = vmatprep.mubr.bf16.mxu0 0
    %3393 = vmatmul.mubr.bf16.gmra.mrb[0].mxu0 %v3339
    %v3394 = vpop.f32.mrb[0].mxu0
    %v3395 = vadd.f32 %v3306, %v3394
    %v3396 = vpop.f32.mrb[0].mxu0
    %v3397 = vpop.f32.mrb[0].mxu0
    %v3398 = vadd.f32 %v3306, %v3397
    %v3399 = vpop.f32.mrb[0].mxu0
    %3400 = vmatprep.mubr.bf16.mxu0 0
    %3401 = vmatmul.mubr.bf16.gmra.mrb[0].mxu0 %v3342
    %v3402 = vpop.f32.mrb[0].mxu0
    %v3403 = vadd.f32 %v3306, %v3402
    %v3404 = vpop.f32.mrb[0].mxu0
    %v3405 = vpop.f32.mrb[0].mxu0
    %v3406 = vadd.f32 %v3306, %v3405
    %v3407 = vpop.f32.mrb[0].mxu0
    %3408 = vdwg.mxu0
    %v3409 = vmax.f32 %v3379, 0.0
    %v3410 = vmax.f32 %v3382, 0.0
    %v3411 = vmax.f32 %v3387, 0.0
    %v3412 = vmax.f32 %v3390, 0.0
    %v3413 = vmax.f32 %v3395, 0.0
    %v3414 = vmax.f32 %v3398, 0.0
    %v3415 = vmax.f32 %v3403, 0.0
    %v3416 = vmax.f32 %v3406, 0.0
    %v3417 = vpack.c.bf16 %v3410, %v3409
    %v3418 = vpack.c.bf16 %v3412, %v3411
    %v3419 = vpack.c.bf16 %v3414, %v3413
    %v3420 = vpack.c.bf16 %v3416, %v3415
    %v3421 = vld [vmem:[%s9] sm:$0xf]
    %v3422 = vld [vmem:[%s9 + $0x4] sm:$0xf]
    %v3423 = vld [vmem:[%s9 + $0x8] sm:$0xf]
    %v3424 = vld [vmem:[%s9 + $0xc] sm:$0xf]
    %v3425 = vld [vmem:[%s10] sm:$0x1]
    %v3427 = vlaneseq
    %v3428 = vshrl.u32 %v3427, 7
    %v3429 = vsub.s32 0, %v3428
    %v3430 = vrot.slane %v3425, %v3429
    %v3436 = vunpack.c.l.b16 %v3421
    %v3437 = vunpack.c.l.b16 %v3422
    %v3438 = vunpack.c.l.b16 %v3423
    %v3439 = vunpack.c.l.b16 %v3424
    %v3440 = vpack.c.b16 %v3437, %v3436
    %v3441 = vpack.c.b16 %v3439, %v3438
    %v3445 = vsel %vm378, %v3417, 0
    %v3448 = vsel %vm378, %v3418, 0
    %v3451 = vsel %vm378, %v3419, 0
    %v3454 = vsel %vm378, %v3420, 0
    %3456 = vmatprep.subr.bf16.mxu0 0
    %3457 = vmatpush1.bf16.msra.mxu0 %v3440
    %3458 = vmatprep.subr.bf16.mxu0 0
    %3459 = vmatpush1.bf16.msra.mxu0 %v3441
    %3460 = vmatprep.subr.bf16.mxu0 0
    %3461 = vmatpush1.bf16.msra.mxu0 0
    %3462 = vmatprep.subr.bf16.mxu0 0
    %3463 = vmatpush1.bf16.msra.mxu0 0
    %3464 = vmatprep.subr.bf16.mxu0 0
    %3465 = vmatpush1.bf16.msra.mxu0 0
    %3466 = vmatprep.subr.bf16.mxu0 0
    %3467 = vmatpush1.bf16.msra.mxu0 0
    %3468 = vmatprep.subr.bf16.mxu0 0
    %3469 = vmatpush1.bf16.msra.mxu0 0
    %3470 = vmatprep.subr.bf16.mxu0 0
    %3471 = vmatpush1.bf16.msra.mxu0 0
    %3472 = vmatprep.subr.bf16.mxu0 0
    %3473 = vmatpush1.bf16.msra.mxu0 0
    %3474 = vmatprep.subr.bf16.mxu0 0
    %3475 = vmatpush1.bf16.msra.mxu0 0
    %3476 = vmatprep.subr.bf16.mxu0 0
    %3477 = vmatpush1.bf16.msra.mxu0 0
    %3478 = vmatprep.subr.bf16.mxu0 0
    %3479 = vmatpush1.bf16.msra.mxu0 0
    %3480 = vmatprep.subr.bf16.mxu0 0
    %3481 = vmatpush1.bf16.msra.mxu0 0
    %3482 = vmatprep.subr.bf16.mxu0 0
    %3483 = vmatpush1.bf16.msra.mxu0 0
    %3484 = vmatprep.subr.bf16.mxu0 0
    %3485 = vmatpush1.bf16.msra.mxu0 0
    %3486 = vmatprep.subr.bf16.mxu0 0
    %3487 = vmatpush1.bf16.msra.mxu0 0
    %3488 = vmatprep.mubr.bf16.mxu0 0
    %3489 = vmatmul.mubr.bf16.gmra.mrb[0].mxu0 %v3445
    %v3490 = vpop.f32.mrb[0].mxu0
    %v3491 = vadd.f32 %v3430, %v3490
    %v3492 = vpop.f32.mrb[0].mxu0
    %v3493 = vpop.f32.mrb[0].mxu0
    %v3494 = vadd.f32 %v3430, %v3493
    %v3495 = vpop.f32.mrb[0].mxu0
    %3496 = vmatprep.mubr.bf16.mxu0 0
    %3497 = vmatmul.mubr.bf16.gmra.mrb[0].mxu0 %v3448
    %v3498 = vpop.f32.mrb[0].mxu0
    %v3499 = vadd.f32 %v3430, %v3498
    %v3500 = vpop.f32.mrb[0].mxu0
    %v3501 = vpop.f32.mrb[0].mxu0
    %v3502 = vadd.f32 %v3430, %v3501
    %v3503 = vpop.f32.mrb[0].mxu0
    %3504 = vmatprep.mubr.bf16.mxu0 0
    %3505 = vmatmul.mubr.bf16.gmra.mrb[0].mxu0 %v3451
    %v3506 = vpop.f32.mrb[0].mxu0
    %v3507 = vadd.f32 %v3430, %v3506
    %v3508 = vpop.f32.mrb[0].mxu0
    %v3509 = vpop.f32.mrb[0].mxu0
    %v3510 = vadd.f32 %v3430, %v3509
    %v3511 = vpop.f32.mrb[0].mxu0
    %3512 = vmatprep.mubr.bf16.mxu0 0
    %3513 = vmatmul.mubr.bf16.gmra.mrb[0].mxu0 %v3454
    %v3514 = vpop.f32.mrb[0].mxu0
    %v3515 = vadd.f32 %v3430, %v3514
    %v3516 = vpop.f32.mrb[0].mxu0
    %v3517 = vpop.f32.mrb[0].mxu0
    %v3518 = vadd.f32 %v3430, %v3517
    %v3519 = vpop.f32.mrb[0].mxu0
    %3520 = vdwg.mxu0
    %v3521 = vxor.u32 %v3491, 2147483648
    %v3522 = vxor.u32 %v3494, 2147483648
    %v3523 = vxor.u32 %v3499, 2147483648
    %v3524 = vxor.u32 %v3502, 2147483648
    %v3525 = vxor.u32 %v3507, 2147483648
    %v3526 = vxor.u32 %v3510, 2147483648
    %v3527 = vxor.u32 %v3515, 2147483648
    %v3528 = vxor.u32 %v3518, 2147483648
    %v3529 = vmul.f32 %v3521, 1.442695
    %v3530 = vpow.pop %v3529
    %v3531 = vmul.f32 %v3522, 1.442695
    %v3532 = vpow.pop %v3531
    %v3533 = vmul.f32 %v3523, 1.442695
    %v3534 = vpow.pop %v3533
    %v3535 = vmul.f32 %v3524, 1.442695
    %v3536 = vpow.pop %v3535
    %v3537 = vmul.f32 %v3525, 1.442695
    %v3538 = vpow.pop %v3537
    %v3539 = vmul.f32 %v3526, 1.442695
    %v3540 = vpow.pop %v3539
    %v3541 = vmul.f32 %v3527, 1.442695
    %v3542 = vpow.pop %v3541
    %v3543 = vmul.f32 %v3528, 1.442695
    %v3544 = vpow.pop %v3543
    %v3545 = vadd.f32 %v3530, 1.0
    %v3546 = vadd.f32 %v3532, 1.0
    %v3547 = vadd.f32 %v3534, 1.0
    %v3548 = vadd.f32 %v3536, 1.0
    %v3549 = vadd.f32 %v3538, 1.0
    %v3550 = vadd.f32 %v3540, 1.0
    %v3551 = vadd.f32 %v3542, 1.0
    %v3552 = vadd.f32 %v3544, 1.0
    %v3553 = vrcp.pop %v3545
    %v3554 = vmul.f32 1.0, %v3553
    %v3555 = vrcp.pop %v3546
    %v3556 = vmul.f32 1.0, %v3555
    %v3557 = vrcp.pop %v3547
    %v3558 = vmul.f32 1.0, %v3557
    %v3559 = vrcp.pop %v3548
    %v3560 = vmul.f32 1.0, %v3559
    %v3561 = vrcp.pop %v3549
    %v3562 = vmul.f32 1.0, %v3561
    %v3563 = vrcp.pop %v3550
    %v3564 = vmul.f32 1.0, %v3563
    %v3565 = vrcp.pop %v3551
    %v3566 = vmul.f32 1.0, %v3565
    %v3567 = vrcp.pop %v3552
    %v3568 = vmul.f32 1.0, %v3567
    %3569 = vst [vmem:[#allocation2] sm:$0xff] %v3554
    %3570 = vst [vmem:[#allocation2 + $0x8] sm:$0xff] %v3556
    %3571 = vst [vmem:[#allocation2 + $0x10] sm:$0xff] %v3558
    %3572 = vst [vmem:[#allocation2 + $0x18] sm:$0xff] %v3560
    %3573 = vst [vmem:[#allocation2 + $0x20] sm:$0xff] %v3562
    %3574 = vst [vmem:[#allocation2 + $0x28] sm:$0xff] %v3564
    %3575 = vst [vmem:[#allocation2 + $0x30] sm:$0xff] %v3566
    %3576 = vst [vmem:[#allocation2 + $0x38] sm:$0xff] %v3568
    // Predicated region
    $region46: #{tpu_custom_call.1} parent=1 // pred_check
      _
    $region47: #{tpu_custom_call.1} parent=1 // pred_check_branch
      %3578 = sbr.rel (0) target = $region49
    $region48: #{tpu_custom_call.1} parent=1 // pred_region
      %s3580 = ssub.s32 1024, 1024
      %3581 = vsyncadd [#allocation3], %s3580
      %s3582 = sshll.u32 [#allocation2], 4
      %s3583 = int_to_ptr.vmem [resolvable:$true] %s3582
      %3588 = dma.vmem_to_hbm [thread:$0]  %s3583, 1024, %s11, [#allocation3], 128, 128, 8
    $region49: #{tpu_custom_call.1} parent=1 // pred_fallthru
      _
    // Predicated region
    $region50: #{tpu_custom_call.1} parent=1 // pred_check
      _
    $region51: #{tpu_custom_call.1} parent=1 // pred_check_branch
      %3590 = sbr.rel (0) target = $region53
    $region52: #{tpu_custom_call.1} parent=1 // pred_region
      %3591 = dma.done [#allocation3], 1024
    $region53: #{tpu_custom_call.1} parent=1 // pred_fallthru
      _
    %3592 = vsyncpa [#allocation3], 1

</llo_original>
